<compile_context>
chip_gen: v6e
topology: v6e:2x2x1
jax: 0.10.0
libtpu: 0.0.40
codegen_flags: <defaults>
</compile_context>

<pallas_src>
import jax
import jax.numpy as jnp
from jax import lax
from jax.experimental import pallas as pl
from jax.experimental.pallas import tpu as pltpu

# ---------------- configuration (GraphBlock with q_update=False, q_attn=True) ----
HIDDEN = 32               # config.hidden_dim  (feature dim of input_state)
D2 = 2 * HIDDEN           # GAT in/out dim = hidden_dim * 2
N_HEAD = 2                # config.num_gnn_heads
DH = D2 // N_HEAD         # per-head out_dim
N_TYPE = 2                # config.num_edge_type
NC = N_HEAD * N_TYPE      # packed (head, edge-type) combos -> NC*DH = 128 lanes
Q_ATTN = True
LRELU_SLOPE = 0.2         # get_act('lrelu:0.2')
NEG_INF = -1e30
# TODO(synk): F.dropout with config.gnn_drop is training-time only; treated as identity (eval).


# ---------------------------------- Pallas kernel ---------------------------------
def _graph_block_kernel(se_ref, x_ref, q_ref, adjT_ref, mask_ref,
                        ga1_ref, ga2_ref, wq_ref, bq_ref, wpk_ref, out_ref):
    f32 = jnp.float32
    bf16 = jnp.bfloat16
    B = x_ref.shape[0]
    H = x_ref.shape[2]
    E = se_ref.shape[1] // 2
    KL = NC * DH                                                     # 128 packed lanes

    # ---- node features: single batched bmm for start & end rows (rows 0 / E are 0)
    nodes = jnp.einsum('bml,blh->bmh', se_ref[...], x_ref[...],
                       preferred_element_type=f32)                   # [B, 2E, H]
    ns = nodes[:, :E, :].reshape(B * E, H).astype(bf16)              # one-hot select -> exact
    ne = nodes[:, E:, :].reshape(B * E, H).astype(bf16)

    # ---- packed projection of all node rows: graph_state_nodes @ W_pack
    h_nodes = (jnp.dot(ns, wpk_ref[0], preferred_element_type=f32) +
               jnp.dot(ne, wpk_ref[1], preferred_element_type=f32))  # [B*E, 128]

    # ---- query row: gat_linear fused into the packed projection (wq = W_lin@W_pack)
    q = q_ref[...][:, 0, :]                                          # [B, D2] bf16
    h_q = jnp.dot(q, wq_ref[...], preferred_element_type=f32) + bq_ref[...]   # [B, 128]

    # ---- h for all (head, edge-type) combos; query projection placed at row e == 0
    h3 = h_nodes.reshape(B, E, KL)
    row0 = (lax.broadcasted_iota(jnp.int32, (B, E, KL), 1) == 0).astype(f32)
    h3 = h3 + h_q[:, None, :] * row0                                 # [B, E, 128]

    # ---- hoisted score reductions (one pass over [B, E, 128] per gate)
    p1 = h3 * ga1_ref[...]                                           # gate1 * a1 folded in
    p2 = h3 * ga2_ref[...]
    s1 = [jnp.sum(p1[:, :, c * DH:(c + 1) * DH], axis=-1, keepdims=True)
          for c in range(NC)]                                        # each [B, E, 1]
    s2 = [jnp.sum(p2[:, :, c * DH:(c + 1) * DH], axis=-1, keepdims=True)
          for c in range(NC)]
    # one XLU transpose: s1 of all combos to row (lane) layout
    s1_row = jnp.swapaxes(jnp.concatenate(s1, axis=-1), 1, 2)        # [B, NC, E]

    adjT = adjT_ref[...].astype(f32)                                 # adjT[b, j, i] = adj[b, i, j]
    mask = mask_ref[...].astype(f32)                                 # [B, E, 1]

    outs = []
    for hd in range(N_HEAD):
        sc = jnp.zeros((B, E, E), f32)                               # transposed [b, j, i] layout
        for tp in range(N_TYPE):
            c = hd * N_TYPE + tp
            raw = s2[c] + s1_row[:, c:c + 1, :]                      # = s1[b,i] + s2[b,j]
            leak = jnp.where(raw > 0, raw, LRELU_SLOPE * raw)        # lrelu 0.2
            sc = sc + jnp.where(adjT == float(tp + 1), leak, 0.0)
        sc = jnp.where(adjT > 0, sc, NEG_INF)

        # softmax over j (reference dim=2) == axis 1 in the transposed layout
        m = jnp.max(sc, axis=1, keepdims=True)
        ex = jnp.exp(sc - m)
        coefs_t = ex * pl.reciprocal(jnp.sum(ex, axis=1, keepdims=True), approx=True)

        # NOTE: aggregation uses the projection of the LAST edge type only,
        # matching the PyTorch module's behaviour.
        c_last = hd * N_TYPE + (N_TYPE - 1)
        h_m = h3[:, :, c_last * DH:(c_last + 1) * DH] * mask         # [B, E, DH]
        # out[b, j, :] = sum_i coefs[b, i, j] * h_m[b, i, :]
        o = lax.dot_general(coefs_t, h_m, (((2,), (1,)), ((0,), (0,))),
                            preferred_element_type=f32)              # [B, E, DH]
        outs.append(o)

    final = jnp.maximum(jnp.concatenate(outs, axis=-1), 0.0)         # [B, E, D2]
    out_ref[...] = final.reshape(B * E, D2)                          # one dense slab store


# ---------------------------------- wrapper ---------------------------------------
def graph_block_forward(params, batch, input_state, query_vec, block_batch=64):
    f32 = jnp.float32
    bf16 = jnp.bfloat16
    N, L, H = input_state.shape
    assert H == HIDDEN

    start_map = jnp.concatenate([batch['para_start_mapping'],
                                 batch['sent_start_mapping'],
                                 batch['ent_start_mapping']], axis=1)     # [N, M, L]
    end_map = jnp.concatenate([batch['para_end_mapping'],
                               batch['sent_end_mapping'],
                               batch['ent_end_mapping']], axis=1)         # [N, M, L]
    M = start_map.shape[1]
    E = M + 1
    node_mask = jnp.concatenate([jnp.ones((N, 1), f32),
                                 batch['para_mask'], batch['sent_mask'],
                                 batch['ent_mask']], axis=-1)[..., None]  # [N, E, 1]
    adj_t = jnp.swapaxes(batch['graphs'].astype(f32), 1, 2)               # adj^T per batch

    # combined start/end mapping with a zero row for the query node -> [N, 2E, L]
    zrow = jnp.zeros((N, 1, L), f32)
    se_map = jnp.concatenate([zrow, start_map, zrow, end_map], axis=1)

    # ---- hoisted query-attention gates (batched einsum over all N) -------------
    if Q_ATTN:
        g_pre = jax.nn.relu(jnp.einsum('nd,htdk->nhtk', query_vec, params['qW1_all']))
        g1 = jax.nn.sigmoid(jnp.einsum('nhtk,htkd->nhtd', g_pre, params['qW2a_all']))
        g2 = jax.nn.sigmoid(jnp.einsum('nhtk,htkd->nhtd', g_pre, params['qW2b_all']))
    else:
        g1 = jnp.ones((N, N_HEAD, N_TYPE, DH), f32)
        g2 = jnp.ones((N, N_HEAD, N_TYPE, DH), f32)
    ga1 = (g1 * params['a1_all'][None, :, :, 0, :]).reshape(N, NC * DH)[:, None, :]  # [N,1,128]
    ga2 = (g2 * params['a2_all'][None, :, :, 0, :]).reshape(N, NC * DH)[:, None, :]

    # ---- pack per-(head, edge-type) weights; fuse gat_linear into the q-row path --
    w_packed = jnp.transpose(params['W_all'], (2, 0, 1, 3)).reshape(D2, NC * DH)  # [64,128]
    wq = (params['W_lin'] @ w_packed).astype(bf16)            # [D2, 128]
    bq = (params['b_lin'] @ w_packed)[None, :]                # [1, 128]  (f32)
    wpk = w_packed.reshape(2, HIDDEN, NC * DH).astype(bf16)   # [2, H, 128] (top/bottom halves)

    # ---- batch blocking: guarantee >= 2 grid steps when N > 1 (v7x megacore),
    #      large blocks to amortize per-step overhead on single-TC v5e/v6e --------
    B = int(max(1, min(block_batch, -(-N // 2))))
    n_pad = (-N) % B
    Np = N + n_pad

    def pad0(a):
        return jnp.pad(a, ((0, n_pad),) + ((0, 0),) * (a.ndim - 1)) if n_pad else a

    # maps / adjacency / node mask are exactly representable in bf16 (half the DMA
    # bytes); x / q / weights are bf16 MXU operands with f32 accumulation.
    se_b = pad0(se_map).astype(bf16)
    x_b = pad0(input_state).astype(bf16)
    q_b = pad0(query_vec)[:, None, :].astype(bf16)            # [Np, 1, D2]
    adjT_b = pad0(adj_t).astype(bf16)
    mask_b = pad0(node_mask).astype(bf16)
    ga1_p = pad0(ga1)
    ga2_p = pad0(ga2)

    out_flat = pl.pallas_call(
        _graph_block_kernel,
        out_shape=jax.ShapeDtypeStruct((Np * E, D2), jnp.float32),
        grid_spec=pltpu.PrefetchScalarGridSpec(
            num_scalar_prefetch=0,
            grid=(Np // B,),
            in_specs=[
                pl.BlockSpec((B, 2 * E, L), lambda i: (i, 0, 0)),        # se_map   (bf16)
                pl.BlockSpec((B, L, HIDDEN), lambda i: (i, 0, 0)),       # x        (bf16)
                pl.BlockSpec((B, 1, D2), lambda i: (i, 0, 0)),           # q        (bf16)
                pl.BlockSpec((B, E, E), lambda i: (i, 0, 0)),            # adj^T    (bf16)
                pl.BlockSpec((B, E, 1), lambda i: (i, 0, 0)),            # node mask(bf16)
                pl.BlockSpec((B, 1, NC * DH), lambda i: (i, 0, 0)),      # gate1*a1 (f32)
                pl.BlockSpec((B, 1, NC * DH), lambda i: (i, 0, 0)),      # gate2*a2 (f32)
                pl.BlockSpec((D2, NC * DH), lambda i: (0, 0)),           # W_lin @ W_pack
                pl.BlockSpec((1, NC * DH), lambda i: (0, 0)),            # b_lin @ W_pack
                pl.BlockSpec((2, HIDDEN, NC * DH), lambda i: (0, 0, 0)), # W_pack (top/bot)
            ],
            out_specs=pl.BlockSpec((B * E, D2), lambda i: (i, 0)),       # dense slab, 1 store/step
        ),
        compiler_params=pltpu.CompilerParams(dimension_semantics=("parallel",)),
    )(se_b, x_b, q_b, adjT_b, mask_b, ga1_p, ga2_p, wq, bq, wpk)

    graph_state = out_flat.reshape(Np, E, D2)[:N]

    return {'graph_state': graph_state,
            'node_mask': node_mask,
            'max_para_num': batch['para_start_mapping'].shape[1],
            'max_sent_num': batch['sent_start_mapping'].shape[1],
            'N': N}


# ------------------------------- pure-JAX reference --------------------------------
def reference_forward(params, batch, input_state, query_vec):
    bmm = lambda a, b: jnp.einsum('nij,njk->nik', a, b)
    para_state = jnp.concatenate([bmm(batch['para_start_mapping'], input_state),
                                  bmm(batch['para_end_mapping'], input_state)], -1)
    sent_state = jnp.concatenate([bmm(batch['sent_start_mapping'], input_state),
                                  bmm(batch['sent_end_mapping'], input_state)], -1)
    ent_state = jnp.concatenate([bmm(batch['ent_start_mapping'], input_state),
                                 bmm(batch['ent_end_mapping'], input_state)], -1)
    N = input_state.shape[0]
    gq = query_vec @ params['W_lin'] + params['b_lin']
    graph_state = jnp.concatenate([gq[:, None], para_state, sent_state, ent_state], axis=1)
    node_mask = jnp.concatenate([jnp.ones((N, 1), jnp.float32), batch['para_mask'],
                                 batch['sent_mask'], batch['ent_mask']], -1)[..., None]
    adj = batch['graphs'].astype(jnp.float32)
    E = adj.shape[1]

    head_outs = []
    for hd in range(N_HEAD):
        scores = jnp.zeros_like(adj)
        h = None
        for tp in range(N_TYPE):
            h = graph_state @ params['W_all'][hd, tp]                  # [N, E, DH]
            d = h.shape[-1]
            a_input = jnp.concatenate([jnp.tile(h, (1, 1, E)).reshape(N, E * E, d),
                                       jnp.tile(h, (1, E, 1))], axis=-1).reshape(N, E, E, 2 * d)
            qw2 = jnp.concatenate([params['qW2a_all'][hd, tp], params['qW2b_all'][hd, tp]], axis=-1)
            a_vec = jnp.concatenate([params['a1_all'][hd, tp][0],
                                     params['a2_all'][hd, tp][0]], axis=0)[:, None]   # [2d, 1]
            q_gate = jax.nn.relu(query_vec @ params['qW1_all'][hd, tp])
            q_gate = jax.nn.sigmoid(q_gate @ qw2)
            a_input = a_input * q_gate[:, None, None, :]
            raw = jnp.squeeze(a_input @ a_vec, -1)
            score = jnp.where(raw > 0, raw, LRELU_SLOPE * raw)
            scores = scores + jnp.where(adj == tp + 1, score, 0.0)
        scores = jnp.where(adj > 0, scores, NEG_INF)
        h = h * node_mask
        coefs = jax.nn.softmax(scores, axis=2)
        head_outs.append(jnp.sum(coefs[..., None] * h[:, :, None, :], axis=1))
    return jax.nn.relu(jnp.concatenate(head_outs, axis=-1))


# ---------------------------------- setup / main -----------------------------------
def _xavier(key, shape, gain=1.414):
    fan_in, fan_out = shape[-2], shape[-1]
    lim = gain * jnp.sqrt(6.0 / (fan_in + fan_out))
    return jax.random.uniform(key, shape, jnp.float32, -lim, lim)


if __name__ == "__main__":
    key = jax.random.PRNGKey(0)
    N, L = 8, 32                   # 8 batches -> B=4, grid=2 (v7x megacore gets 2 steps)
    P, S, T = 5, 6, 4              # max_para_num / max_sent_num / max_ent_num
    E = 1 + P + S + T              # 16 graph nodes
    ks = jax.random.split(key, 32)

    # ------- inputs -------
    input_state = jax.random.normal(ks[0], (N, L, HIDDEN), jnp.float32)
    query_vec = jax.random.normal(ks[1], (N, D2), jnp.float32)

    def one_hot_map(k, n_rows):
        idx = jax.random.randint(k, (N, n_rows), 0, L)
        return jax.nn.one_hot(idx, L, dtype=jnp.float32)

    batch = {
        'para_start_mapping': one_hot_map(ks[2], P),
        'para_end_mapping':   one_hot_map(ks[3], P),
        'sent_start_mapping': one_hot_map(ks[4], S),
        'sent_end_mapping':   one_hot_map(ks[5], S),
        'ent_start_mapping':  one_hot_map(ks[6], T),
        'ent_end_mapping':    one_hot_map(ks[7], T),
        'para_mask': (jax.random.uniform(ks[8], (N, P)) < 0.8).astype(jnp.float32),
        'sent_mask': (jax.random.uniform(ks[9], (N, S)) < 0.8).astype(jnp.float32),
        'ent_mask':  (jax.random.uniform(ks[10], (N, T)) < 0.8).astype(jnp.float32),
        'graphs': jax.random.randint(ks[11], (N, E, E), 0, N_TYPE + 1).astype(jnp.float32),
    }

    # ------- parameters (deterministic, synthetic) -------
    params = {
        'W_lin':  _xavier(ks[12], (D2, D2), gain=1.0),
        'b_lin':  jnp.zeros((D2,), jnp.float32),
        'W_all':  _xavier(ks[13], (N_HEAD, N_TYPE, D2, DH)),
        'a1_all': _xavier(ks[14], (N_HEAD, N_TYPE, 1, DH)),
        'a2_all': _xavier(ks[15], (N_HEAD, N_TYPE, 1, DH)),
        'qW1_all': _xavier(ks[16], (N_HEAD, N_TYPE, D2, 2 * DH)),
        'qW2a_all': _xavier(ks[17], (N_HEAD, N_TYPE, 2 * DH, DH)),
        'qW2b_all': _xavier(ks[18], (N_HEAD, N_TYPE, 2 * DH, DH)),
    }

    out = graph_block_forward(params, batch, input_state, query_vec)
    graph_state = jax.block_until_ready(out['graph_state'])

    ref = jax.block_until_ready(reference_forward(params, batch, input_state, query_vec))
    err = float(jnp.max(jnp.abs(graph_state - ref)))
    scale = 1.0 + float(jnp.max(jnp.abs(ref)))
    # Tolerance sized for bf16 MXU operands (f32 accumulation) propagated through
    # the leaky-relu / softmax path; structural/indexing bugs give O(1) relative
    # errors and are still caught.
    assert err < 5e-2 * scale, f"mismatch vs reference: {err} (scale {scale})"

    print("KERNEL_OK")
</pallas_src>

<mosaic_0001>
module attributes {stable_mosaic.version = 11 : i64} {
  func.func @_graph_block_kernel(%arg0: i32, %arg1: memref<4x32x32xbf16, #tpu.memory_space<vmem>>, %arg2: memref<4x32x32xbf16, #tpu.memory_space<vmem>>, %arg3: memref<4x1x64xbf16, #tpu.memory_space<vmem>>, %arg4: memref<4x16x16xbf16, #tpu.memory_space<vmem>>, %arg5: memref<4x16x1xbf16, #tpu.memory_space<vmem>>, %arg6: memref<4x1x128xf32, #tpu.memory_space<vmem>>, %arg7: memref<4x1x128xf32, #tpu.memory_space<vmem>>, %arg8: memref<64x128xbf16, #tpu.memory_space<vmem>>, %arg9: memref<1x128xf32, #tpu.memory_space<vmem>>, %arg10: memref<2x32x128xbf16, #tpu.memory_space<vmem>>, %arg11: memref<64x64xf32, #tpu.memory_space<vmem>>) attributes {dimension_semantics = [#tpu.dimension_semantics<parallel>], iteration_bounds = array<i64: 2>, scalar_prefetch = 0 : i64, scratch_operands = 0 : i64, tpu.core_type = #tpu.core_type<tc>, window_params = [{transform_indices = @transform_0, window_bounds = array<i64: 4, 32, 32>}, {transform_indices = @transform_1, window_bounds = array<i64: 4, 32, 32>}, {transform_indices = @transform_2, window_bounds = array<i64: 4, 1, 64>}, {transform_indices = @transform_3, window_bounds = array<i64: 4, 16, 16>}, {transform_indices = @transform_4, window_bounds = array<i64: 4, 16, 1>}, {transform_indices = @transform_5, window_bounds = array<i64: 4, 1, 128>}, {transform_indices = @transform_6, window_bounds = array<i64: 4, 1, 128>}, {pipeline_mode = #tpu.pipeline_mode<synchronous>, transform_indices = @transform_7, window_bounds = array<i64: 64, 128>}, {pipeline_mode = #tpu.pipeline_mode<synchronous>, transform_indices = @transform_8, window_bounds = array<i64: 1, 128>}, {pipeline_mode = #tpu.pipeline_mode<synchronous>, transform_indices = @transform_9, window_bounds = array<i64: 2, 32, 128>}, {transform_indices = @transform_10, window_bounds = array<i64: 64, 64>}]} {
    %c0 = arith.constant 0 : index
    %c0_0 = arith.constant 0 : index
    %c0_1 = arith.constant 0 : index
    %0 = vector.load %arg1[%c0, %c0_0, %c0_1] : memref<4x32x32xbf16, #tpu.memory_space<vmem>>, vector<4x32x32xbf16>
    %c0_2 = arith.constant 0 : index
    %c0_3 = arith.constant 0 : index
    %c0_4 = arith.constant 0 : index
    %1 = vector.load %arg2[%c0_2, %c0_3, %c0_4] : memref<4x32x32xbf16, #tpu.memory_space<vmem>>, vector<4x32x32xbf16>
    "tpu.trace_start"() <{level = 10 : i32, message = "bml,blh->bmh"}> : () -> ()
    %cst = arith.constant dense<0.000000e+00> : vector<4x32x32xf32>
    %2 = tpu.matmul %0, %1, %cst {dimension_numbers = #tpu.dot_dimension_numbers<[2], [1], [1], [2], [0, 0, 0, 1, 1, 2], [0], [0]>} : vector<4x32x32xbf16>, vector<4x32x32xbf16>, vector<4x32x32xf32> -> vector<4x32x32xf32>
    "tpu.trace_stop"() : () -> ()
    %3 = vector.extract_strided_slice %2 {offsets = [0, 0, 0], sizes = [4, 16, 32], strides = [1, 1, 1]} : vector<4x32x32xf32> to vector<4x16x32xf32>
    %4 = vector.shape_cast %3 : vector<4x16x32xf32> to vector<64x32xf32>
    %5 = arith.truncf %4 : vector<64x32xf32> to vector<64x32xbf16>
    %6 = vector.extract_strided_slice %2 {offsets = [0, 16, 0], sizes = [4, 16, 32], strides = [1, 1, 1]} : vector<4x32x32xf32> to vector<4x16x32xf32>
    %7 = vector.shape_cast %6 : vector<4x16x32xf32> to vector<64x32xf32>
    %8 = arith.truncf %7 : vector<64x32xf32> to vector<64x32xbf16>
    %c0_5 = arith.constant 0 : index
    %c0_6 = arith.constant 0 : index
    %c0_7 = arith.constant 0 : index
    %9 = vector.load %arg10[%c0_5, %c0_6, %c0_7] : memref<2x32x128xbf16, #tpu.memory_space<vmem>>, vector<1x32x128xbf16>
    %10 = vector.shape_cast %9 : vector<1x32x128xbf16> to vector<32x128xbf16>
    %cst_8 = arith.constant dense<0.000000e+00> : vector<64x128xf32>
    %11 = tpu.matmul %5, %10, %cst_8 {dimension_numbers = #tpu.dot_dimension_numbers<[1], [0], [0], [1], [0, 0, 1, 1], [], []>} : vector<64x32xbf16>, vector<32x128xbf16>, vector<64x128xf32> -> vector<64x128xf32>
    %c1 = arith.constant 1 : index
    %c0_9 = arith.constant 0 : index
    %c0_10 = arith.constant 0 : index
    %12 = vector.load %arg10[%c1, %c0_9, %c0_10] : memref<2x32x128xbf16, #tpu.memory_space<vmem>>, vector<1x32x128xbf16>
    %13 = vector.shape_cast %12 : vector<1x32x128xbf16> to vector<32x128xbf16>
    %cst_11 = arith.constant dense<0.000000e+00> : vector<64x128xf32>
    %14 = tpu.matmul %8, %13, %cst_11 {dimension_numbers = #tpu.dot_dimension_numbers<[1], [0], [0], [1], [0, 0, 1, 1], [], []>} : vector<64x32xbf16>, vector<32x128xbf16>, vector<64x128xf32> -> vector<64x128xf32>
    %15 = arith.addf %11, %14 : vector<64x128xf32>
    %c0_12 = arith.constant 0 : index
    %c0_13 = arith.constant 0 : index
    %c0_14 = arith.constant 0 : index
    %16 = vector.load %arg3[%c0_12, %c0_13, %c0_14] : memref<4x1x64xbf16, #tpu.memory_space<vmem>>, vector<4x1x64xbf16>
    %17 = vector.shape_cast %16 : vector<4x1x64xbf16> to vector<4x64xbf16>
    %c0_15 = arith.constant 0 : index
    %c0_16 = arith.constant 0 : index
    %18 = vector.load %arg8[%c0_15, %c0_16] : memref<64x128xbf16, #tpu.memory_space<vmem>>, vector<64x128xbf16>
    %cst_17 = arith.constant dense<0.000000e+00> : vector<4x128xf32>
    %19 = tpu.matmul %17, %18, %cst_17 {dimension_numbers = #tpu.dot_dimension_numbers<[1], [0], [0], [1], [0, 0, 1, 1], [], []>} : vector<4x64xbf16>, vector<64x128xbf16>, vector<4x128xf32> -> vector<4x128xf32>
    %c0_18 = arith.constant 0 : index
    %c0_19 = arith.constant 0 : index
    %20 = vector.load %arg9[%c0_18, %c0_19] : memref<1x128xf32, #tpu.memory_space<vmem>>, vector<1x128xf32>
    %21 = vector.broadcast %20 : vector<1x128xf32> to vector<4x128xf32>
    %22 = arith.addf %19, %21 : vector<4x128xf32>
    %23 = vector.shape_cast %15 : vector<64x128xf32> to vector<4x16x128xf32>
    %24 = tpu.iota {dimensions = array<i32: 1>} : vector<4x16x128xi32>
    %c0_i32 = arith.constant 0 : i32
    %25 = vector.broadcast %c0_i32 : i32 to vector<4x16x128xi32>
    %26 = arith.cmpi eq, %24, %25 : vector<4x16x128xi32>
    %27 = arith.extui %26 : vector<4x16x128xi1> to vector<4x16x128xi32>
    %28 = arith.sitofp %27 : vector<4x16x128xi32> to vector<4x16x128xf32>
    %29 = vector.shape_cast %22 : vector<4x128xf32> to vector<4x1x128xf32>
    %30 = vector.broadcast %29 : vector<4x1x128xf32> to vector<4x16x128xf32>
    %31 = arith.mulf %30, %28 : vector<4x16x128xf32>
    %32 = arith.addf %23, %31 : vector<4x16x128xf32>
    %c0_20 = arith.constant 0 : index
    %c0_21 = arith.constant 0 : index
    %c0_22 = arith.constant 0 : index
    %33 = vector.load %arg6[%c0_20, %c0_21, %c0_22] : memref<4x1x128xf32, #tpu.memory_space<vmem>>, vector<4x1x128xf32>
    %34 = vector.broadcast %33 : vector<4x1x128xf32> to vector<4x16x128xf32>
    %35 = arith.mulf %32, %34 : vector<4x16x128xf32>
    %c0_23 = arith.constant 0 : index
    %c0_24 = arith.constant 0 : index
    %c0_25 = arith.constant 0 : index
    %36 = vector.load %arg7[%c0_23, %c0_24, %c0_25] : memref<4x1x128xf32, #tpu.memory_space<vmem>>, vector<4x1x128xf32>
    %37 = vector.broadcast %36 : vector<4x1x128xf32> to vector<4x16x128xf32>
    %38 = arith.mulf %32, %37 : vector<4x16x128xf32>
    %39 = vector.extract_strided_slice %35 {offsets = [0, 0, 0], sizes = [4, 16, 32], strides = [1, 1, 1]} : vector<4x16x128xf32> to vector<4x16x32xf32>
    %cst_26 = arith.constant dense<0.000000e+00> : vector<4x16xf32>
    %40 = vector.multi_reduction <add>, %39, %cst_26 [2] : vector<4x16x32xf32> to vector<4x16xf32>
    %41 = vector.shape_cast %40 : vector<4x16xf32> to vector<4x16x1xf32>
    %42 = vector.extract_strided_slice %35 {offsets = [0, 0, 32], sizes = [4, 16, 32], strides = [1, 1, 1]} : vector<4x16x128xf32> to vector<4x16x32xf32>
    %cst_27 = arith.constant dense<0.000000e+00> : vector<4x16xf32>
    %43 = vector.multi_reduction <add>, %42, %cst_27 [2] : vector<4x16x32xf32> to vector<4x16xf32>
    %44 = vector.shape_cast %43 : vector<4x16xf32> to vector<4x16x1xf32>
    %45 = vector.extract_strided_slice %35 {offsets = [0, 0, 64], sizes = [4, 16, 32], strides = [1, 1, 1]} : vector<4x16x128xf32> to vector<4x16x32xf32>
    %cst_28 = arith.constant dense<0.000000e+00> : vector<4x16xf32>
    %46 = vector.multi_reduction <add>, %45, %cst_28 [2] : vector<4x16x32xf32> to vector<4x16xf32>
    %47 = vector.shape_cast %46 : vector<4x16xf32> to vector<4x16x1xf32>
    %48 = vector.extract_strided_slice %35 {offsets = [0, 0, 96], sizes = [4, 16, 32], strides = [1, 1, 1]} : vector<4x16x128xf32> to vector<4x16x32xf32>
    %cst_29 = arith.constant dense<0.000000e+00> : vector<4x16xf32>
    %49 = vector.multi_reduction <add>, %48, %cst_29 [2] : vector<4x16x32xf32> to vector<4x16xf32>
    %50 = vector.shape_cast %49 : vector<4x16xf32> to vector<4x16x1xf32>
    %51 = vector.extract_strided_slice %38 {offsets = [0, 0, 0], sizes = [4, 16, 32], strides = [1, 1, 1]} : vector<4x16x128xf32> to vector<4x16x32xf32>
    %cst_30 = arith.constant dense<0.000000e+00> : vector<4x16xf32>
    %52 = vector.multi_reduction <add>, %51, %cst_30 [2] : vector<4x16x32xf32> to vector<4x16xf32>
    %53 = vector.shape_cast %52 : vector<4x16xf32> to vector<4x16x1xf32>
    %54 = vector.extract_strided_slice %38 {offsets = [0, 0, 32], sizes = [4, 16, 32], strides = [1, 1, 1]} : vector<4x16x128xf32> to vector<4x16x32xf32>
    %cst_31 = arith.constant dense<0.000000e+00> : vector<4x16xf32>
    %55 = vector.multi_reduction <add>, %54, %cst_31 [2] : vector<4x16x32xf32> to vector<4x16xf32>
    %56 = vector.shape_cast %55 : vector<4x16xf32> to vector<4x16x1xf32>
    %57 = vector.extract_strided_slice %38 {offsets = [0, 0, 64], sizes = [4, 16, 32], strides = [1, 1, 1]} : vector<4x16x128xf32> to vector<4x16x32xf32>
    %cst_32 = arith.constant dense<0.000000e+00> : vector<4x16xf32>
    %58 = vector.multi_reduction <add>, %57, %cst_32 [2] : vector<4x16x32xf32> to vector<4x16xf32>
    %59 = vector.shape_cast %58 : vector<4x16xf32> to vector<4x16x1xf32>
    %60 = vector.extract_strided_slice %38 {offsets = [0, 0, 96], sizes = [4, 16, 32], strides = [1, 1, 1]} : vector<4x16x128xf32> to vector<4x16x32xf32>
    %cst_33 = arith.constant dense<0.000000e+00> : vector<4x16xf32>
    %61 = vector.multi_reduction <add>, %60, %cst_33 [2] : vector<4x16x32xf32> to vector<4x16xf32>
    %62 = vector.shape_cast %61 : vector<4x16xf32> to vector<4x16x1xf32>
    %63 = tpu.concatenate %41, %44, %47, %50 in 2 : vector<4x16x1xf32>, vector<4x16x1xf32>, vector<4x16x1xf32>, vector<4x16x1xf32> -> vector<4x16x4xf32>
    %64 = tpu.transpose %63, [0, 2, 1] : vector<4x16x4xf32> -> vector<4x4x16xf32>
    %c0_34 = arith.constant 0 : index
    %c0_35 = arith.constant 0 : index
    %c0_36 = arith.constant 0 : index
    %65 = vector.load %arg4[%c0_34, %c0_35, %c0_36] : memref<4x16x16xbf16, #tpu.memory_space<vmem>>, vector<4x16x16xbf16>
    %66 = arith.extf %65 : vector<4x16x16xbf16> to vector<4x16x16xf32>
    %c0_37 = arith.constant 0 : index
    %c0_38 = arith.constant 0 : index
    %c0_39 = arith.constant 0 : index
    %67 = vector.load %arg5[%c0_37, %c0_38, %c0_39] : memref<4x16x1xbf16, #tpu.memory_space<vmem>>, vector<4x16x1xbf16>
    %68 = arith.extf %67 : vector<4x16x1xbf16> to vector<4x16x1xf32>
    %cst_40 = arith.constant 0.000000e+00 : f32
    %69 = vector.broadcast %cst_40 : f32 to vector<4x16x16xf32>
    %70 = vector.extract_strided_slice %64 {offsets = [0, 0, 0], sizes = [4, 1, 16], strides = [1, 1, 1]} : vector<4x4x16xf32> to vector<4x1x16xf32>
    %71 = vector.broadcast %53 : vector<4x16x1xf32> to vector<4x16x16xf32>
    %72 = vector.broadcast %70 : vector<4x1x16xf32> to vector<4x16x16xf32>
    %73 = arith.addf %71, %72 : vector<4x16x16xf32>
    %cst_41 = arith.constant 0.000000e+00 : f32
    %74 = vector.broadcast %cst_41 : f32 to vector<4x16x16xf32>
    %75 = arith.cmpf ogt, %73, %74 : vector<4x16x16xf32>
    %cst_42 = arith.constant 2.000000e-01 : f32
    %76 = vector.broadcast %cst_42 : f32 to vector<4x16x16xf32>
    %77 = arith.mulf %76, %73 : vector<4x16x16xf32>
    %78 = arith.select %75, %73, %77 : vector<4x16x16xi1>, vector<4x16x16xf32>
    %cst_43 = arith.constant 1.000000e+00 : f32
    %79 = vector.broadcast %cst_43 : f32 to vector<4x16x16xf32>
    %80 = arith.cmpf oeq, %66, %79 : vector<4x16x16xf32>
    %cst_44 = arith.constant 0.000000e+00 : f32
    %81 = vector.broadcast %cst_44 : f32 to vector<4x16x16xf32>
    %82 = arith.select %80, %78, %81 : vector<4x16x16xi1>, vector<4x16x16xf32>
    %83 = arith.addf %69, %82 : vector<4x16x16xf32>
    %84 = vector.extract_strided_slice %64 {offsets = [0, 1, 0], sizes = [4, 1, 16], strides = [1, 1, 1]} : vector<4x4x16xf32> to vector<4x1x16xf32>
    %85 = vector.broadcast %56 : vector<4x16x1xf32> to vector<4x16x16xf32>
    %86 = vector.broadcast %84 : vector<4x1x16xf32> to vector<4x16x16xf32>
    %87 = arith.addf %85, %86 : vector<4x16x16xf32>
    %cst_45 = arith.constant 0.000000e+00 : f32
    %88 = vector.broadcast %cst_45 : f32 to vector<4x16x16xf32>
    %89 = arith.cmpf ogt, %87, %88 : vector<4x16x16xf32>
    %cst_46 = arith.constant 2.000000e-01 : f32
    %90 = vector.broadcast %cst_46 : f32 to vector<4x16x16xf32>
    %91 = arith.mulf %90, %87 : vector<4x16x16xf32>
    %92 = arith.select %89, %87, %91 : vector<4x16x16xi1>, vector<4x16x16xf32>
    %cst_47 = arith.constant 2.000000e+00 : f32
    %93 = vector.broadcast %cst_47 : f32 to vector<4x16x16xf32>
    %94 = arith.cmpf oeq, %66, %93 : vector<4x16x16xf32>
    %cst_48 = arith.constant 0.000000e+00 : f32
    %95 = vector.broadcast %cst_48 : f32 to vector<4x16x16xf32>
    %96 = arith.select %94, %92, %95 : vector<4x16x16xi1>, vector<4x16x16xf32>
    %97 = arith.addf %83, %96 : vector<4x16x16xf32>
    %cst_49 = arith.constant 0.000000e+00 : f32
    %98 = vector.broadcast %cst_49 : f32 to vector<4x16x16xf32>
    %99 = arith.cmpf ogt, %66, %98 : vector<4x16x16xf32>
    %cst_50 = arith.constant -1.000000e+30 : f32
    %100 = vector.broadcast %cst_50 : f32 to vector<4x16x16xf32>
    %101 = arith.select %99, %97, %100 : vector<4x16x16xi1>, vector<4x16x16xf32>
    %cst_51 = arith.constant dense<0xFF800000> : vector<4x16xf32>
    %102 = vector.multi_reduction <maximumf>, %101, %cst_51 [1] : vector<4x16x16xf32> to vector<4x16xf32>
    %103 = vector.shape_cast %102 : vector<4x16xf32> to vector<4x1x16xf32>
    %104 = vector.broadcast %103 : vector<4x1x16xf32> to vector<4x16x16xf32>
    %105 = arith.subf %101, %104 : vector<4x16x16xf32>
    %106 = math.exp %105 : vector<4x16x16xf32>
    %cst_52 = arith.constant dense<0.000000e+00> : vector<4x16xf32>
    %107 = vector.multi_reduction <add>, %106, %cst_52 [1] : vector<4x16x16xf32> to vector<4x16xf32>
    %108 = vector.shape_cast %107 : vector<4x16xf32> to vector<4x1x16xf32>
    %109 = tpu.reciprocal %108 {approx = true} : vector<4x1x16xf32> -> vector<4x1x16xf32>
    %110 = vector.broadcast %109 : vector<4x1x16xf32> to vector<4x16x16xf32>
    %111 = arith.mulf %106, %110 : vector<4x16x16xf32>
    %112 = vector.extract_strided_slice %32 {offsets = [0, 0, 32], sizes = [4, 16, 32], strides = [1, 1, 1]} : vector<4x16x128xf32> to vector<4x16x32xf32>
    %113 = vector.broadcast %68 : vector<4x16x1xf32> to vector<4x16x32xf32>
    %114 = arith.mulf %112, %113 : vector<4x16x32xf32>
    %cst_53 = arith.constant dense<0.000000e+00> : vector<4x16x32xf32>
    %115 = tpu.matmul %111, %114, %cst_53 {dimension_numbers = #tpu.dot_dimension_numbers<[2], [1], [1], [2], [0, 0, 0, 1, 1, 2], [0], [0]>} : vector<4x16x16xf32>, vector<4x16x32xf32>, vector<4x16x32xf32> -> vector<4x16x32xf32>
    %cst_54 = arith.constant 0.000000e+00 : f32
    %116 = vector.broadcast %cst_54 : f32 to vector<4x16x16xf32>
    %117 = vector.extract_strided_slice %64 {offsets = [0, 2, 0], sizes = [4, 1, 16], strides = [1, 1, 1]} : vector<4x4x16xf32> to vector<4x1x16xf32>
    %118 = vector.broadcast %59 : vector<4x16x1xf32> to vector<4x16x16xf32>
    %119 = vector.broadcast %117 : vector<4x1x16xf32> to vector<4x16x16xf32>
    %120 = arith.addf %118, %119 : vector<4x16x16xf32>
    %cst_55 = arith.constant 0.000000e+00 : f32
    %121 = vector.broadcast %cst_55 : f32 to vector<4x16x16xf32>
    %122 = arith.cmpf ogt, %120, %121 : vector<4x16x16xf32>
    %cst_56 = arith.constant 2.000000e-01 : f32
    %123 = vector.broadcast %cst_56 : f32 to vector<4x16x16xf32>
    %124 = arith.mulf %123, %120 : vector<4x16x16xf32>
    %125 = arith.select %122, %120, %124 : vector<4x16x16xi1>, vector<4x16x16xf32>
    %cst_57 = arith.constant 1.000000e+00 : f32
    %126 = vector.broadcast %cst_57 : f32 to vector<4x16x16xf32>
    %127 = arith.cmpf oeq, %66, %126 : vector<4x16x16xf32>
    %cst_58 = arith.constant 0.000000e+00 : f32
    %128 = vector.broadcast %cst_58 : f32 to vector<4x16x16xf32>
    %129 = arith.select %127, %125, %128 : vector<4x16x16xi1>, vector<4x16x16xf32>
    %130 = arith.addf %116, %129 : vector<4x16x16xf32>
    %131 = vector.extract_strided_slice %64 {offsets = [0, 3, 0], sizes = [4, 1, 16], strides = [1, 1, 1]} : vector<4x4x16xf32> to vector<4x1x16xf32>
    %132 = vector.broadcast %62 : vector<4x16x1xf32> to vector<4x16x16xf32>
    %133 = vector.broadcast %131 : vector<4x1x16xf32> to vector<4x16x16xf32>
    %134 = arith.addf %132, %133 : vector<4x16x16xf32>
    %cst_59 = arith.constant 0.000000e+00 : f32
    %135 = vector.broadcast %cst_59 : f32 to vector<4x16x16xf32>
    %136 = arith.cmpf ogt, %134, %135 : vector<4x16x16xf32>
    %cst_60 = arith.constant 2.000000e-01 : f32
    %137 = vector.broadcast %cst_60 : f32 to vector<4x16x16xf32>
    %138 = arith.mulf %137, %134 : vector<4x16x16xf32>
    %139 = arith.select %136, %134, %138 : vector<4x16x16xi1>, vector<4x16x16xf32>
    %cst_61 = arith.constant 2.000000e+00 : f32
    %140 = vector.broadcast %cst_61 : f32 to vector<4x16x16xf32>
    %141 = arith.cmpf oeq, %66, %140 : vector<4x16x16xf32>
    %cst_62 = arith.constant 0.000000e+00 : f32
    %142 = vector.broadcast %cst_62 : f32 to vector<4x16x16xf32>
    %143 = arith.select %141, %139, %142 : vector<4x16x16xi1>, vector<4x16x16xf32>
    %144 = arith.addf %130, %143 : vector<4x16x16xf32>
    %cst_63 = arith.constant 0.000000e+00 : f32
    %145 = vector.broadcast %cst_63 : f32 to vector<4x16x16xf32>
    %146 = arith.cmpf ogt, %66, %145 : vector<4x16x16xf32>
    %cst_64 = arith.constant -1.000000e+30 : f32
    %147 = vector.broadcast %cst_64 : f32 to vector<4x16x16xf32>
    %148 = arith.select %146, %144, %147 : vector<4x16x16xi1>, vector<4x16x16xf32>
    %cst_65 = arith.constant dense<0xFF800000> : vector<4x16xf32>
    %149 = vector.multi_reduction <maximumf>, %148, %cst_65 [1] : vector<4x16x16xf32> to vector<4x16xf32>
    %150 = vector.shape_cast %149 : vector<4x16xf32> to vector<4x1x16xf32>
    %151 = vector.broadcast %150 : vector<4x1x16xf32> to vector<4x16x16xf32>
    %152 = arith.subf %148, %151 : vector<4x16x16xf32>
    %153 = math.exp %152 : vector<4x16x16xf32>
    %cst_66 = arith.constant dense<0.000000e+00> : vector<4x16xf32>
    %154 = vector.multi_reduction <add>, %153, %cst_66 [1] : vector<4x16x16xf32> to vector<4x16xf32>
    %155 = vector.shape_cast %154 : vector<4x16xf32> to vector<4x1x16xf32>
    %156 = tpu.reciprocal %155 {approx = true} : vector<4x1x16xf32> -> vector<4x1x16xf32>
    %157 = vector.broadcast %156 : vector<4x1x16xf32> to vector<4x16x16xf32>
    %158 = arith.mulf %153, %157 : vector<4x16x16xf32>
    %159 = vector.extract_strided_slice %32 {offsets = [0, 0, 96], sizes = [4, 16, 32], strides = [1, 1, 1]} : vector<4x16x128xf32> to vector<4x16x32xf32>
    %160 = vector.broadcast %68 : vector<4x16x1xf32> to vector<4x16x32xf32>
    %161 = arith.mulf %159, %160 : vector<4x16x32xf32>
    %cst_67 = arith.constant dense<0.000000e+00> : vector<4x16x32xf32>
    %162 = tpu.matmul %158, %161, %cst_67 {dimension_numbers = #tpu.dot_dimension_numbers<[2], [1], [1], [2], [0, 0, 0, 1, 1, 2], [0], [0]>} : vector<4x16x16xf32>, vector<4x16x32xf32>, vector<4x16x32xf32> -> vector<4x16x32xf32>
    %163 = tpu.concatenate %115, %162 in 2 : vector<4x16x32xf32>, vector<4x16x32xf32> -> vector<4x16x64xf32>
    %cst_68 = arith.constant 0.000000e+00 : f32
    %164 = vector.broadcast %cst_68 : f32 to vector<4x16x64xf32>
    %165 = arith.maximumf %163, %164 : vector<4x16x64xf32>
    %166 = vector.shape_cast %165 : vector<4x16x64xf32> to vector<64x64xf32>
    %c0_69 = arith.constant 0 : index
    %c0_70 = arith.constant 0 : index
    %167 = vector.load %arg11[%c0_69, %c0_70] : memref<64x64xf32, #tpu.memory_space<vmem>>, vector<64x64xf32>
    tpu.vector_store %arg11[%c0_69, %c0_70], %166 {strides = array<i32>} : memref<64x64xf32, #tpu.memory_space<vmem>>, vector<64x64xf32>,
    return
  }
  func.func @transform_0(%arg0: i32) -> (i32, i32, i32) {
    %c0_i32 = arith.constant 0 : i32
    %c0_i32_0 = arith.constant 0 : i32
    %c0_i32_1 = arith.constant 0 : i32
    return %arg0, %c0_i32, %c0_i32_0 : i32, i32, i32
  }
  func.func @transform_1(%arg0: i32) -> (i32, i32, i32) {
    %c0_i32 = arith.constant 0 : i32
    %c0_i32_0 = arith.constant 0 : i32
    %c0_i32_1 = arith.constant 0 : i32
    return %arg0, %c0_i32, %c0_i32_0 : i32, i32, i32
  }
  func.func @transform_2(%arg0: i32) -> (i32, i32, i32) {
    %c0_i32 = arith.constant 0 : i32
    %c0_i32_0 = arith.constant 0 : i32
    %c0_i32_1 = arith.constant 0 : i32
    return %arg0, %c0_i32, %c0_i32_0 : i32, i32, i32
  }
  func.func @transform_3(%arg0: i32) -> (i32, i32, i32) {
    %c0_i32 = arith.constant 0 : i32
    %c0_i32_0 = arith.constant 0 : i32
    %c0_i32_1 = arith.constant 0 : i32
    return %arg0, %c0_i32, %c0_i32_0 : i32, i32, i32
  }
  func.func @transform_4(%arg0: i32) -> (i32, i32, i32) {
    %c0_i32 = arith.constant 0 : i32
    %c0_i32_0 = arith.constant 0 : i32
    %c0_i32_1 = arith.constant 0 : i32
    return %arg0, %c0_i32, %c0_i32_0 : i32, i32, i32
  }
  func.func @transform_5(%arg0: i32) -> (i32, i32, i32) {
    %c0_i32 = arith.constant 0 : i32
    %c0_i32_0 = arith.constant 0 : i32
    %c0_i32_1 = arith.constant 0 : i32
    return %arg0, %c0_i32, %c0_i32_0 : i32, i32, i32
  }
  func.func @transform_6(%arg0: i32) -> (i32, i32, i32) {
    %c0_i32 = arith.constant 0 : i32
    %c0_i32_0 = arith.constant 0 : i32
    %c0_i32_1 = arith.constant 0 : i32
    return %arg0, %c0_i32, %c0_i32_0 : i32, i32, i32
  }
  func.func @transform_7(%arg0: i32) -> (i32, i32) {
    %c0_i32 = arith.constant 0 : i32
    %c0_i32_0 = arith.constant 0 : i32
    %c0_i32_1 = arith.constant 0 : i32
    return %c0_i32, %c0_i32_0 : i32, i32
  }
  func.func @transform_8(%arg0: i32) -> (i32, i32) {
    %c0_i32 = arith.constant 0 : i32
    %c0_i32_0 = arith.constant 0 : i32
    %c0_i32_1 = arith.constant 0 : i32
    return %c0_i32, %c0_i32_0 : i32, i32
  }
  func.func @transform_9(%arg0: i32) -> (i32, i32, i32) {
    %c0_i32 = arith.constant 0 : i32
    %c0_i32_0 = arith.constant 0 : i32
    %c0_i32_1 = arith.constant 0 : i32
    %c0_i32_2 = arith.constant 0 : i32
    return %c0_i32, %c0_i32_0, %c0_i32_1 : i32, i32, i32
  }
  func.func @transform_10(%arg0: i32) -> (i32, i32) {
    %c0_i32 = arith.constant 0 : i32
    %c0_i32_0 = arith.constant 0 : i32
    return %arg0, %c0_i32 : i32, i32
  }
}

</mosaic_0001>

<llo_original>
// kernel: tpu_custom_call.1
$region0: #{tpu_custom_call.1}
  #allocation0 [shape = 'u32[]', space=smem, size = 0x4, offset = 0x4, fixed_abs, tag = 'smem constant byte address 0x4 - core index']
  #allocation1 [shape = 'u32[144,128]{1,0:T(1,128)}', space=vmem, size = 0x12000, scoped, tag = 'internal scratch']
  %s0 = inlined_call_operand.hbm [shape: bf16[8,32,32], index: 0, kind: input, shape index: {}]
  %s1 = inlined_call_operand.hbm [shape: bf16[8,32,32], index: 1, kind: input, shape index: {}]
  %s2 = inlined_call_operand.vmem [shape: bf16[8,1,64], index: 2, kind: input, shape index: {}]
  %s3 = inlined_call_operand.vmem [shape: bf16[8,16,16], index: 3, kind: input, shape index: {}]
  %s4 = inlined_call_operand.vmem [shape: bf16[8,16,1], index: 4, kind: input, shape index: {}]
  %s5 = inlined_call_operand.hbm [shape: f32[8,1,128], index: 5, kind: input, shape index: {}]
  %s6 = inlined_call_operand.hbm [shape: f32[8,1,128], index: 6, kind: input, shape index: {}]
  %s7 = inlined_call_operand.hbm [shape: bf16[64,128], index: 7, kind: input, shape index: {}]
  %s8 = inlined_call_operand.hbm [shape: f32[1,128], index: 8, kind: input, shape index: {}]
  %s9 = inlined_call_operand.vmem [shape: bf16[2,32,128], index: 9, kind: input, shape index: {}]
  %s10 = inlined_call_operand.vmem [shape: f32[128,64], index: 10, kind: output, shape index: {}]
  %s11 = sld [smem:[#allocation0]]
  $region97: #{tpu_custom_call.1} parent=0
    _
  %s13 = ssub.s32 1, %s11
  %s14 = scalar_select 0, %s13, %s11
  $region1: #{tpu_custom_call.1} parent=0
    #allocation2 [shape = 'u8[65536]{0}', space=vmem, size = 0x10000, scoped, tag = 'input window, operand 0']
    #allocation3 [shape = 's32[2]{0}', space=sflag, size = 0x8, scoped, tag = 'scoped memory for tpu_custom_call.1']
    #allocation4 [shape = 'u8[65536]{0}', space=vmem, size = 0x10000, scoped, tag = 'input window, operand 1']
    #allocation5 [shape = 's32[2]{0}', space=sflag, size = 0x8, scoped, tag = 'scoped memory for tpu_custom_call.1']
    #allocation6 [shape = 'u8[4096]{0}', space=vmem, size = 0x1000, scoped, tag = 'input window, operand 5']
    #allocation7 [shape = 'u8[4096]{0}', space=vmem, size = 0x1000, scoped, tag = 'input window, operand 6']
    #allocation8 [shape = 's32[2]{0}', space=sflag, size = 0x8, scoped, tag = 'scoped memory for tpu_custom_call.1']
    #allocation9 [shape = 'u8[16384]{0}', space=vmem, size = 0x4000, scoped, tag = 'input window, operand 7, single buffered']
    #allocation10 [shape = 'u8[512]{0}', space=vmem, size = 0x400, scoped, tag = 'input window, operand 8, single buffered']
    #allocation11 [shape = 's32[1]{0}', space=sflag, size = 0x4, scoped, tag = 'scoped memory for tpu_custom_call.1']
    %15 = vsyncpa [#allocation3], 0
    %s16 = scalar_lea.sflag [#allocation3], 1
    %17 = vsyncpa %s16, 0
    %18 = vsyncpa [#allocation5], 0
    %s19 = scalar_lea.sflag [#allocation5], 1
    %20 = vsyncpa %s19, 0
    %21 = vsyncpa [#allocation8], 0
    %s22 = scalar_lea.sflag [#allocation8], 1
    %23 = vsyncpa %s22, 0
    %24 = vsyncpa [#allocation11], 0
    loop: start=0, step=1, limit=4
    $region2: #{tpu_custom_call.1} parent=1 // loop_pre_header
      _
    $region3: #{tpu_custom_call.1} parent=1 // loop_header
      %s26 = sphi 0, %s30
      %p27 = scmp.ge.s32.totalorder %s26, 4
      %s36 = sphi 0, %s38
      %s39 = sphi 0, %s36
      %s40 = sphi 0, %s39
      %s56 = sphi 0, %s40
      %s62 = sphi 0, %s64
      %s65 = sphi 0, %s62
      %s66 = sphi 0, %s65
      %s82 = sphi 0, %s66
      %s88 = sphi 0, %s90
      %s91 = sphi 0, %s88
      %s92 = sphi 0, %s91
      %s108 = sphi 0, %s92
      %s114 = sphi 0, %s116
      %s117 = sphi 0, %s114
      %s118 = sphi 0, %s117
      %s134 = sphi 0, %s118
      %s140 = sphi 0, %s142
      %s143 = sphi 0, %s140
      %s144 = sphi 0, %s143
      %s160 = sphi 0, %s144
      %s166 = sphi 0, %s168
      %s169 = sphi 0, %s166
      %s170 = sphi 0, %s169
      %s186 = sphi 0, %s170
      %s192 = sphi 0, %s194
      %s195 = sphi 0, %s192
      %s196 = sphi 0, %s195
      %s212 = sphi 0, %s196
      %s216 = sphi 0, %s216
      %s218 = sphi 0, %s216
      %s219 = sphi 0, %s218
      %s233 = sphi 0, %s219
      %s237 = sphi 0, %s237
      %s239 = sphi 0, %s237
      %s240 = sphi 0, %s239
      %s254 = sphi 0, %s240
      %s258 = sphi 0, %s258
      %s260 = sphi 0, %s258
      %s261 = sphi 0, %s260
      %s275 = sphi 0, %s261
      %s281 = sphi 0, %s283
      %s284 = sphi 0, %s281
      %s285 = sphi 0, %s284
      %s301 = sphi 0, %s285
    $region4: #{tpu_custom_call.1} parent=1 // loop_header_branch
      %29 = sbr.rel (%p27) target = $region8
    $region5: #{tpu_custom_call.1} parent=1 // loop_body
      %s31 = ssub.s32 %s26, 1
      %s32 = ssub.s32 %s26, 2
      %s33 = sadd.s32 %s26, 1
      %s34 = ssub.s32 %s26, %s33
      %p35 = scmp.eq.s32.totalorder %s34, 0
      %s37 = sadd.s32 %s36, 1
      %s38 = scalar_select %p35, %s36, %s37
      %p41 = pneg %p35
      %p42 = scmp.eq.s32.totalorder %s26, 1
      %p43 = por %p41, %p42
      %p44 = scmp.ne.s32.totalorder %s36, %s39
      %p45 = scmp.eq.s32.totalorder %s26, 0
      %p46 = por %p44, %p45
      %p47 = scmp.ne.s32.totalorder %s36, %s39
      %p48 = scmp.eq.s32.totalorder %s31, 1
      %p49 = por %p47, %p48
      %p50 = scmp.ne.s32.totalorder %s39, %s40
      %p51 = scmp.eq.s32.totalorder %s31, 0
      %p52 = por %p50, %p51
      %p53 = scmp.ne.s32.totalorder %s39, %s40
      %p54 = scmp.eq.s32.totalorder %s32, 1
      %p55 = por %p53, %p54
      %p57 = scmp.ne.s32.totalorder %s40, %s56
      %p58 = scmp.eq.s32.totalorder %s32, 0
      %p59 = por %p57, %p58
      %s60 = ssub.s32 %s26, %s33
      %p61 = scmp.eq.s32.totalorder %s60, 0
      %s63 = sadd.s32 %s62, 1
      %s64 = scalar_select %p61, %s62, %s63
      %p67 = pneg %p61
      %p68 = scmp.eq.s32.totalorder %s26, 1
      %p69 = por %p67, %p68
      %p70 = scmp.ne.s32.totalorder %s62, %s65
      %p71 = scmp.eq.s32.totalorder %s26, 0
      %p72 = por %p70, %p71
      %p73 = scmp.ne.s32.totalorder %s62, %s65
      %p74 = scmp.eq.s32.totalorder %s31, 1
      %p75 = por %p73, %p74
      %p76 = scmp.ne.s32.totalorder %s65, %s66
      %p77 = scmp.eq.s32.totalorder %s31, 0
      %p78 = por %p76, %p77
      %p79 = scmp.ne.s32.totalorder %s65, %s66
      %p80 = scmp.eq.s32.totalorder %s32, 1
      %p81 = por %p79, %p80
      %p83 = scmp.ne.s32.totalorder %s66, %s82
      %p84 = scmp.eq.s32.totalorder %s32, 0
      %p85 = por %p83, %p84
      %s86 = ssub.s32 %s26, %s33
      %p87 = scmp.eq.s32.totalorder %s86, 0
      %s89 = sadd.s32 %s88, 1
      %s90 = scalar_select %p87, %s88, %s89
      %p93 = pneg %p87
      %p94 = scmp.eq.s32.totalorder %s26, 1
      %p95 = por %p93, %p94
      %p96 = scmp.ne.s32.totalorder %s88, %s91
      %p97 = scmp.eq.s32.totalorder %s26, 0
      %p98 = por %p96, %p97
      %p99 = scmp.ne.s32.totalorder %s88, %s91
      %p100 = scmp.eq.s32.totalorder %s31, 1
      %p101 = por %p99, %p100
      %p102 = scmp.ne.s32.totalorder %s91, %s92
      %p103 = scmp.eq.s32.totalorder %s31, 0
      %p104 = por %p102, %p103
      %p105 = scmp.ne.s32.totalorder %s91, %s92
      %p106 = scmp.eq.s32.totalorder %s32, 1
      %p107 = por %p105, %p106
      %p109 = scmp.ne.s32.totalorder %s92, %s108
      %p110 = scmp.eq.s32.totalorder %s32, 0
      %p111 = por %p109, %p110
      %s112 = ssub.s32 %s26, %s33
      %p113 = scmp.eq.s32.totalorder %s112, 0
      %s115 = sadd.s32 %s114, 1
      %s116 = scalar_select %p113, %s114, %s115
      %p119 = pneg %p113
      %p120 = scmp.eq.s32.totalorder %s26, 1
      %p121 = por %p119, %p120
      %p122 = scmp.ne.s32.totalorder %s114, %s117
      %p123 = scmp.eq.s32.totalorder %s26, 0
      %p124 = por %p122, %p123
      %p125 = scmp.ne.s32.totalorder %s114, %s117
      %p126 = scmp.eq.s32.totalorder %s31, 1
      %p127 = por %p125, %p126
      %p128 = scmp.ne.s32.totalorder %s117, %s118
      %p129 = scmp.eq.s32.totalorder %s31, 0
      %p130 = por %p128, %p129
      %p131 = scmp.ne.s32.totalorder %s117, %s118
      %p132 = scmp.eq.s32.totalorder %s32, 1
      %p133 = por %p131, %p132
      %p135 = scmp.ne.s32.totalorder %s118, %s134
      %p136 = scmp.eq.s32.totalorder %s32, 0
      %p137 = por %p135, %p136
      %s138 = ssub.s32 %s26, %s33
      %p139 = scmp.eq.s32.totalorder %s138, 0
      %s141 = sadd.s32 %s140, 1
      %s142 = scalar_select %p139, %s140, %s141
      %p145 = pneg %p139
      %p146 = scmp.eq.s32.totalorder %s26, 1
      %p147 = por %p145, %p146
      %p148 = scmp.ne.s32.totalorder %s140, %s143
      %p149 = scmp.eq.s32.totalorder %s26, 0
      %p150 = por %p148, %p149
      %p151 = scmp.ne.s32.totalorder %s140, %s143
      %p152 = scmp.eq.s32.totalorder %s31, 1
      %p153 = por %p151, %p152
      %p154 = scmp.ne.s32.totalorder %s143, %s144
      %p155 = scmp.eq.s32.totalorder %s31, 0
      %p156 = por %p154, %p155
      %p157 = scmp.ne.s32.totalorder %s143, %s144
      %p158 = scmp.eq.s32.totalorder %s32, 1
      %p159 = por %p157, %p158
      %p161 = scmp.ne.s32.totalorder %s144, %s160
      %p162 = scmp.eq.s32.totalorder %s32, 0
      %p163 = por %p161, %p162
      %s164 = ssub.s32 %s26, %s33
      %p165 = scmp.eq.s32.totalorder %s164, 0
      %s167 = sadd.s32 %s166, 1
      %s168 = scalar_select %p165, %s166, %s167
      %p171 = pneg %p165
      %p172 = scmp.eq.s32.totalorder %s26, 1
      %p173 = por %p171, %p172
      %p174 = scmp.ne.s32.totalorder %s166, %s169
      %p175 = scmp.eq.s32.totalorder %s26, 0
      %p176 = por %p174, %p175
      %p177 = scmp.ne.s32.totalorder %s166, %s169
      %p178 = scmp.eq.s32.totalorder %s31, 1
      %p179 = por %p177, %p178
      %p180 = scmp.ne.s32.totalorder %s169, %s170
      %p181 = scmp.eq.s32.totalorder %s31, 0
      %p182 = por %p180, %p181
      %p183 = scmp.ne.s32.totalorder %s169, %s170
      %p184 = scmp.eq.s32.totalorder %s32, 1
      %p185 = por %p183, %p184
      %p187 = scmp.ne.s32.totalorder %s170, %s186
      %p188 = scmp.eq.s32.totalorder %s32, 0
      %p189 = por %p187, %p188
      %s190 = ssub.s32 %s26, %s33
      %p191 = scmp.eq.s32.totalorder %s190, 0
      %s193 = sadd.s32 %s192, 1
      %s194 = scalar_select %p191, %s192, %s193
      %p197 = pneg %p191
      %p198 = scmp.eq.s32.totalorder %s26, 1
      %p199 = por %p197, %p198
      %p200 = scmp.ne.s32.totalorder %s192, %s195
      %p201 = scmp.eq.s32.totalorder %s26, 0
      %p202 = por %p200, %p201
      %p203 = scmp.ne.s32.totalorder %s192, %s195
      %p204 = scmp.eq.s32.totalorder %s31, 1
      %p205 = por %p203, %p204
      %p206 = scmp.ne.s32.totalorder %s195, %s196
      %p207 = scmp.eq.s32.totalorder %s31, 0
      %p208 = por %p206, %p207
      %p209 = scmp.ne.s32.totalorder %s195, %s196
      %p210 = scmp.eq.s32.totalorder %s32, 1
      %p211 = por %p209, %p210
      %p213 = scmp.ne.s32.totalorder %s196, %s212
      %p214 = scmp.eq.s32.totalorder %s32, 0
      %p215 = por %p213, %p214
      %s217 = sadd.s32 %s216, 1
      %p220 = scmp.eq.s32.totalorder %s26, 1
      %p221 = scmp.ne.s32.totalorder %s216, %s218
      %p222 = scmp.eq.s32.totalorder %s26, 0
      %p223 = por %p221, %p222
      %p224 = scmp.ne.s32.totalorder %s216, %s218
      %p225 = scmp.eq.s32.totalorder %s31, 1
      %p226 = por %p224, %p225
      %p227 = scmp.ne.s32.totalorder %s218, %s219
      %p228 = scmp.eq.s32.totalorder %s31, 0
      %p229 = por %p227, %p228
      %p230 = scmp.ne.s32.totalorder %s218, %s219
      %p231 = scmp.eq.s32.totalorder %s32, 1
      %p232 = por %p230, %p231
      %p234 = scmp.ne.s32.totalorder %s219, %s233
      %p235 = scmp.eq.s32.totalorder %s32, 0
      %p236 = por %p234, %p235
      %s238 = sadd.s32 %s237, 1
      %p241 = scmp.eq.s32.totalorder %s26, 1
      %p242 = scmp.ne.s32.totalorder %s237, %s239
      %p243 = scmp.eq.s32.totalorder %s26, 0
      %p244 = por %p242, %p243
      %p245 = scmp.ne.s32.totalorder %s237, %s239
      %p246 = scmp.eq.s32.totalorder %s31, 1
      %p247 = por %p245, %p246
      %p248 = scmp.ne.s32.totalorder %s239, %s240
      %p249 = scmp.eq.s32.totalorder %s31, 0
      %p250 = por %p248, %p249
      %p251 = scmp.ne.s32.totalorder %s239, %s240
      %p252 = scmp.eq.s32.totalorder %s32, 1
      %p253 = por %p251, %p252
      %p255 = scmp.ne.s32.totalorder %s240, %s254
      %p256 = scmp.eq.s32.totalorder %s32, 0
      %p257 = por %p255, %p256
      %s259 = sadd.s32 %s258, 1
      %p262 = scmp.eq.s32.totalorder %s26, 1
      %p263 = scmp.ne.s32.totalorder %s258, %s260
      %p264 = scmp.eq.s32.totalorder %s26, 0
      %p265 = por %p263, %p264
      %p266 = scmp.ne.s32.totalorder %s258, %s260
      %p267 = scmp.eq.s32.totalorder %s31, 1
      %p268 = por %p266, %p267
      %p269 = scmp.ne.s32.totalorder %s260, %s261
      %p270 = scmp.eq.s32.totalorder %s31, 0
      %p271 = por %p269, %p270
      %p272 = scmp.ne.s32.totalorder %s260, %s261
      %p273 = scmp.eq.s32.totalorder %s32, 1
      %p274 = por %p272, %p273
      %p276 = scmp.ne.s32.totalorder %s261, %s275
      %p277 = scmp.eq.s32.totalorder %s32, 0
      %p278 = por %p276, %p277
      %s279 = ssub.s32 %s26, %s33
      %p280 = scmp.eq.s32.totalorder %s279, 0
      %s282 = sadd.s32 %s281, 1
      %s283 = scalar_select %p280, %s281, %s282
      %p286 = pneg %p280
      %p287 = scmp.eq.s32.totalorder %s26, 1
      %p288 = por %p286, %p287
      %p289 = scmp.ne.s32.totalorder %s281, %s284
      %p290 = scmp.eq.s32.totalorder %s26, 0
      %p291 = por %p289, %p290
      %p292 = scmp.ne.s32.totalorder %s281, %s284
      %p293 = scmp.eq.s32.totalorder %s31, 1
      %p294 = por %p292, %p293
      %p295 = scmp.ne.s32.totalorder %s284, %s285
      %p296 = scmp.eq.s32.totalorder %s31, 0
      %p297 = por %p295, %p296
      %p298 = scmp.ne.s32.totalorder %s284, %s285
      %p299 = scmp.eq.s32.totalorder %s32, 1
      %p300 = por %p298, %p299
      %p302 = scmp.ne.s32.totalorder %s285, %s301
      %p303 = scmp.eq.s32.totalorder %s32, 0
      %p304 = por %p302, %p303
      %p305 = scmp.le.s32.totalorder 1, %s26
      %p306 = scmp.lt.s32.totalorder %s26, 3
      %p307 = pnand %p305, %p306
      %p308 = pneg %p307
      // Predicated region
      $region9: #{tpu_custom_call.1} parent=5 // pred_check
        _
      $region10: #{tpu_custom_call.1} parent=5 // pred_check_branch
        %310 = sbr.rel (%p307) target = $region12
      $region11: #{tpu_custom_call.1} parent=5 // pred_region
        %s311 = ssub.s32 %s26, 1
        // Predicated region
        $region13: #{tpu_custom_call.1} parent=11 // pred_check
          %p312 = pneg %p229
        $region14: #{tpu_custom_call.1} parent=11 // pred_check_branch
          %314 = sbr.rel (%p312) target = $region16
        $region15: #{tpu_custom_call.1} parent=11 // pred_region
          %s316 = ssub.s32 512, 512
          %317 = vsyncadd [#allocation8], %s316
          %s318 = sshll.u32 [#allocation9], 4
          %s319 = int_to_ptr.vmem [resolvable:$true] %s318
          %324 = dma.hbm_to_vmem [thread:$0]  %s7, 512, %s319, [#allocation8], 64, 64, 4
        $region16: #{tpu_custom_call.1} parent=11 // pred_fallthru
          _
        // Predicated region
        $region17: #{tpu_custom_call.1} parent=11 // pred_check
          %p325 = pneg %p250
        $region18: #{tpu_custom_call.1} parent=11 // pred_check_branch
          %327 = sbr.rel (%p325) target = $region20
        $region19: #{tpu_custom_call.1} parent=11 // pred_region
          %s329 = ssub.s32 16, 16
          %330 = vsyncadd [#allocation11], %s329
          %s332 = sshll.u32 [#allocation10], 4
          %s333 = int_to_ptr.vmem [resolvable:$true] %s332
          %335 = dma.hbm_to_vmem [thread:$0]  %s8, 16, %s333, [#allocation11]
        $region20: #{tpu_custom_call.1} parent=11 // pred_fallthru
          _
        // Predicated region
        $region21: #{tpu_custom_call.1} parent=11 // pred_check
          %p336 = pneg %p271
        $region22: #{tpu_custom_call.1} parent=11 // pred_check_branch
          %338 = sbr.rel (%p336) target = $region24
        $region23: #{tpu_custom_call.1} parent=11 // pred_region
          _
        $region24: #{tpu_custom_call.1} parent=11 // pred_fallthru
          _
      $region12: #{tpu_custom_call.1} parent=5 // pred_fallthru
        _
      %p339 = scmp.lt.s32.totalorder %s26, 2
      // Predicated region
      $region25: #{tpu_custom_call.1} parent=5 // pred_check
        %p340 = pneg %p339
      $region26: #{tpu_custom_call.1} parent=5 // pred_check_branch
        %342 = sbr.rel (%p340) target = $region28
      $region27: #{tpu_custom_call.1} parent=5 // pred_region
        // Predicated region
        $region29: #{tpu_custom_call.1} parent=27 // pred_check
          %p343 = pneg %p46
        $region30: #{tpu_custom_call.1} parent=27 // pred_check_branch
          %345 = sbr.rel (%p343) target = $region32
        $region31: #{tpu_custom_call.1} parent=27 // pred_region
          %s346 = sand.u32 %s36, 1
          %s347 = scalar_lea.sflag [#allocation3], %s346
          %s348 = sand.u32 %s36, 1
          %s349 = smul.addr %s348, 64
          %s350 = scalar_lea.vmem [#allocation2], %s349
          %s351 = smul.u32 4, %s26
          %s353 = ssub.s32 1024, 1024
          %354 = vsyncadd %s347, %s353
          %s355 = smul.addr %s351, 4
          %s356 = smul.addr %s355, 64
          %s357 = scalar_lea.hbm %s0, %s356
          %s358 = sshll.u32 %s350, 4
          %s359 = int_to_ptr.vmem [resolvable:$true] %s358
          %364 = dma.hbm_to_vmem [thread:$0]  %s357, 1024, %s359, %s347, 64, 64, 4
        $region32: #{tpu_custom_call.1} parent=27 // pred_fallthru
          _
        // Predicated region
        $region33: #{tpu_custom_call.1} parent=27 // pred_check
          %p365 = pneg %p72
        $region34: #{tpu_custom_call.1} parent=27 // pred_check_branch
          %367 = sbr.rel (%p365) target = $region36
        $region35: #{tpu_custom_call.1} parent=27 // pred_region
          %s368 = sand.u32 %s26, 1
          %s369 = scalar_lea.sflag [#allocation5], %s368
          %s370 = sand.u32 %s62, 1
          %s371 = smul.addr %s370, 64
          %s372 = scalar_lea.vmem [#allocation4], %s371
          %s373 = smul.u32 4, %s26
          %s375 = ssub.s32 1024, 1024
          %376 = vsyncadd %s369, %s375
          %s377 = smul.addr %s373, 4
          %s378 = smul.addr %s377, 64
          %s379 = scalar_lea.hbm %s1, %s378
          %s380 = sshll.u32 %s372, 4
          %s381 = int_to_ptr.vmem [resolvable:$true] %s380
          %386 = dma.hbm_to_vmem [thread:$0]  %s379, 1024, %s381, %s369, 64, 64, 4
        $region36: #{tpu_custom_call.1} parent=27 // pred_fallthru
          _
        // Predicated region
        $region37: #{tpu_custom_call.1} parent=27 // pred_check
          %p387 = pneg %p98
        $region38: #{tpu_custom_call.1} parent=27 // pred_check_branch
          %389 = sbr.rel (%p387) target = $region40
        $region39: #{tpu_custom_call.1} parent=27 // pred_region
          %s390 = smul.u32 4, %s26
          %p391 = scmp.lt.s32.totalorder %s390, 7
          %s392 = scalar_select %p391, %s390, 7
          %s393 = scalar_lea.vmem %s2, %s392
          %s394 = smul.u32 4, %s26
        $region40: #{tpu_custom_call.1} parent=27 // pred_fallthru
          _
        // Predicated region
        $region41: #{tpu_custom_call.1} parent=27 // pred_check
          %p395 = pneg %p124
        $region42: #{tpu_custom_call.1} parent=27 // pred_check_branch
          %397 = sbr.rel (%p395) target = $region44
        $region43: #{tpu_custom_call.1} parent=27 // pred_region
          %s398 = smul.u32 4, %s26
          %p399 = scmp.lt.s32.totalorder %s398, 7
          %s400 = scalar_select %p399, %s398, 7
          %s401 = smul.addr %s400, 2
          %s402 = smul.addr %s401, 4
          %s403 = scalar_lea.vmem %s3, %s402
          %s404 = smul.u32 4, %s26
        $region44: #{tpu_custom_call.1} parent=27 // pred_fallthru
          _
        // Predicated region
        $region45: #{tpu_custom_call.1} parent=27 // pred_check
          %p405 = pneg %p150
        $region46: #{tpu_custom_call.1} parent=27 // pred_check_branch
          %407 = sbr.rel (%p405) target = $region48
        $region47: #{tpu_custom_call.1} parent=27 // pred_region
          %s408 = smul.u32 4, %s26
          %p409 = scmp.lt.s32.totalorder %s408, 7
          %s410 = scalar_select %p409, %s408, 7
          %s411 = smul.addr %s410, 2
          %s412 = smul.addr %s411, 4
          %s413 = scalar_lea.vmem %s4, %s412
          %s414 = smul.u32 4, %s26
        $region48: #{tpu_custom_call.1} parent=27 // pred_fallthru
          _
        // Predicated region
        $region49: #{tpu_custom_call.1} parent=27 // pred_check
          %p415 = pneg %p176
        $region50: #{tpu_custom_call.1} parent=27 // pred_check_branch
          %417 = sbr.rel (%p415) target = $region52
        $region51: #{tpu_custom_call.1} parent=27 // pred_region
          %s418 = sand.u32 %s26, 1
          %s419 = scalar_lea.sflag [#allocation5], %s418
          %s420 = sand.u32 %s166, 1
          %s421 = smul.addr %s420, 4
          %s422 = scalar_lea.vmem [#allocation6], %s421
          %s423 = smul.u32 4, %s26
          %s425 = ssub.s32 64, 64
          %426 = vsyncadd %s419, %s425
          %s427 = smul.addr %s423, 16
          %s428 = scalar_lea.hbm %s5, %s427
          %s429 = sshll.u32 %s422, 4
          %s430 = int_to_ptr.vmem [resolvable:$true] %s429
          %435 = dma.hbm_to_vmem [thread:$0]  %s428, 64, %s430, %s419, 16, 16, 1
        $region52: #{tpu_custom_call.1} parent=27 // pred_fallthru
          _
        // Predicated region
        $region53: #{tpu_custom_call.1} parent=27 // pred_check
          %p436 = pneg %p202
        $region54: #{tpu_custom_call.1} parent=27 // pred_check_branch
          %438 = sbr.rel (%p436) target = $region56
        $region55: #{tpu_custom_call.1} parent=27 // pred_region
          %s439 = sand.u32 %s26, 1
          %s440 = scalar_lea.sflag [#allocation8], %s439
          %s441 = sand.u32 %s192, 1
          %s442 = smul.addr %s441, 4
          %s443 = scalar_lea.vmem [#allocation7], %s442
          %s444 = smul.u32 4, %s26
          %s446 = ssub.s32 64, 64
          %447 = vsyncadd %s440, %s446
          %s448 = smul.addr %s444, 16
          %s449 = scalar_lea.hbm %s6, %s448
          %s450 = sshll.u32 %s443, 4
          %s451 = int_to_ptr.vmem [resolvable:$true] %s450
          %456 = dma.hbm_to_vmem [thread:$0]  %s449, 64, %s451, %s440, 16, 16, 1
        $region56: #{tpu_custom_call.1} parent=27 // pred_fallthru
          _
      $region28: #{tpu_custom_call.1} parent=5 // pred_fallthru
        _
      %p457 = scmp.le.s32.totalorder 1, %s26
      %p458 = scmp.lt.s32.totalorder %s26, 3
      %p459 = pnand %p457, %p458
      %p460 = pneg %p459
      // Predicated region
      $region57: #{tpu_custom_call.1} parent=5 // pred_check
        _
      $region58: #{tpu_custom_call.1} parent=5 // pred_check_branch
        %462 = sbr.rel (%p459) target = $region60
      $region59: #{tpu_custom_call.1} parent=5 // pred_region
        %s463 = ssub.s32 %s26, 1
        %s464 = sand.u32 %s39, 1
        %s465 = scalar_lea.sflag [#allocation3], %s464
        %s466 = sand.u32 %s39, 1
        %s467 = smul.addr %s466, 64
        %s468 = scalar_lea.vmem [#allocation2], %s467
        // Predicated region
        $region61: #{tpu_custom_call.1} parent=59 // pred_check
          %p469 = pneg %p52
        $region62: #{tpu_custom_call.1} parent=59 // pred_check_branch
          %471 = sbr.rel (%p469) target = $region64
        $region63: #{tpu_custom_call.1} parent=59 // pred_region
          %472 = dma.done %s465, 1024
        $region64: #{tpu_custom_call.1} parent=59 // pred_fallthru
          _
        %s473 = sand.u32 %s31, 1
        %s474 = scalar_lea.sflag [#allocation5], %s473
        %s475 = sand.u32 %s65, 1
        %s476 = smul.addr %s475, 64
        %s477 = scalar_lea.vmem [#allocation4], %s476
        // Predicated region
        $region65: #{tpu_custom_call.1} parent=59 // pred_check
          %p478 = pneg %p78
        $region66: #{tpu_custom_call.1} parent=59 // pred_check_branch
          %480 = sbr.rel (%p478) target = $region68
        $region67: #{tpu_custom_call.1} parent=59 // pred_region
          %481 = dma.done %s474, 1024
        $region68: #{tpu_custom_call.1} parent=59 // pred_fallthru
          _
        %s482 = sand.u32 %s31, 1
        %s483 = scalar_lea.sflag [#allocation5], %s482
        %s484 = sand.u32 %s169, 1
        %s485 = smul.addr %s484, 4
        %s486 = scalar_lea.vmem [#allocation6], %s485
        // Predicated region
        $region69: #{tpu_custom_call.1} parent=59 // pred_check
          %p487 = pneg %p182
        $region70: #{tpu_custom_call.1} parent=59 // pred_check_branch
          %489 = sbr.rel (%p487) target = $region72
        $region71: #{tpu_custom_call.1} parent=59 // pred_region
          %490 = dma.done %s483, 64
        $region72: #{tpu_custom_call.1} parent=59 // pred_fallthru
          _
        %s491 = sand.u32 %s31, 1
        %s492 = scalar_lea.sflag [#allocation8], %s491
        %s493 = sand.u32 %s195, 1
        %s494 = smul.addr %s493, 4
        %s495 = scalar_lea.vmem [#allocation7], %s494
        // Predicated region
        $region73: #{tpu_custom_call.1} parent=59 // pred_check
          %p496 = pneg %p208
        $region74: #{tpu_custom_call.1} parent=59 // pred_check_branch
          %498 = sbr.rel (%p496) target = $region76
        $region75: #{tpu_custom_call.1} parent=59 // pred_region
          %499 = dma.done %s492, 64
        $region76: #{tpu_custom_call.1} parent=59 // pred_fallthru
          _
        // Predicated region
        $region77: #{tpu_custom_call.1} parent=59 // pred_check
          %p500 = pneg %p229
        $region78: #{tpu_custom_call.1} parent=59 // pred_check_branch
          %502 = sbr.rel (%p500) target = $region80
        $region79: #{tpu_custom_call.1} parent=59 // pred_region
          %503 = dma.done [#allocation8], 512
        $region80: #{tpu_custom_call.1} parent=59 // pred_fallthru
          _
        // Predicated region
        $region81: #{tpu_custom_call.1} parent=59 // pred_check
          %p504 = pneg %p250
        $region82: #{tpu_custom_call.1} parent=59 // pred_check_branch
          %506 = sbr.rel (%p504) target = $region84
        $region83: #{tpu_custom_call.1} parent=59 // pred_region
          %507 = dma.done [#allocation11], 16
        $region84: #{tpu_custom_call.1} parent=59 // pred_fallthru
          _
        %s508 = sand.u32 %s39, 1
        %s509 = scalar_lea.sflag [#allocation3], %s508
        %s510 = sand.u32 %s39, 1
        %s511 = smul.addr %s510, 64
        %s512 = scalar_lea.vmem [#allocation2], %s511
        %p513 = pneg %p52
        %p514 = pneg %p49
        %s515 = sand.u32 %s31, 1
        %s516 = scalar_lea.sflag [#allocation5], %s515
        %s517 = sand.u32 %s65, 1
        %s518 = smul.addr %s517, 64
        %s519 = scalar_lea.vmem [#allocation4], %s518
        %p520 = pneg %p78
        %p521 = pneg %p75
        %s522 = smul.u32 4, %s31
        %p523 = scmp.lt.s32.totalorder %s522, 7
        %s524 = scalar_select %p523, %s522, 7
        %s525 = scalar_lea.vmem %s2, %s524
        %p526 = pneg %p104
        %p527 = pneg %p101
        %s528 = smul.u32 4, %s31
        %p529 = scmp.lt.s32.totalorder %s528, 7
        %s530 = scalar_select %p529, %s528, 7
        %s531 = smul.addr %s530, 2
        %s532 = smul.addr %s531, 4
        %s533 = scalar_lea.vmem %s3, %s532
        %p534 = pneg %p130
        %p535 = pneg %p127
        %s536 = smul.u32 4, %s31
        %p537 = scmp.lt.s32.totalorder %s536, 7
        %s538 = scalar_select %p537, %s536, 7
        %s539 = smul.addr %s538, 2
        %s540 = smul.addr %s539, 4
        %s541 = scalar_lea.vmem %s4, %s540
        %p542 = pneg %p156
        %p543 = pneg %p153
        %s544 = sand.u32 %s31, 1
        %s545 = scalar_lea.sflag [#allocation5], %s544
        %s546 = sand.u32 %s169, 1
        %s547 = smul.addr %s546, 4
        %s548 = scalar_lea.vmem [#allocation6], %s547
        %p549 = pneg %p182
        %p550 = pneg %p179
        %s551 = sand.u32 %s31, 1
        %s552 = scalar_lea.sflag [#allocation8], %s551
        %s553 = sand.u32 %s195, 1
        %s554 = smul.addr %s553, 4
        %s555 = scalar_lea.vmem [#allocation7], %s554
        %p556 = pneg %p208
        %p557 = pneg %p205
        %p558 = pneg %p229
        %p559 = pneg %p226
        %p560 = pneg %p250
        %p561 = pneg %p247
        %p562 = pneg %p271
        %p563 = pneg %p268
        %p564 = pneg %p297
        %p565 = pneg %p294
        %s566 = smul.u32 8, %s31
        %p567 = scmp.lt.s32.totalorder %s566, 15
        %s568 = scalar_select %p567, %s566, 15
        %s569 = smul.addr %s568, 8
        %s570 = scalar_lea.vmem %s10, %s569
        %s571 = smul.u32 4, %s31
        %s572 = smul.u32 4, %s31
        %s573 = smul.u32 4, %s31
        %p574 = scmp.lt.s32.totalorder %s573, 7
        %s575 = scalar_select %p574, %s573, 7
        %s576 = scalar_lea.vmem %s2, %s575
        %s577 = smul.u32 4, %s31
        %s578 = smul.u32 4, %s31
        %p579 = scmp.lt.s32.totalorder %s578, 7
        %s580 = scalar_select %p579, %s578, 7
        %s581 = smul.addr %s580, 2
        %s582 = smul.addr %s581, 4
        %s583 = scalar_lea.vmem %s3, %s582
        %s584 = smul.u32 4, %s31
        %s585 = smul.u32 4, %s31
        %p586 = scmp.lt.s32.totalorder %s585, 7
        %s587 = scalar_select %p586, %s585, 7
        %s588 = smul.addr %s587, 2
        %s589 = smul.addr %s588, 4
        %s590 = scalar_lea.vmem %s4, %s589
        %s591 = smul.u32 4, %s31
        %s592 = smul.u32 4, %s31
        %s593 = smul.u32 4, %s31
        %s594 = smul.u32 8, %s31
        %p595 = scmp.lt.s32.totalorder %s594, 15
        %s596 = scalar_select %p595, %s594, 15
        %s597 = smul.addr %s596, 8
        %s598 = scalar_lea.vmem %s10, %s597
        %s599 = smul.u32 8, %s31
        %v601 = vld [vmem:[%s468] sm:$0xf]
        %v602 = vld [vmem:[%s468 + $0x4] sm:$0xf]
        %v603 = vld [vmem:[%s468 + $0x8] sm:$0xf]
        %v604 = vld [vmem:[%s468 + $0xc] sm:$0xf]
        %v605 = vld [vmem:[%s468 + $0x10] sm:$0xf]
        %v606 = vld [vmem:[%s468 + $0x14] sm:$0xf]
        %v607 = vld [vmem:[%s468 + $0x18] sm:$0xf]
        %v608 = vld [vmem:[%s468 + $0x1c] sm:$0xf]
        %v609 = vld [vmem:[%s468 + $0x20] sm:$0xf]
        %v610 = vld [vmem:[%s468 + $0x24] sm:$0xf]
        %v611 = vld [vmem:[%s468 + $0x28] sm:$0xf]
        %v612 = vld [vmem:[%s468 + $0x2c] sm:$0xf]
        %v613 = vld [vmem:[%s468 + $0x30] sm:$0xf]
        %v614 = vld [vmem:[%s468 + $0x34] sm:$0xf]
        %v615 = vld [vmem:[%s468 + $0x38] sm:$0xf]
        %v616 = vld [vmem:[%s468 + $0x3c] sm:$0xf]
        %v617 = vld [vmem:[%s477] sm:$0xf]
        %v618 = vld [vmem:[%s477 + $0x4] sm:$0xf]
        %v619 = vld [vmem:[%s477 + $0x8] sm:$0xf]
        %v620 = vld [vmem:[%s477 + $0xc] sm:$0xf]
        %v621 = vld [vmem:[%s477 + $0x10] sm:$0xf]
        %v622 = vld [vmem:[%s477 + $0x14] sm:$0xf]
        %v623 = vld [vmem:[%s477 + $0x18] sm:$0xf]
        %v624 = vld [vmem:[%s477 + $0x1c] sm:$0xf]
        %v625 = vld [vmem:[%s477 + $0x20] sm:$0xf]
        %v626 = vld [vmem:[%s477 + $0x24] sm:$0xf]
        %v627 = vld [vmem:[%s477 + $0x28] sm:$0xf]
        %v628 = vld [vmem:[%s477 + $0x2c] sm:$0xf]
        %v629 = vld [vmem:[%s477 + $0x30] sm:$0xf]
        %v630 = vld [vmem:[%s477 + $0x34] sm:$0xf]
        %v631 = vld [vmem:[%s477 + $0x38] sm:$0xf]
        %v632 = vld [vmem:[%s477 + $0x3c] sm:$0xf]
        %v637 = vunpack.c.l.b16 %v601
        %v638 = vunpack.c.l.b16 %v602
        %v639 = vunpack.c.l.b16 %v603
        %v640 = vunpack.c.l.b16 %v604
        %v641 = vpack.c.b16 %v638, %v637
        %v642 = vpack.c.b16 %v640, %v639
        %v647 = vunpack.c.l.b16 %v617
        %v648 = vunpack.c.l.b16 %v618
        %v649 = vunpack.c.l.b16 %v619
        %v650 = vunpack.c.l.b16 %v620
        %v651 = vpack.c.b16 %v648, %v647
        %v652 = vpack.c.b16 %v650, %v649
        %vm655 = vcmask 261120
        %v657 = vsel %vm655, %v641, 0
        %v660 = vsel %vm655, %v642, 0
        %662 = vmatprep.subr.bf16.mxu0 0
        %663 = vmatpush1.bf16.msra.mxu0 0
        %664 = vmatprep.subr.bf16.mxu0 0
        %665 = vmatpush1.bf16.msra.mxu0 0
        %666 = vmatprep.subr.bf16.mxu0 0
        %667 = vmatpush1.bf16.msra.mxu0 0
        %668 = vmatprep.subr.bf16.mxu0 0
        %669 = vmatpush1.bf16.msra.mxu0 0
        %670 = vmatprep.subr.bf16.mxu0 0
        %671 = vmatpush1.bf16.msra.mxu0 0
        %672 = vmatprep.subr.bf16.mxu0 0
        %673 = vmatpush1.bf16.msra.mxu0 0
        %674 = vmatprep.subr.bf16.mxu0 0
        %675 = vmatpush1.bf16.msra.mxu0 %v652
        %676 = vmatprep.subr.bf16.mxu0 0
        %677 = vmatpush1.bf16.msra.mxu0 %v651
        %678 = vmatprep.subr.bf16.mxu0 0
        %679 = vmatpush2.bf16.msra.mxu0 0
        %680 = vmatprep.subr.bf16.mxu0 0
        %681 = vmatpush2.bf16.msra.mxu0 0
        %682 = vmatprep.subr.bf16.mxu0 0
        %683 = vmatpush2.bf16.msra.mxu0 0
        %684 = vmatprep.subr.bf16.mxu0 0
        %685 = vmatpush2.bf16.msra.mxu0 0
        %686 = vmatprep.subr.bf16.mxu0 0
        %687 = vmatpush2.bf16.msra.mxu0 0
        %688 = vmatprep.subr.bf16.mxu0 0
        %689 = vmatpush2.bf16.msra.mxu0 0
        %690 = vmatprep.subr.bf16.mxu0 0
        %691 = vmatpush2.bf16.msra.mxu0 0
        %692 = vmatprep.subr.bf16.mxu0 0
        %693 = vmatpush2.bf16.msra.mxu0 0
        %694 = vmatprep.mubr.bf16.mxu0 0
        %695 = vmatmul.mubr.bf16.gmra.mxu0 %v657
        %v696 = vpop.f32.mrf.mxu0
        %v697 = vadd.f32 0.0, %v696
        %v698 = vpop.f32.mrf.mxu0
        %v699 = vpop.f32.mrf.mxu0
        %v700 = vadd.f32 0.0, %v699
        %v701 = vpop.f32.mrf.mxu0
        %702 = vmatprep.mubr.bf16.mxu0 0
        %703 = vmatmul.mubr.bf16.gmra.mxu0 %v660
        %v704 = vpop.f32.mrf.mxu0
        %v705 = vadd.f32 0.0, %v704
        %v706 = vpop.f32.mrf.mxu0
        %v707 = vpop.f32.mrf.mxu0
        %v708 = vadd.f32 0.0, %v707
        %v709 = vpop.f32.mrf.mxu0
        %710 = vdwg.mxu0
        %v715 = vunpack.c.l.b16 %v605
        %v716 = vunpack.c.l.b16 %v606
        %v717 = vunpack.c.l.b16 %v607
        %v718 = vunpack.c.l.b16 %v608
        %v719 = vpack.c.b16 %v716, %v715
        %v720 = vpack.c.b16 %v718, %v717
        %v725 = vunpack.c.l.b16 %v621
        %v726 = vunpack.c.l.b16 %v622
        %v727 = vunpack.c.l.b16 %v623
        %v728 = vunpack.c.l.b16 %v624
        %v729 = vpack.c.b16 %v726, %v725
        %v730 = vpack.c.b16 %v728, %v727
        %v734 = vsel %vm655, %v719, 0
        %v737 = vsel %vm655, %v720, 0
        %739 = vmatprep.subr.bf16.mxu0 0
        %740 = vmatpush1.bf16.msra.mxu0 0
        %741 = vmatprep.subr.bf16.mxu0 0
        %742 = vmatpush1.bf16.msra.mxu0 0
        %743 = vmatprep.subr.bf16.mxu0 0
        %744 = vmatpush1.bf16.msra.mxu0 0
        %745 = vmatprep.subr.bf16.mxu0 0
        %746 = vmatpush1.bf16.msra.mxu0 0
        %747 = vmatprep.subr.bf16.mxu0 0
        %748 = vmatpush1.bf16.msra.mxu0 0
        %749 = vmatprep.subr.bf16.mxu0 0
        %750 = vmatpush1.bf16.msra.mxu0 0
        %751 = vmatprep.subr.bf16.mxu0 0
        %752 = vmatpush1.bf16.msra.mxu0 %v730
        %753 = vmatprep.subr.bf16.mxu0 0
        %754 = vmatpush1.bf16.msra.mxu0 %v729
        %755 = vmatprep.subr.bf16.mxu0 0
        %756 = vmatpush2.bf16.msra.mxu0 0
        %757 = vmatprep.subr.bf16.mxu0 0
        %758 = vmatpush2.bf16.msra.mxu0 0
        %759 = vmatprep.subr.bf16.mxu0 0
        %760 = vmatpush2.bf16.msra.mxu0 0
        %761 = vmatprep.subr.bf16.mxu0 0
        %762 = vmatpush2.bf16.msra.mxu0 0
        %763 = vmatprep.subr.bf16.mxu0 0
        %764 = vmatpush2.bf16.msra.mxu0 0
        %765 = vmatprep.subr.bf16.mxu0 0
        %766 = vmatpush2.bf16.msra.mxu0 0
        %767 = vmatprep.subr.bf16.mxu0 0
        %768 = vmatpush2.bf16.msra.mxu0 0
        %769 = vmatprep.subr.bf16.mxu0 0
        %770 = vmatpush2.bf16.msra.mxu0 0
        %771 = vmatprep.mubr.bf16.mxu0 0
        %772 = vmatmul.mubr.bf16.gmra.mxu0 %v734
        %v773 = vpop.f32.mrf.mxu0
        %v774 = vadd.f32 0.0, %v773
        %v775 = vpop.f32.mrf.mxu0
        %v776 = vpop.f32.mrf.mxu0
        %v777 = vadd.f32 0.0, %v776
        %v778 = vpop.f32.mrf.mxu0
        %779 = vmatprep.mubr.bf16.mxu0 0
        %780 = vmatmul.mubr.bf16.gmra.mxu0 %v737
        %v781 = vpop.f32.mrf.mxu0
        %v782 = vadd.f32 0.0, %v781
        %v783 = vpop.f32.mrf.mxu0
        %v784 = vpop.f32.mrf.mxu0
        %v785 = vadd.f32 0.0, %v784
        %v786 = vpop.f32.mrf.mxu0
        %787 = vdwg.mxu0
        %v792 = vunpack.c.l.b16 %v609
        %v793 = vunpack.c.l.b16 %v610
        %v794 = vunpack.c.l.b16 %v611
        %v795 = vunpack.c.l.b16 %v612
        %v796 = vpack.c.b16 %v793, %v792
        %v797 = vpack.c.b16 %v795, %v794
        %v802 = vunpack.c.l.b16 %v625
        %v803 = vunpack.c.l.b16 %v626
        %v804 = vunpack.c.l.b16 %v627
        %v805 = vunpack.c.l.b16 %v628
        %v806 = vpack.c.b16 %v803, %v802
        %v807 = vpack.c.b16 %v805, %v804
        %v811 = vsel %vm655, %v796, 0
        %v814 = vsel %vm655, %v797, 0
        %816 = vmatprep.subr.bf16.mxu0 0
        %817 = vmatpush1.bf16.msra.mxu0 0
        %818 = vmatprep.subr.bf16.mxu0 0
        %819 = vmatpush1.bf16.msra.mxu0 0
        %820 = vmatprep.subr.bf16.mxu0 0
        %821 = vmatpush1.bf16.msra.mxu0 0
        %822 = vmatprep.subr.bf16.mxu0 0
        %823 = vmatpush1.bf16.msra.mxu0 0
        %824 = vmatprep.subr.bf16.mxu0 0
        %825 = vmatpush1.bf16.msra.mxu0 0
        %826 = vmatprep.subr.bf16.mxu0 0
        %827 = vmatpush1.bf16.msra.mxu0 0
        %828 = vmatprep.subr.bf16.mxu0 0
        %829 = vmatpush1.bf16.msra.mxu0 %v807
        %830 = vmatprep.subr.bf16.mxu0 0
        %831 = vmatpush1.bf16.msra.mxu0 %v806
        %832 = vmatprep.subr.bf16.mxu0 0
        %833 = vmatpush2.bf16.msra.mxu0 0
        %834 = vmatprep.subr.bf16.mxu0 0
        %835 = vmatpush2.bf16.msra.mxu0 0
        %836 = vmatprep.subr.bf16.mxu0 0
        %837 = vmatpush2.bf16.msra.mxu0 0
        %838 = vmatprep.subr.bf16.mxu0 0
        %839 = vmatpush2.bf16.msra.mxu0 0
        %840 = vmatprep.subr.bf16.mxu0 0
        %841 = vmatpush2.bf16.msra.mxu0 0
        %842 = vmatprep.subr.bf16.mxu0 0
        %843 = vmatpush2.bf16.msra.mxu0 0
        %844 = vmatprep.subr.bf16.mxu0 0
        %845 = vmatpush2.bf16.msra.mxu0 0
        %846 = vmatprep.subr.bf16.mxu0 0
        %847 = vmatpush2.bf16.msra.mxu0 0
        %848 = vmatprep.mubr.bf16.mxu0 0
        %849 = vmatmul.mubr.bf16.gmra.mxu0 %v811
        %v850 = vpop.f32.mrf.mxu0
        %v851 = vadd.f32 0.0, %v850
        %v852 = vpop.f32.mrf.mxu0
        %v853 = vpop.f32.mrf.mxu0
        %v854 = vadd.f32 0.0, %v853
        %v855 = vpop.f32.mrf.mxu0
        %856 = vmatprep.mubr.bf16.mxu0 0
        %857 = vmatmul.mubr.bf16.gmra.mxu0 %v814
        %v858 = vpop.f32.mrf.mxu0
        %v859 = vadd.f32 0.0, %v858
        %v860 = vpop.f32.mrf.mxu0
        %v861 = vpop.f32.mrf.mxu0
        %v862 = vadd.f32 0.0, %v861
        %v863 = vpop.f32.mrf.mxu0
        %864 = vdwg.mxu0
        %v869 = vunpack.c.l.b16 %v613
        %v870 = vunpack.c.l.b16 %v614
        %v871 = vunpack.c.l.b16 %v615
        %v872 = vunpack.c.l.b16 %v616
        %v873 = vpack.c.b16 %v870, %v869
        %v874 = vpack.c.b16 %v872, %v871
        %v879 = vunpack.c.l.b16 %v629
        %v880 = vunpack.c.l.b16 %v630
        %v881 = vunpack.c.l.b16 %v631
        %v882 = vunpack.c.l.b16 %v632
        %v883 = vpack.c.b16 %v880, %v879
        %v884 = vpack.c.b16 %v882, %v881
        %v888 = vsel %vm655, %v873, 0
        %v891 = vsel %vm655, %v874, 0
        %893 = vmatprep.subr.bf16.mxu0 0
        %894 = vmatpush1.bf16.msra.mxu0 0
        %895 = vmatprep.subr.bf16.mxu0 0
        %896 = vmatpush1.bf16.msra.mxu0 0
        %897 = vmatprep.subr.bf16.mxu0 0
        %898 = vmatpush1.bf16.msra.mxu0 0
        %899 = vmatprep.subr.bf16.mxu0 0
        %900 = vmatpush1.bf16.msra.mxu0 0
        %901 = vmatprep.subr.bf16.mxu0 0
        %902 = vmatpush1.bf16.msra.mxu0 0
        %903 = vmatprep.subr.bf16.mxu0 0
        %904 = vmatpush1.bf16.msra.mxu0 0
        %905 = vmatprep.subr.bf16.mxu0 0
        %906 = vmatpush1.bf16.msra.mxu0 %v884
        %907 = vmatprep.subr.bf16.mxu0 0
        %908 = vmatpush1.bf16.msra.mxu0 %v883
        %909 = vmatprep.subr.bf16.mxu0 0
        %910 = vmatpush2.bf16.msra.mxu0 0
        %911 = vmatprep.subr.bf16.mxu0 0
        %912 = vmatpush2.bf16.msra.mxu0 0
        %913 = vmatprep.subr.bf16.mxu0 0
        %914 = vmatpush2.bf16.msra.mxu0 0
        %915 = vmatprep.subr.bf16.mxu0 0
        %916 = vmatpush2.bf16.msra.mxu0 0
        %917 = vmatprep.subr.bf16.mxu0 0
        %918 = vmatpush2.bf16.msra.mxu0 0
        %919 = vmatprep.subr.bf16.mxu0 0
        %920 = vmatpush2.bf16.msra.mxu0 0
        %921 = vmatprep.subr.bf16.mxu0 0
        %922 = vmatpush2.bf16.msra.mxu0 0
        %923 = vmatprep.subr.bf16.mxu0 0
        %924 = vmatpush2.bf16.msra.mxu0 0
        %925 = vmatprep.mubr.bf16.mxu0 0
        %926 = vmatmul.mubr.bf16.gmra.mxu0 %v888
        %v927 = vpop.f32.mrf.mxu0
        %v928 = vadd.f32 0.0, %v927
        %v929 = vpop.f32.mrf.mxu0
        %v930 = vpop.f32.mrf.mxu0
        %v931 = vadd.f32 0.0, %v930
        %v932 = vpop.f32.mrf.mxu0
        %933 = vmatprep.mubr.bf16.mxu0 0
        %934 = vmatmul.mubr.bf16.gmra.mxu0 %v891
        %v935 = vpop.f32.mrf.mxu0
        %v936 = vadd.f32 0.0, %v935
        %v937 = vpop.f32.mrf.mxu0
        %v938 = vpop.f32.mrf.mxu0
        %v939 = vadd.f32 0.0, %v938
        %v940 = vpop.f32.mrf.mxu0
        %941 = vdwg.mxu0
        %v942 = vpack.c.bf16 %v700, %v697
        %v943 = vpack.c.bf16 %v777, %v774
        %v944 = vpack.c.bf16 %v854, %v851
        %v945 = vpack.c.bf16 %v931, %v928
        %v946 = vpack.c.bf16 %v708, %v705
        %v947 = vpack.c.bf16 %v785, %v782
        %v948 = vpack.c.bf16 %v862, %v859
        %v949 = vpack.c.bf16 %v939, %v936
        %v950 = vld [vmem:[%s9] sm:$0xf]
        %v951 = vld [vmem:[%s9 + $0x4] sm:$0xf]
        %v952 = vld [vmem:[%s9 + $0x8] sm:$0xf]
        %v953 = vld [vmem:[%s9 + $0xc] sm:$0xf]
        %s954 = scalar_lea.vmem %s9, 16
        %v955 = vld [vmem:[%s954] sm:$0xf]
        %v956 = vld [vmem:[%s954 + $0x4] sm:$0xf]
        %v957 = vld [vmem:[%s954 + $0x8] sm:$0xf]
        %v958 = vld [vmem:[%s954 + $0xc] sm:$0xf]
        %v963 = vunpack.c.l.b16 %v955
        %v964 = vunpack.c.l.b16 %v956
        %v965 = vunpack.c.l.b16 %v957
        %v966 = vunpack.c.l.b16 %v958
        %v967 = vpack.c.b16 %v964, %v963
        %v968 = vpack.c.b16 %v966, %v965
        %v972 = vsel %vm655, %v946, 0
        %v975 = vsel %vm655, %v947, 0
        %v978 = vsel %vm655, %v948, 0
        %v981 = vsel %vm655, %v949, 0
        %983 = vmatprep.subr.bf16.mxu0 0
        %984 = vmatpush1.bf16.msra.mxu0 0
        %985 = vmatprep.subr.bf16.mxu0 0
        %986 = vmatpush1.bf16.msra.mxu0 0
        %987 = vmatprep.subr.bf16.mxu0 0
        %988 = vmatpush1.bf16.msra.mxu0 0
        %989 = vmatprep.subr.bf16.mxu0 0
        %990 = vmatpush1.bf16.msra.mxu0 0
        %991 = vmatprep.subr.bf16.mxu0 0
        %992 = vmatpush1.bf16.msra.mxu0 0
        %993 = vmatprep.subr.bf16.mxu0 0
        %994 = vmatpush1.bf16.msra.mxu0 0
        %995 = vmatprep.subr.bf16.mxu0 0
        %996 = vmatpush1.bf16.msra.mxu0 %v968
        %997 = vmatprep.subr.bf16.mxu0 0
        %998 = vmatpush1.bf16.msra.mxu0 %v967
        %999 = vmatprep.subr.bf16.mxu0 0
        %1000 = vmatpush2.bf16.msra.mxu0 0
        %1001 = vmatprep.subr.bf16.mxu0 0
        %1002 = vmatpush2.bf16.msra.mxu0 0
        %1003 = vmatprep.subr.bf16.mxu0 0
        %1004 = vmatpush2.bf16.msra.mxu0 0
        %1005 = vmatprep.subr.bf16.mxu0 0
        %1006 = vmatpush2.bf16.msra.mxu0 0
        %1007 = vmatprep.subr.bf16.mxu0 0
        %1008 = vmatpush2.bf16.msra.mxu0 0
        %1009 = vmatprep.subr.bf16.mxu0 0
        %1010 = vmatpush2.bf16.msra.mxu0 0
        %1011 = vmatprep.subr.bf16.mxu0 0
        %1012 = vmatpush2.bf16.msra.mxu0 0
        %1013 = vmatprep.subr.bf16.mxu0 0
        %1014 = vmatpush2.bf16.msra.mxu0 0
        %1015 = vmatprep.mubr.bf16.mxu0 0
        %1016 = vmatmul.mubr.bf16.gmra.mxu0 %v972
        %v1017 = vpop.f32.mrf.mxu0
        %v1018 = vadd.f32 0.0, %v1017
        %v1019 = vpop.f32.mrf.mxu0
        %v1020 = vpop.f32.mrf.mxu0
        %v1021 = vadd.f32 0.0, %v1020
        %v1022 = vpop.f32.mrf.mxu0
        %1023 = vmatprep.mubr.bf16.mxu0 0
        %1024 = vmatmul.mubr.bf16.gmra.mxu0 %v975
        %v1025 = vpop.f32.mrf.mxu0
        %v1026 = vadd.f32 0.0, %v1025
        %v1027 = vpop.f32.mrf.mxu0
        %v1028 = vpop.f32.mrf.mxu0
        %v1029 = vadd.f32 0.0, %v1028
        %v1030 = vpop.f32.mrf.mxu0
        %1031 = vmatprep.mubr.bf16.mxu0 0
        %1032 = vmatmul.mubr.bf16.gmra.mxu0 %v978
        %v1033 = vpop.f32.mrf.mxu0
        %v1034 = vadd.f32 0.0, %v1033
        %v1035 = vpop.f32.mrf.mxu0
        %v1036 = vpop.f32.mrf.mxu0
        %v1037 = vadd.f32 0.0, %v1036
        %v1038 = vpop.f32.mrf.mxu0
        %1039 = vmatprep.mubr.bf16.mxu0 0
        %1040 = vmatmul.mubr.bf16.gmra.mxu0 %v981
        %v1041 = vpop.f32.mrf.mxu0
        %v1042 = vadd.f32 0.0, %v1041
        %v1043 = vpop.f32.mrf.mxu0
        %v1044 = vpop.f32.mrf.mxu0
        %v1045 = vadd.f32 0.0, %v1044
        %v1046 = vpop.f32.mrf.mxu0
        %1047 = vdwg.mxu0
        %v1052 = vunpack.c.l.b16 %v950
        %v1053 = vunpack.c.l.b16 %v951
        %v1054 = vunpack.c.l.b16 %v952
        %v1055 = vunpack.c.l.b16 %v953
        %v1056 = vpack.c.b16 %v1053, %v1052
        %v1057 = vpack.c.b16 %v1055, %v1054
        %v1061 = vsel %vm655, %v942, 0
        %v1064 = vsel %vm655, %v943, 0
        %v1067 = vsel %vm655, %v944, 0
        %v1070 = vsel %vm655, %v945, 0
        %1072 = vmatprep.subr.bf16.mxu0 0
        %1073 = vmatpush1.bf16.msra.mxu0 0
        %1074 = vmatprep.subr.bf16.mxu0 0
        %1075 = vmatpush1.bf16.msra.mxu0 0
        %1076 = vmatprep.subr.bf16.mxu0 0
        %1077 = vmatpush1.bf16.msra.mxu0 0
        %1078 = vmatprep.subr.bf16.mxu0 0
        %1079 = vmatpush1.bf16.msra.mxu0 0
        %1080 = vmatprep.subr.bf16.mxu0 0
        %1081 = vmatpush1.bf16.msra.mxu0 0
        %1082 = vmatprep.subr.bf16.mxu0 0
        %1083 = vmatpush1.bf16.msra.mxu0 0
        %1084 = vmatprep.subr.bf16.mxu0 0
        %1085 = vmatpush1.bf16.msra.mxu0 %v1057
        %1086 = vmatprep.subr.bf16.mxu0 0
        %1087 = vmatpush1.bf16.msra.mxu0 %v1056
        %1088 = vmatprep.subr.bf16.mxu0 0
        %1089 = vmatpush2.bf16.msra.mxu0 0
        %1090 = vmatprep.subr.bf16.mxu0 0
        %1091 = vmatpush2.bf16.msra.mxu0 0
        %1092 = vmatprep.subr.bf16.mxu0 0
        %1093 = vmatpush2.bf16.msra.mxu0 0
        %1094 = vmatprep.subr.bf16.mxu0 0
        %1095 = vmatpush2.bf16.msra.mxu0 0
        %1096 = vmatprep.subr.bf16.mxu0 0
        %1097 = vmatpush2.bf16.msra.mxu0 0
        %1098 = vmatprep.subr.bf16.mxu0 0
        %1099 = vmatpush2.bf16.msra.mxu0 0
        %1100 = vmatprep.subr.bf16.mxu0 0
        %1101 = vmatpush2.bf16.msra.mxu0 0
        %1102 = vmatprep.subr.bf16.mxu0 0
        %1103 = vmatpush2.bf16.msra.mxu0 0
        %1104 = vmatprep.mubr.bf16.mxu0 0
        %1105 = vmatmul.mubr.bf16.gmra.mxu0 %v1061
        %v1106 = vpop.f32.mrf.mxu0
        %v1107 = vadd.f32 %v1018, %v1106
        %v1108 = vpop.f32.mrf.mxu0
        %v1109 = vpop.f32.mrf.mxu0
        %v1110 = vadd.f32 %v1021, %v1109
        %v1111 = vpop.f32.mrf.mxu0
        %1112 = vmatprep.mubr.bf16.mxu0 0
        %1113 = vmatmul.mubr.bf16.gmra.mxu0 %v1064
        %v1114 = vpop.f32.mrf.mxu0
        %v1115 = vadd.f32 %v1026, %v1114
        %v1116 = vpop.f32.mrf.mxu0
        %v1117 = vpop.f32.mrf.mxu0
        %v1118 = vadd.f32 %v1029, %v1117
        %v1119 = vpop.f32.mrf.mxu0
        %1120 = vmatprep.mubr.bf16.mxu0 0
        %1121 = vmatmul.mubr.bf16.gmra.mxu0 %v1067
        %v1122 = vpop.f32.mrf.mxu0
        %v1123 = vadd.f32 %v1034, %v1122
        %v1124 = vpop.f32.mrf.mxu0
        %v1125 = vpop.f32.mrf.mxu0
        %v1126 = vadd.f32 %v1037, %v1125
        %v1127 = vpop.f32.mrf.mxu0
        %1128 = vmatprep.mubr.bf16.mxu0 0
        %1129 = vmatmul.mubr.bf16.gmra.mxu0 %v1070
        %v1130 = vpop.f32.mrf.mxu0
        %v1131 = vadd.f32 %v1042, %v1130
        %v1132 = vpop.f32.mrf.mxu0
        %v1133 = vpop.f32.mrf.mxu0
        %v1134 = vadd.f32 %v1045, %v1133
        %v1135 = vpop.f32.mrf.mxu0
        %1136 = vdwg.mxu0
        %v1137 = vld [vmem:[%s576] sm:$0x1]
        %v1138 = vld [vmem:[%s576 + $0x1] sm:$0x1]
        %v1139 = vld [vmem:[%s576 + $0x2] sm:$0x1]
        %v1140 = vld [vmem:[%s576 + $0x3] sm:$0x1]
        %v1141 = vld [vmem:[#allocation9] sm:$0xf]
        %v1142 = vld [vmem:[#allocation9 + $0x4] sm:$0xf]
        %v1143 = vld [vmem:[#allocation9 + $0x8] sm:$0xf]
        %v1144 = vld [vmem:[#allocation9 + $0xc] sm:$0xf]
        %v1145 = vld [vmem:[#allocation9 + $0x10] sm:$0xf]
        %v1146 = vld [vmem:[#allocation9 + $0x14] sm:$0xf]
        %v1147 = vld [vmem:[#allocation9 + $0x18] sm:$0xf]
        %v1148 = vld [vmem:[#allocation9 + $0x1c] sm:$0xf]
        %v1149 = vld [vmem:[#allocation10] sm:$0x1]
        %v1151 = vlaneseq
        %v1152 = vshrl.u32 %v1151, 7
        %v1153 = vsub.s32 0, %v1152
        %v1154 = vrot.slane %v1149, %v1153
        %v1161 = vunpack.c.l.s4 1966171168
        %v1162 = vunpack.c.0.s8 %v1161
        %v1163 = vlaneseq
        %v1164 = vshrl.u32 %v1163, 7
        %v1165 = vsub.s32 %v1162, %v1164
        %v1166 = vrot.slane %v1137, %v1165
        %v1168 = vunpack.c.l.s4 1966171168
        %v1169 = vunpack.c.0.s8 %v1168
        %v1170 = vlaneseq
        %v1171 = vshrl.u32 %v1170, 7
        %v1172 = vsub.s32 %v1169, %v1171
        %v1173 = vrot.slane %v1166, %v1172
        %v1175 = vunpack.c.l.s4 1966171168
        %v1176 = vunpack.c.0.s8 %v1175
        %v1177 = vlaneseq
        %v1178 = vshrl.u32 %v1177, 7
        %v1179 = vsub.s32 %v1176, %v1178
        %v1180 = vrot.slane %v1138, %v1179
        %v1182 = vunpack.c.l.s4 1966171168
        %v1183 = vunpack.c.0.s8 %v1182
        %v1184 = vlaneseq
        %v1185 = vshrl.u32 %v1184, 7
        %v1186 = vsub.s32 %v1183, %v1185
        %v1187 = vrot.slane %v1180, %v1186
        %v1189 = vunpack.c.l.s4 1966171168
        %v1190 = vunpack.c.0.s8 %v1189
        %v1191 = vlaneseq
        %v1192 = vshrl.u32 %v1191, 7
        %v1193 = vsub.s32 %v1190, %v1192
        %v1194 = vrot.slane %v1139, %v1193
        %v1196 = vunpack.c.l.s4 1966171168
        %v1197 = vunpack.c.0.s8 %v1196
        %v1198 = vlaneseq
        %v1199 = vshrl.u32 %v1198, 7
        %v1200 = vsub.s32 %v1197, %v1199
        %v1201 = vrot.slane %v1194, %v1200
        %v1203 = vunpack.c.l.s4 1966171168
        %v1204 = vunpack.c.0.s8 %v1203
        %v1205 = vlaneseq
        %v1206 = vshrl.u32 %v1205, 7
        %v1207 = vsub.s32 %v1204, %v1206
        %v1208 = vrot.slane %v1140, %v1207
        %v1210 = vunpack.c.l.s4 1966171168
        %v1211 = vunpack.c.0.s8 %v1210
        %v1212 = vlaneseq
        %v1213 = vshrl.u32 %v1212, 7
        %v1214 = vsub.s32 %v1211, %v1213
        %v1215 = vrot.slane %v1208, %v1214
        %v1216 = vunpack.c.l.b16 %v1173
        %v1217 = vunpack.c.l.b16 %v1187
        %v1218 = vunpack.c.l.b16 %v1201
        %v1219 = vunpack.c.l.b16 %v1215
        %v1220 = vrot.slane %v1217, 7
        %vm1221 = vcmask 1041409
        %v1222 = vsel %vm1221, %v1220, %v1216
        %v1223 = vrot.slane %v1218, 6
        %vm1224 = vcmask 1042434
        %v1225 = vsel %vm1224, %v1223, %v1222
        %v1226 = vrot.slane %v1219, 5
        %vm1227 = vcmask 1043459
        %v1228 = vsel %vm1227, %v1226, %v1225
        %v1229 = vpack.c.b16 %v1228, %v1228
        %v1238 = vunpack.c.l.b16 %v1141
        %v1239 = vunpack.c.l.b16 %v1142
        %v1240 = vunpack.c.l.b16 %v1143
        %v1241 = vunpack.c.l.b16 %v1144
        %v1242 = vunpack.c.l.b16 %v1145
        %v1243 = vunpack.c.l.b16 %v1146
        %v1244 = vunpack.c.l.b16 %v1147
        %v1245 = vunpack.c.l.b16 %v1148
        %v1246 = vpack.c.b16 %v1239, %v1238
        %v1247 = vpack.c.b16 %v1241, %v1240
        %v1248 = vpack.c.b16 %v1243, %v1242
        %v1249 = vpack.c.b16 %v1245, %v1244
        %vm1254 = vcmask 523264
        %v1256 = vsel %vm1254, %v1229, 0
        %1258 = vmatprep.subr.bf16.mxu0 0
        %1259 = vmatpush1.bf16.msra.mxu0 0
        %1260 = vmatprep.subr.bf16.mxu0 0
        %1261 = vmatpush1.bf16.msra.mxu0 0
        %1262 = vmatprep.subr.bf16.mxu0 0
        %1263 = vmatpush1.bf16.msra.mxu0 0
        %1264 = vmatprep.subr.bf16.mxu0 0
        %1265 = vmatpush1.bf16.msra.mxu0 0
        %1266 = vmatprep.subr.bf16.mxu0 0
        %1267 = vmatpush1.bf16.msra.mxu0 %v1249
        %1268 = vmatprep.subr.bf16.mxu0 0
        %1269 = vmatpush1.bf16.msra.mxu0 %v1248
        %1270 = vmatprep.subr.bf16.mxu0 0
        %1271 = vmatpush1.bf16.msra.mxu0 %v1247
        %1272 = vmatprep.subr.bf16.mxu0 0
        %1273 = vmatpush1.bf16.msra.mxu0 %v1246
        %1274 = vmatprep.subr.bf16.mxu0 0
        %1275 = vmatpush2.bf16.msra.mxu0 0
        %1276 = vmatprep.subr.bf16.mxu0 0
        %1277 = vmatpush2.bf16.msra.mxu0 0
        %1278 = vmatprep.subr.bf16.mxu0 0
        %1279 = vmatpush2.bf16.msra.mxu0 0
        %1280 = vmatprep.subr.bf16.mxu0 0
        %1281 = vmatpush2.bf16.msra.mxu0 0
        %1282 = vmatprep.subr.bf16.mxu0 0
        %1283 = vmatpush2.bf16.msra.mxu0 0
        %1284 = vmatprep.subr.bf16.mxu0 0
        %1285 = vmatpush2.bf16.msra.mxu0 0
        %1286 = vmatprep.subr.bf16.mxu0 0
        %1287 = vmatpush2.bf16.msra.mxu0 0
        %1288 = vmatprep.subr.bf16.mxu0 0
        %1289 = vmatpush2.bf16.msra.mxu0 0
        %1290 = vmatprep.mubr.bf16.mxu0 0
        %1291 = vmatmul.mubr.bf16.gmra.mxu0 %v1256
        %v1292 = vpop.f32.mrf.mxu0
        %v1293 = vadd.f32 %v1154, %v1292
        %v1294 = vpop.f32.mrf.mxu0
        %v1295 = vpop.f32.mrf.mxu0
        %v1296 = vpop.f32.mrf.mxu0
        %1297 = vdwg.mxu0
        %v1298 = vlaneseq
        %v1299 = vshrl.u32 %v1298, 7
        %v1300 = vadd.s32 %v1299, 8
        %vm1301 = vcmp.eq.s32.totalorder %v1299, 0
        %vm1302 = vcmp.eq.s32.totalorder %v1300, 0
        %v1303 = vsel %vm1301, 1, 0
        %v1304 = vsel %vm1302, 1, 0
        %v1305 = vcvt.s32.f32 %v1303
        %v1306 = vcvt.s32.f32 %v1304
        %v1309 = vunpack.c.l.s4 1966171168
        %v1310 = vunpack.c.0.s8 %v1309
        %v1311 = vlaneseq
        %v1312 = vshrl.u32 %v1311, 7
        %v1313 = vsub.s32 %v1310, %v1312
        %v1314 = vrot.slane %v1293, %v1313
        %v1315 = vcombine.high %v1314, %v1314
        %v1317 = vunpack.c.l.s4 1966171168
        %v1318 = vunpack.c.0.s8 %v1317
        %v1319 = vlaneseq
        %v1320 = vshrl.u32 %v1319, 7
        %v1321 = vsub.s32 %v1318, %v1320
        %v1322 = vrot.slane %v1314, %v1321
        %v1324 = vunpack.c.l.s4 1966171168
        %v1325 = vunpack.c.0.s8 %v1324
        %v1326 = vlaneseq
        %v1327 = vshrl.u32 %v1326, 7
        %v1328 = vsub.s32 %v1325, %v1327
        %v1329 = vrot.slane %v1315, %v1328
        %v1330 = vcombine.high %v1322, %v1322
        %v1331 = vcombine.high %v1329, %v1329
        %v1332 = vlaneseq
        %v1333 = vshrl.u32 %v1332, 7
        %v1334 = vsub.s32 0, %v1333
        %v1335 = vrot.slane %v1322, %v1334
        %v1336 = vlaneseq
        %v1337 = vshrl.u32 %v1336, 7
        %v1338 = vsub.s32 0, %v1337
        %v1339 = vrot.slane %v1329, %v1338
        %v1340 = vlaneseq
        %v1341 = vshrl.u32 %v1340, 7
        %v1342 = vsub.s32 0, %v1341
        %v1343 = vrot.slane %v1330, %v1342
        %v1344 = vlaneseq
        %v1345 = vshrl.u32 %v1344, 7
        %v1346 = vsub.s32 0, %v1345
        %v1347 = vrot.slane %v1331, %v1346
        %v1352 = vmul.f32 %v1335, %v1305
        %v1353 = vmul.f32 %v1335, %v1306
        %v1354 = vmul.f32 %v1339, %v1305
        %v1355 = vmul.f32 %v1339, %v1306
        %v1356 = vmul.f32 %v1343, %v1305
        %v1357 = vmul.f32 %v1343, %v1306
        %v1358 = vmul.f32 %v1347, %v1305
        %v1359 = vmul.f32 %v1347, %v1306
        %v1360 = vadd.f32 %v1107, %v1352
        %v1361 = vadd.f32 %v1110, %v1353
        %v1362 = vadd.f32 %v1115, %v1354
        %v1363 = vadd.f32 %v1118, %v1355
        %v1364 = vadd.f32 %v1123, %v1356
        %v1365 = vadd.f32 %v1126, %v1357
        %v1366 = vadd.f32 %v1131, %v1358
        %v1367 = vadd.f32 %v1134, %v1359
        %v1368 = vld [vmem:[%s486] sm:$0x1]
        %v1369 = vld [vmem:[%s486 + $0x1] sm:$0x1]
        %v1370 = vld [vmem:[%s486 + $0x2] sm:$0x1]
        %v1371 = vld [vmem:[%s486 + $0x3] sm:$0x1]
        %v1376 = vlaneseq
        %v1377 = vshrl.u32 %v1376, 7
        %v1378 = vsub.s32 0, %v1377
        %v1379 = vrot.slane %v1368, %v1378
        %v1380 = vlaneseq
        %v1381 = vshrl.u32 %v1380, 7
        %v1382 = vsub.s32 0, %v1381
        %v1383 = vrot.slane %v1369, %v1382
        %v1384 = vlaneseq
        %v1385 = vshrl.u32 %v1384, 7
        %v1386 = vsub.s32 0, %v1385
        %v1387 = vrot.slane %v1370, %v1386
        %v1388 = vlaneseq
        %v1389 = vshrl.u32 %v1388, 7
        %v1390 = vsub.s32 0, %v1389
        %v1391 = vrot.slane %v1371, %v1390
        %v1396 = vmul.f32 %v1360, %v1379
        %v1397 = vmul.f32 %v1361, %v1379
        %v1398 = vmul.f32 %v1362, %v1383
        %v1399 = vmul.f32 %v1363, %v1383
        %v1400 = vmul.f32 %v1364, %v1387
        %v1401 = vmul.f32 %v1365, %v1387
        %v1402 = vmul.f32 %v1366, %v1391
        %v1403 = vmul.f32 %v1367, %v1391
        %v1404 = vld [vmem:[%s495] sm:$0x1]
        %v1405 = vld [vmem:[%s495 + $0x1] sm:$0x1]
        %v1406 = vld [vmem:[%s495 + $0x2] sm:$0x1]
        %v1407 = vld [vmem:[%s495 + $0x3] sm:$0x1]
        %v1412 = vlaneseq
        %v1413 = vshrl.u32 %v1412, 7
        %v1414 = vsub.s32 0, %v1413
        %v1415 = vrot.slane %v1404, %v1414
        %v1416 = vlaneseq
        %v1417 = vshrl.u32 %v1416, 7
        %v1418 = vsub.s32 0, %v1417
        %v1419 = vrot.slane %v1405, %v1418
        %v1420 = vlaneseq
        %v1421 = vshrl.u32 %v1420, 7
        %v1422 = vsub.s32 0, %v1421
        %v1423 = vrot.slane %v1406, %v1422
        %v1424 = vlaneseq
        %v1425 = vshrl.u32 %v1424, 7
        %v1426 = vsub.s32 0, %v1425
        %v1427 = vrot.slane %v1407, %v1426
        %v1432 = vmul.f32 %v1360, %v1415
        %v1433 = vmul.f32 %v1361, %v1415
        %v1434 = vmul.f32 %v1362, %v1419
        %v1435 = vmul.f32 %v1363, %v1419
        %v1436 = vmul.f32 %v1364, %v1423
        %v1437 = vmul.f32 %v1365, %v1423
        %v1438 = vmul.f32 %v1366, %v1427
        %v1439 = vmul.f32 %v1367, %v1427
        %v1440 = vsel %vm655, %v1396, 0.0
        %1441 = vadd.xlane.f32.xlu0 %v1440
        %v1442 = vpop.xlane.xlu0 %1441
        %v1443 = vsel %vm655, %v1397, 0.0
        %1444 = vadd.xlane.f32.xlu0 %v1443
        %v1445 = vpop.xlane.xlu0 %1444
        %v1446 = vsel %vm655, %v1398, 0.0
        %1447 = vadd.xlane.f32.xlu0 %v1446
        %v1448 = vpop.xlane.xlu0 %1447
        %v1449 = vsel %vm655, %v1399, 0.0
        %1450 = vadd.xlane.f32.xlu0 %v1449
        %v1451 = vpop.xlane.xlu0 %1450
        %v1452 = vsel %vm655, %v1400, 0.0
        %1453 = vadd.xlane.f32.xlu0 %v1452
        %v1454 = vpop.xlane.xlu0 %1453
        %v1455 = vsel %vm655, %v1401, 0.0
        %1456 = vadd.xlane.f32.xlu0 %v1455
        %v1457 = vpop.xlane.xlu0 %1456
        %v1458 = vsel %vm655, %v1402, 0.0
        %1459 = vadd.xlane.f32.xlu0 %v1458
        %v1460 = vpop.xlane.xlu0 %1459
        %v1461 = vsel %vm655, %v1403, 0.0
        %1462 = vadd.xlane.f32.xlu0 %v1461
        %v1463 = vpop.xlane.xlu0 %1462
        %1472 = vrot.lane.b32.xlu0 %v1396, 96
        %v1473 = vpop.permute.xlu0 %1472
        %1474 = vrot.lane.b32.xlu0 %v1397, 96
        %v1475 = vpop.permute.xlu0 %1474
        %1476 = vrot.lane.b32.xlu0 %v1398, 96
        %v1477 = vpop.permute.xlu0 %1476
        %1478 = vrot.lane.b32.xlu0 %v1399, 96
        %v1479 = vpop.permute.xlu0 %1478
        %1480 = vrot.lane.b32.xlu0 %v1400, 96
        %v1481 = vpop.permute.xlu0 %1480
        %1482 = vrot.lane.b32.xlu0 %v1401, 96
        %v1483 = vpop.permute.xlu0 %1482
        %1484 = vrot.lane.b32.xlu0 %v1402, 96
        %v1485 = vpop.permute.xlu0 %1484
        %1486 = vrot.lane.b32.xlu0 %v1403, 96
        %v1487 = vpop.permute.xlu0 %1486
        %v1496 = vsel %vm655, %v1473, 0.0
        %1497 = vadd.xlane.f32.xlu0 %v1496
        %v1498 = vpop.xlane.xlu0 %1497
        %v1499 = vsel %vm655, %v1475, 0.0
        %1500 = vadd.xlane.f32.xlu0 %v1499
        %v1501 = vpop.xlane.xlu0 %1500
        %v1502 = vsel %vm655, %v1477, 0.0
        %1503 = vadd.xlane.f32.xlu0 %v1502
        %v1504 = vpop.xlane.xlu0 %1503
        %v1505 = vsel %vm655, %v1479, 0.0
        %1506 = vadd.xlane.f32.xlu0 %v1505
        %v1507 = vpop.xlane.xlu0 %1506
        %v1508 = vsel %vm655, %v1481, 0.0
        %1509 = vadd.xlane.f32.xlu0 %v1508
        %v1510 = vpop.xlane.xlu0 %1509
        %v1511 = vsel %vm655, %v1483, 0.0
        %1512 = vadd.xlane.f32.xlu0 %v1511
        %v1513 = vpop.xlane.xlu0 %1512
        %v1514 = vsel %vm655, %v1485, 0.0
        %1515 = vadd.xlane.f32.xlu0 %v1514
        %v1516 = vpop.xlane.xlu0 %1515
        %v1517 = vsel %vm655, %v1487, 0.0
        %1518 = vadd.xlane.f32.xlu0 %v1517
        %v1519 = vpop.xlane.xlu0 %1518
        %1520 = vrot.lane.b32.xlu0 %v1396, 64
        %v1521 = vpop.permute.xlu0 %1520
        %1522 = vrot.lane.b32.xlu0 %v1397, 64
        %v1523 = vpop.permute.xlu0 %1522
        %1524 = vrot.lane.b32.xlu0 %v1398, 64
        %v1525 = vpop.permute.xlu0 %1524
        %1526 = vrot.lane.b32.xlu0 %v1399, 64
        %v1527 = vpop.permute.xlu0 %1526
        %1528 = vrot.lane.b32.xlu0 %v1400, 64
        %v1529 = vpop.permute.xlu0 %1528
        %1530 = vrot.lane.b32.xlu0 %v1401, 64
        %v1531 = vpop.permute.xlu0 %1530
        %1532 = vrot.lane.b32.xlu0 %v1402, 64
        %v1533 = vpop.permute.xlu0 %1532
        %1534 = vrot.lane.b32.xlu0 %v1403, 64
        %v1535 = vpop.permute.xlu0 %1534
        %v1544 = vsel %vm655, %v1521, 0.0
        %1545 = vadd.xlane.f32.xlu0 %v1544
        %v1546 = vpop.xlane.xlu0 %1545
        %v1547 = vsel %vm655, %v1523, 0.0
        %1548 = vadd.xlane.f32.xlu0 %v1547
        %v1549 = vpop.xlane.xlu0 %1548
        %v1550 = vsel %vm655, %v1525, 0.0
        %1551 = vadd.xlane.f32.xlu0 %v1550
        %v1552 = vpop.xlane.xlu0 %1551
        %v1553 = vsel %vm655, %v1527, 0.0
        %1554 = vadd.xlane.f32.xlu0 %v1553
        %v1555 = vpop.xlane.xlu0 %1554
        %v1556 = vsel %vm655, %v1529, 0.0
        %1557 = vadd.xlane.f32.xlu0 %v1556
        %v1558 = vpop.xlane.xlu0 %1557
        %v1559 = vsel %vm655, %v1531, 0.0
        %1560 = vadd.xlane.f32.xlu0 %v1559
        %v1561 = vpop.xlane.xlu0 %1560
        %v1562 = vsel %vm655, %v1533, 0.0
        %1563 = vadd.xlane.f32.xlu0 %v1562
        %v1564 = vpop.xlane.xlu0 %1563
        %v1565 = vsel %vm655, %v1535, 0.0
        %1566 = vadd.xlane.f32.xlu0 %v1565
        %v1567 = vpop.xlane.xlu0 %1566
        %1568 = vrot.lane.b32.xlu0 %v1396, 32
        %v1569 = vpop.permute.xlu0 %1568
        %1570 = vrot.lane.b32.xlu0 %v1397, 32
        %v1571 = vpop.permute.xlu0 %1570
        %1572 = vrot.lane.b32.xlu0 %v1398, 32
        %v1573 = vpop.permute.xlu0 %1572
        %1574 = vrot.lane.b32.xlu0 %v1399, 32
        %v1575 = vpop.permute.xlu0 %1574
        %1576 = vrot.lane.b32.xlu0 %v1400, 32
        %v1577 = vpop.permute.xlu0 %1576
        %1578 = vrot.lane.b32.xlu0 %v1401, 32
        %v1579 = vpop.permute.xlu0 %1578
        %1580 = vrot.lane.b32.xlu0 %v1402, 32
        %v1581 = vpop.permute.xlu0 %1580
        %1582 = vrot.lane.b32.xlu0 %v1403, 32
        %v1583 = vpop.permute.xlu0 %1582
        %v1592 = vsel %vm655, %v1569, 0.0
        %1593 = vadd.xlane.f32.xlu0 %v1592
        %v1594 = vpop.xlane.xlu0 %1593
        %v1595 = vsel %vm655, %v1571, 0.0
        %1596 = vadd.xlane.f32.xlu0 %v1595
        %v1597 = vpop.xlane.xlu0 %1596
        %v1598 = vsel %vm655, %v1573, 0.0
        %1599 = vadd.xlane.f32.xlu0 %v1598
        %v1600 = vpop.xlane.xlu0 %1599
        %v1601 = vsel %vm655, %v1575, 0.0
        %1602 = vadd.xlane.f32.xlu0 %v1601
        %v1603 = vpop.xlane.xlu0 %1602
        %v1604 = vsel %vm655, %v1577, 0.0
        %1605 = vadd.xlane.f32.xlu0 %v1604
        %v1606 = vpop.xlane.xlu0 %1605
        %v1607 = vsel %vm655, %v1579, 0.0
        %1608 = vadd.xlane.f32.xlu0 %v1607
        %v1609 = vpop.xlane.xlu0 %1608
        %v1610 = vsel %vm655, %v1581, 0.0
        %1611 = vadd.xlane.f32.xlu0 %v1610
        %v1612 = vpop.xlane.xlu0 %1611
        %v1613 = vsel %vm655, %v1583, 0.0
        %1614 = vadd.xlane.f32.xlu0 %v1613
        %v1615 = vpop.xlane.xlu0 %1614
        %v1616 = vsel %vm655, %v1432, 0.0
        %1617 = vadd.xlane.f32.xlu0 %v1616
        %v1618 = vpop.xlane.xlu0 %1617
        %v1619 = vsel %vm655, %v1433, 0.0
        %1620 = vadd.xlane.f32.xlu0 %v1619
        %v1621 = vpop.xlane.xlu0 %1620
        %v1622 = vsel %vm655, %v1434, 0.0
        %1623 = vadd.xlane.f32.xlu0 %v1622
        %v1624 = vpop.xlane.xlu0 %1623
        %v1625 = vsel %vm655, %v1435, 0.0
        %1626 = vadd.xlane.f32.xlu0 %v1625
        %v1627 = vpop.xlane.xlu0 %1626
        %v1628 = vsel %vm655, %v1436, 0.0
        %1629 = vadd.xlane.f32.xlu0 %v1628
        %v1630 = vpop.xlane.xlu0 %1629
        %v1631 = vsel %vm655, %v1437, 0.0
        %1632 = vadd.xlane.f32.xlu0 %v1631
        %v1633 = vpop.xlane.xlu0 %1632
        %v1634 = vsel %vm655, %v1438, 0.0
        %1635 = vadd.xlane.f32.xlu0 %v1634
        %v1636 = vpop.xlane.xlu0 %1635
        %v1637 = vsel %vm655, %v1439, 0.0
        %1638 = vadd.xlane.f32.xlu0 %v1637
        %v1639 = vpop.xlane.xlu0 %1638
        %1648 = vrot.lane.b32.xlu0 %v1432, 96
        %v1649 = vpop.permute.xlu0 %1648
        %1650 = vrot.lane.b32.xlu0 %v1433, 96
        %v1651 = vpop.permute.xlu0 %1650
        %1652 = vrot.lane.b32.xlu0 %v1434, 96
        %v1653 = vpop.permute.xlu0 %1652
        %1654 = vrot.lane.b32.xlu0 %v1435, 96
        %v1655 = vpop.permute.xlu0 %1654
        %1656 = vrot.lane.b32.xlu0 %v1436, 96
        %v1657 = vpop.permute.xlu0 %1656
        %1658 = vrot.lane.b32.xlu0 %v1437, 96
        %v1659 = vpop.permute.xlu0 %1658
        %1660 = vrot.lane.b32.xlu0 %v1438, 96
        %v1661 = vpop.permute.xlu0 %1660
        %1662 = vrot.lane.b32.xlu0 %v1439, 96
        %v1663 = vpop.permute.xlu0 %1662
        %v1672 = vsel %vm655, %v1649, 0.0
        %1673 = vadd.xlane.f32.xlu0 %v1672
        %v1674 = vpop.xlane.xlu0 %1673
        %v1675 = vsel %vm655, %v1651, 0.0
        %1676 = vadd.xlane.f32.xlu0 %v1675
        %v1677 = vpop.xlane.xlu0 %1676
        %v1678 = vsel %vm655, %v1653, 0.0
        %1679 = vadd.xlane.f32.xlu0 %v1678
        %v1680 = vpop.xlane.xlu0 %1679
        %v1681 = vsel %vm655, %v1655, 0.0
        %1682 = vadd.xlane.f32.xlu0 %v1681
        %v1683 = vpop.xlane.xlu0 %1682
        %v1684 = vsel %vm655, %v1657, 0.0
        %1685 = vadd.xlane.f32.xlu0 %v1684
        %v1686 = vpop.xlane.xlu0 %1685
        %v1687 = vsel %vm655, %v1659, 0.0
        %1688 = vadd.xlane.f32.xlu0 %v1687
        %v1689 = vpop.xlane.xlu0 %1688
        %v1690 = vsel %vm655, %v1661, 0.0
        %1691 = vadd.xlane.f32.xlu0 %v1690
        %v1692 = vpop.xlane.xlu0 %1691
        %v1693 = vsel %vm655, %v1663, 0.0
        %1694 = vadd.xlane.f32.xlu0 %v1693
        %v1695 = vpop.xlane.xlu0 %1694
        %1696 = vrot.lane.b32.xlu0 %v1432, 64
        %v1697 = vpop.permute.xlu0 %1696
        %1698 = vrot.lane.b32.xlu0 %v1433, 64
        %v1699 = vpop.permute.xlu0 %1698
        %1700 = vrot.lane.b32.xlu0 %v1434, 64
        %v1701 = vpop.permute.xlu0 %1700
        %1702 = vrot.lane.b32.xlu0 %v1435, 64
        %v1703 = vpop.permute.xlu0 %1702
        %1704 = vrot.lane.b32.xlu0 %v1436, 64
        %v1705 = vpop.permute.xlu0 %1704
        %1706 = vrot.lane.b32.xlu0 %v1437, 64
        %v1707 = vpop.permute.xlu0 %1706
        %1708 = vrot.lane.b32.xlu0 %v1438, 64
        %v1709 = vpop.permute.xlu0 %1708
        %1710 = vrot.lane.b32.xlu0 %v1439, 64
        %v1711 = vpop.permute.xlu0 %1710
        %v1720 = vsel %vm655, %v1697, 0.0
        %1721 = vadd.xlane.f32.xlu0 %v1720
        %v1722 = vpop.xlane.xlu0 %1721
        %v1723 = vsel %vm655, %v1699, 0.0
        %1724 = vadd.xlane.f32.xlu0 %v1723
        %v1725 = vpop.xlane.xlu0 %1724
        %v1726 = vsel %vm655, %v1701, 0.0
        %1727 = vadd.xlane.f32.xlu0 %v1726
        %v1728 = vpop.xlane.xlu0 %1727
        %v1729 = vsel %vm655, %v1703, 0.0
        %1730 = vadd.xlane.f32.xlu0 %v1729
        %v1731 = vpop.xlane.xlu0 %1730
        %v1732 = vsel %vm655, %v1705, 0.0
        %1733 = vadd.xlane.f32.xlu0 %v1732
        %v1734 = vpop.xlane.xlu0 %1733
        %v1735 = vsel %vm655, %v1707, 0.0
        %1736 = vadd.xlane.f32.xlu0 %v1735
        %v1737 = vpop.xlane.xlu0 %1736
        %v1738 = vsel %vm655, %v1709, 0.0
        %1739 = vadd.xlane.f32.xlu0 %v1738
        %v1740 = vpop.xlane.xlu0 %1739
        %v1741 = vsel %vm655, %v1711, 0.0
        %1742 = vadd.xlane.f32.xlu0 %v1741
        %v1743 = vpop.xlane.xlu0 %1742
        %1744 = vrot.lane.b32.xlu0 %v1432, 32
        %v1745 = vpop.permute.xlu0 %1744
        %1746 = vrot.lane.b32.xlu0 %v1433, 32
        %v1747 = vpop.permute.xlu0 %1746
        %1748 = vrot.lane.b32.xlu0 %v1434, 32
        %v1749 = vpop.permute.xlu0 %1748
        %1750 = vrot.lane.b32.xlu0 %v1435, 32
        %v1751 = vpop.permute.xlu0 %1750
        %1752 = vrot.lane.b32.xlu0 %v1436, 32
        %v1753 = vpop.permute.xlu0 %1752
        %1754 = vrot.lane.b32.xlu0 %v1437, 32
        %v1755 = vpop.permute.xlu0 %1754
        %1756 = vrot.lane.b32.xlu0 %v1438, 32
        %v1757 = vpop.permute.xlu0 %1756
        %1758 = vrot.lane.b32.xlu0 %v1439, 32
        %v1759 = vpop.permute.xlu0 %1758
        %v1768 = vsel %vm655, %v1745, 0.0
        %1769 = vadd.xlane.f32.xlu0 %v1768
        %v1770 = vpop.xlane.xlu0 %1769
        %v1771 = vsel %vm655, %v1747, 0.0
        %1772 = vadd.xlane.f32.xlu0 %v1771
        %v1773 = vpop.xlane.xlu0 %1772
        %v1774 = vsel %vm655, %v1749, 0.0
        %1775 = vadd.xlane.f32.xlu0 %v1774
        %v1776 = vpop.xlane.xlu0 %1775
        %v1777 = vsel %vm655, %v1751, 0.0
        %1778 = vadd.xlane.f32.xlu0 %v1777
        %v1779 = vpop.xlane.xlu0 %1778
        %v1780 = vsel %vm655, %v1753, 0.0
        %1781 = vadd.xlane.f32.xlu0 %v1780
        %v1782 = vpop.xlane.xlu0 %1781
        %v1783 = vsel %vm655, %v1755, 0.0
        %1784 = vadd.xlane.f32.xlu0 %v1783
        %v1785 = vpop.xlane.xlu0 %1784
        %v1786 = vsel %vm655, %v1757, 0.0
        %1787 = vadd.xlane.f32.xlu0 %v1786
        %v1788 = vpop.xlane.xlu0 %1787
        %v1789 = vsel %vm655, %v1759, 0.0
        %1790 = vadd.xlane.f32.xlu0 %v1789
        %v1791 = vpop.xlane.xlu0 %1790
        %vm1792 = vcmask 7168
        %v1793 = vsel %vm1792, %v1442, %v1498
        %v1794 = vsel %vm1792, %v1445, %v1501
        %v1795 = vsel %vm1792, %v1448, %v1504
        %v1796 = vsel %vm1792, %v1451, %v1507
        %v1797 = vsel %vm1792, %v1454, %v1510
        %v1798 = vsel %vm1792, %v1457, %v1513
        %v1799 = vsel %vm1792, %v1460, %v1516
        %v1800 = vsel %vm1792, %v1463, %v1519
        %vm1801 = vcmask 15360
        %v1802 = vsel %vm1801, %v1793, %v1546
        %v1803 = vsel %vm1801, %v1794, %v1549
        %v1804 = vsel %vm1801, %v1795, %v1552
        %v1805 = vsel %vm1801, %v1796, %v1555
        %v1806 = vsel %vm1801, %v1797, %v1558
        %v1807 = vsel %vm1801, %v1798, %v1561
        %v1808 = vsel %vm1801, %v1799, %v1564
        %v1809 = vsel %vm1801, %v1800, %v1567
        %vm1810 = vcmask 23552
        %v1811 = vsel %vm1810, %v1802, %v1594
        %v1812 = vsel %vm1810, %v1803, %v1597
        %v1813 = vsel %vm1810, %v1804, %v1600
        %v1814 = vsel %vm1810, %v1805, %v1603
        %v1815 = vsel %vm1810, %v1806, %v1606
        %v1816 = vsel %vm1810, %v1807, %v1609
        %v1817 = vsel %vm1810, %v1808, %v1612
        %v1818 = vsel %vm1810, %v1809, %v1615
        %1819 = vxpose.xlu0.b32.start [1/16] %v1811, 128
        %1820 = vxpose.xlu0.b32.cont [2/16] %v1812, 128
        %1821 = vxpose.xlu0.b32.cont [3/16] 0.0, 128
        %1822 = vxpose.xlu0.b32.cont [4/16] 0.0, 128
        %1823 = vxpose.xlu0.b32.cont [5/16] 0.0, 128
        %1824 = vxpose.xlu0.b32.cont [6/16] 0.0, 128
        %1825 = vxpose.xlu0.b32.cont [7/16] 0.0, 128
        %1826 = vxpose.xlu0.b32.cont [8/16] 0.0, 128
        %1827 = vxpose.xlu0.b32.cont [9/16] 0.0, 128
        %1828 = vxpose.xlu0.b32.cont [10/16] 0.0, 128
        %1829 = vxpose.xlu0.b32.cont [11/16] 0.0, 128
        %1830 = vxpose.xlu0.b32.cont [12/16] 0.0, 128
        %1831 = vxpose.xlu0.b32.cont [13/16] 0.0, 128
        %1832 = vxpose.xlu0.b32.cont [14/16] 0.0, 128
        %1833 = vxpose.xlu0.b32.cont [15/16] 0.0, 128
        %1834 = vxpose.xlu0.b32.end [16/16] 0.0, 128
        %v1835 = vpop.trf.xlu0
        %v1836 = vpop.trf.xlu0
        %v1837 = vpop.trf.xlu0
        %v1838 = vpop.trf.xlu0
        %v1839 = vpop.trf.xlu0
        %v1840 = vpop.trf.xlu0
        %v1841 = vpop.trf.xlu0
        %v1842 = vpop.trf.xlu0
        %v1843 = vpop.trf.xlu0
        %v1844 = vpop.trf.xlu0
        %v1845 = vpop.trf.xlu0
        %v1846 = vpop.trf.xlu0
        %v1847 = vpop.trf.xlu0
        %v1848 = vpop.trf.xlu0
        %v1849 = vpop.trf.xlu0
        %v1850 = vpop.trf.xlu0
        %1851 = vxpose.xlu0.b32.start [1/16] %v1813, 128
        %1852 = vxpose.xlu0.b32.cont [2/16] %v1814, 128
        %1853 = vxpose.xlu0.b32.cont [3/16] 0.0, 128
        %1854 = vxpose.xlu0.b32.cont [4/16] 0.0, 128
        %1855 = vxpose.xlu0.b32.cont [5/16] 0.0, 128
        %1856 = vxpose.xlu0.b32.cont [6/16] 0.0, 128
        %1857 = vxpose.xlu0.b32.cont [7/16] 0.0, 128
        %1858 = vxpose.xlu0.b32.cont [8/16] 0.0, 128
        %1859 = vxpose.xlu0.b32.cont [9/16] 0.0, 128
        %1860 = vxpose.xlu0.b32.cont [10/16] 0.0, 128
        %1861 = vxpose.xlu0.b32.cont [11/16] 0.0, 128
        %1862 = vxpose.xlu0.b32.cont [12/16] 0.0, 128
        %1863 = vxpose.xlu0.b32.cont [13/16] 0.0, 128
        %1864 = vxpose.xlu0.b32.cont [14/16] 0.0, 128
        %1865 = vxpose.xlu0.b32.cont [15/16] 0.0, 128
        %1866 = vxpose.xlu0.b32.end [16/16] 0.0, 128
        %v1867 = vpop.trf.xlu0
        %v1868 = vpop.trf.xlu0
        %v1869 = vpop.trf.xlu0
        %v1870 = vpop.trf.xlu0
        %v1871 = vpop.trf.xlu0
        %v1872 = vpop.trf.xlu0
        %v1873 = vpop.trf.xlu0
        %v1874 = vpop.trf.xlu0
        %v1875 = vpop.trf.xlu0
        %v1876 = vpop.trf.xlu0
        %v1877 = vpop.trf.xlu0
        %v1878 = vpop.trf.xlu0
        %v1879 = vpop.trf.xlu0
        %v1880 = vpop.trf.xlu0
        %v1881 = vpop.trf.xlu0
        %v1882 = vpop.trf.xlu0
        %1883 = vxpose.xlu0.b32.start [1/16] %v1815, 128
        %1884 = vxpose.xlu0.b32.cont [2/16] %v1816, 128
        %1885 = vxpose.xlu0.b32.cont [3/16] 0.0, 128
        %1886 = vxpose.xlu0.b32.cont [4/16] 0.0, 128
        %1887 = vxpose.xlu0.b32.cont [5/16] 0.0, 128
        %1888 = vxpose.xlu0.b32.cont [6/16] 0.0, 128
        %1889 = vxpose.xlu0.b32.cont [7/16] 0.0, 128
        %1890 = vxpose.xlu0.b32.cont [8/16] 0.0, 128
        %1891 = vxpose.xlu0.b32.cont [9/16] 0.0, 128
        %1892 = vxpose.xlu0.b32.cont [10/16] 0.0, 128
        %1893 = vxpose.xlu0.b32.cont [11/16] 0.0, 128
        %1894 = vxpose.xlu0.b32.cont [12/16] 0.0, 128
        %1895 = vxpose.xlu0.b32.cont [13/16] 0.0, 128
        %1896 = vxpose.xlu0.b32.cont [14/16] 0.0, 128
        %1897 = vxpose.xlu0.b32.cont [15/16] 0.0, 128
        %1898 = vxpose.xlu0.b32.end [16/16] 0.0, 128
        %v1899 = vpop.trf.xlu0
        %v1900 = vpop.trf.xlu0
        %v1901 = vpop.trf.xlu0
        %v1902 = vpop.trf.xlu0
        %v1903 = vpop.trf.xlu0
        %v1904 = vpop.trf.xlu0
        %v1905 = vpop.trf.xlu0
        %v1906 = vpop.trf.xlu0
        %v1907 = vpop.trf.xlu0
        %v1908 = vpop.trf.xlu0
        %v1909 = vpop.trf.xlu0
        %v1910 = vpop.trf.xlu0
        %v1911 = vpop.trf.xlu0
        %v1912 = vpop.trf.xlu0
        %v1913 = vpop.trf.xlu0
        %v1914 = vpop.trf.xlu0
        %1915 = vxpose.xlu0.b32.start [1/16] %v1817, 128
        %1916 = vxpose.xlu0.b32.cont [2/16] %v1818, 128
        %1917 = vxpose.xlu0.b32.cont [3/16] 0.0, 128
        %1918 = vxpose.xlu0.b32.cont [4/16] 0.0, 128
        %1919 = vxpose.xlu0.b32.cont [5/16] 0.0, 128
        %1920 = vxpose.xlu0.b32.cont [6/16] 0.0, 128
        %1921 = vxpose.xlu0.b32.cont [7/16] 0.0, 128
        %1922 = vxpose.xlu0.b32.cont [8/16] 0.0, 128
        %1923 = vxpose.xlu0.b32.cont [9/16] 0.0, 128
        %1924 = vxpose.xlu0.b32.cont [10/16] 0.0, 128
        %1925 = vxpose.xlu0.b32.cont [11/16] 0.0, 128
        %1926 = vxpose.xlu0.b32.cont [12/16] 0.0, 128
        %1927 = vxpose.xlu0.b32.cont [13/16] 0.0, 128
        %1928 = vxpose.xlu0.b32.cont [14/16] 0.0, 128
        %1929 = vxpose.xlu0.b32.cont [15/16] 0.0, 128
        %1930 = vxpose.xlu0.b32.end [16/16] 0.0, 128
        %v1931 = vpop.trf.xlu0
        %v1932 = vpop.trf.xlu0
        %v1933 = vpop.trf.xlu0
        %v1934 = vpop.trf.xlu0
        %v1935 = vpop.trf.xlu0
        %v1936 = vpop.trf.xlu0
        %v1937 = vpop.trf.xlu0
        %v1938 = vpop.trf.xlu0
        %v1939 = vpop.trf.xlu0
        %v1940 = vpop.trf.xlu0
        %v1941 = vpop.trf.xlu0
        %v1942 = vpop.trf.xlu0
        %v1943 = vpop.trf.xlu0
        %v1944 = vpop.trf.xlu0
        %v1945 = vpop.trf.xlu0
        %v1946 = vpop.trf.xlu0
        %v1947 = vld [vmem:[%s583] sm:$0xf]
        %v1948 = vld [vmem:[%s583 + $0x4] sm:$0xf]
        %v1949 = vld [vmem:[%s583 + $0x8] sm:$0xf]
        %v1950 = vld [vmem:[%s583 + $0xc] sm:$0xf]
        %v1951 = vld [vmem:[%s583 + $0x10] sm:$0xf]
        %v1952 = vld [vmem:[%s583 + $0x14] sm:$0xf]
        %v1953 = vld [vmem:[%s583 + $0x18] sm:$0xf]
        %v1954 = vld [vmem:[%s583 + $0x1c] sm:$0xf]
        %v1955 = vunpack.c.l.bf16 %v1947
        %v1956 = vunpack.c.l.bf16 %v1948
        %v1957 = vunpack.c.l.bf16 %v1949
        %v1958 = vunpack.c.l.bf16 %v1950
        %v1959 = vunpack.c.l.bf16 %v1951
        %v1960 = vunpack.c.l.bf16 %v1952
        %v1961 = vunpack.c.l.bf16 %v1953
        %v1962 = vunpack.c.l.bf16 %v1954
        %v1963 = vld [vmem:[%s590] sm:$0xf]
        %v1964 = vld [vmem:[%s590 + $0x4] sm:$0xf]
        %v1965 = vld [vmem:[%s590 + $0x8] sm:$0xf]
        %v1966 = vld [vmem:[%s590 + $0xc] sm:$0xf]
        %v1967 = vld [vmem:[%s590 + $0x10] sm:$0xf]
        %v1968 = vld [vmem:[%s590 + $0x14] sm:$0xf]
        %v1969 = vld [vmem:[%s590 + $0x18] sm:$0xf]
        %v1970 = vld [vmem:[%s590 + $0x1c] sm:$0xf]
        %v1971 = vunpack.c.l.bf16 %v1963
        %v1972 = vunpack.c.l.bf16 %v1964
        %v1973 = vunpack.c.l.bf16 %v1965
        %v1974 = vunpack.c.l.bf16 %v1966
        %v1975 = vunpack.c.l.bf16 %v1967
        %v1976 = vunpack.c.l.bf16 %v1968
        %v1977 = vunpack.c.l.bf16 %v1969
        %v1978 = vunpack.c.l.bf16 %v1970
        %v1979 = vlaneseq
        %v1980 = vshrl.u32 %v1979, 7
        %v1981 = vsub.s32 0, %v1980
        %v1982 = vrot.slane %v1835, %v1981
        %v1983 = vlaneseq
        %v1984 = vshrl.u32 %v1983, 7
        %v1985 = vsub.s32 0, %v1984
        %v1986 = vrot.slane %v1867, %v1985
        %v1987 = vlaneseq
        %v1988 = vshrl.u32 %v1987, 7
        %v1989 = vsub.s32 0, %v1988
        %v1990 = vrot.slane %v1899, %v1989
        %v1991 = vlaneseq
        %v1992 = vshrl.u32 %v1991, 7
        %v1993 = vsub.s32 0, %v1992
        %v1994 = vrot.slane %v1931, %v1993
        %v1995 = vadd.f32 %v1618, %v1982
        %v1996 = vadd.f32 %v1621, %v1982
        %v1997 = vadd.f32 %v1624, %v1986
        %v1998 = vadd.f32 %v1627, %v1986
        %v1999 = vadd.f32 %v1630, %v1990
        %v2000 = vadd.f32 %v1633, %v1990
        %v2001 = vadd.f32 %v1636, %v1994
        %v2002 = vadd.f32 %v1639, %v1994
        %vm2003 = vcmp.gt.f32.partialorder %v1995, 0.0
        %vm2004 = vcmp.gt.f32.partialorder %v1996, 0.0
        %vm2005 = vcmp.gt.f32.partialorder %v1997, 0.0
        %vm2006 = vcmp.gt.f32.partialorder %v1998, 0.0
        %vm2007 = vcmp.gt.f32.partialorder %v1999, 0.0
        %vm2008 = vcmp.gt.f32.partialorder %v2000, 0.0
        %vm2009 = vcmp.gt.f32.partialorder %v2001, 0.0
        %vm2010 = vcmp.gt.f32.partialorder %v2002, 0.0
        %v2011 = vmul.f32 %v1995, 0.2
        %v2012 = vmul.f32 %v1996, 0.2
        %v2013 = vmul.f32 %v1997, 0.2
        %v2014 = vmul.f32 %v1998, 0.2
        %v2015 = vmul.f32 %v1999, 0.2
        %v2016 = vmul.f32 %v2000, 0.2
        %v2017 = vmul.f32 %v2001, 0.2
        %v2018 = vmul.f32 %v2002, 0.2
        %v2019 = vsel %vm2003, %v1995, %v2011
        %v2020 = vsel %vm2004, %v1996, %v2012
        %v2021 = vsel %vm2005, %v1997, %v2013
        %v2022 = vsel %vm2006, %v1998, %v2014
        %v2023 = vsel %vm2007, %v1999, %v2015
        %v2024 = vsel %vm2008, %v2000, %v2016
        %v2025 = vsel %vm2009, %v2001, %v2017
        %v2026 = vsel %vm2010, %v2002, %v2018
        %vm2027 = vcmp.eq.f32.partialorder %v1955, 1.0
        %vm2028 = vcmp.eq.f32.partialorder %v1956, 1.0
        %vm2029 = vcmp.eq.f32.partialorder %v1957, 1.0
        %vm2030 = vcmp.eq.f32.partialorder %v1958, 1.0
        %vm2031 = vcmp.eq.f32.partialorder %v1959, 1.0
        %vm2032 = vcmp.eq.f32.partialorder %v1960, 1.0
        %vm2033 = vcmp.eq.f32.partialorder %v1961, 1.0
        %vm2034 = vcmp.eq.f32.partialorder %v1962, 1.0
        %v2035 = vsel %vm2027, %v2019, 0.0
        %v2036 = vsel %vm2028, %v2020, 0.0
        %v2037 = vsel %vm2029, %v2021, 0.0
        %v2038 = vsel %vm2030, %v2022, 0.0
        %v2039 = vsel %vm2031, %v2023, 0.0
        %v2040 = vsel %vm2032, %v2024, 0.0
        %v2041 = vsel %vm2033, %v2025, 0.0
        %v2042 = vsel %vm2034, %v2026, 0.0
        %v2043 = vadd.f32 %v2035, 0.0
        %v2044 = vadd.f32 %v2036, 0.0
        %v2045 = vadd.f32 %v2037, 0.0
        %v2046 = vadd.f32 %v2038, 0.0
        %v2047 = vadd.f32 %v2039, 0.0
        %v2048 = vadd.f32 %v2040, 0.0
        %v2049 = vadd.f32 %v2041, 0.0
        %v2050 = vadd.f32 %v2042, 0.0
        %v2051 = vlaneseq
        %v2052 = vshrl.u32 %v2051, 7
        %v2053 = vsub.s32 1, %v2052
        %v2054 = vrot.slane %v1835, %v2053
        %v2055 = vlaneseq
        %v2056 = vshrl.u32 %v2055, 7
        %v2057 = vsub.s32 1, %v2056
        %v2058 = vrot.slane %v1867, %v2057
        %v2059 = vlaneseq
        %v2060 = vshrl.u32 %v2059, 7
        %v2061 = vsub.s32 1, %v2060
        %v2062 = vrot.slane %v1899, %v2061
        %v2063 = vlaneseq
        %v2064 = vshrl.u32 %v2063, 7
        %v2065 = vsub.s32 1, %v2064
        %v2066 = vrot.slane %v1931, %v2065
        %v2067 = vadd.f32 %v1674, %v2054
        %v2068 = vadd.f32 %v1677, %v2054
        %v2069 = vadd.f32 %v1680, %v2058
        %v2070 = vadd.f32 %v1683, %v2058
        %v2071 = vadd.f32 %v1686, %v2062
        %v2072 = vadd.f32 %v1689, %v2062
        %v2073 = vadd.f32 %v1692, %v2066
        %v2074 = vadd.f32 %v1695, %v2066
        %vm2075 = vcmp.gt.f32.partialorder %v2067, 0.0
        %vm2076 = vcmp.gt.f32.partialorder %v2068, 0.0
        %vm2077 = vcmp.gt.f32.partialorder %v2069, 0.0
        %vm2078 = vcmp.gt.f32.partialorder %v2070, 0.0
        %vm2079 = vcmp.gt.f32.partialorder %v2071, 0.0
        %vm2080 = vcmp.gt.f32.partialorder %v2072, 0.0
        %vm2081 = vcmp.gt.f32.partialorder %v2073, 0.0
        %vm2082 = vcmp.gt.f32.partialorder %v2074, 0.0
        %v2083 = vmul.f32 %v2067, 0.2
        %v2084 = vmul.f32 %v2068, 0.2
        %v2085 = vmul.f32 %v2069, 0.2
        %v2086 = vmul.f32 %v2070, 0.2
        %v2087 = vmul.f32 %v2071, 0.2
        %v2088 = vmul.f32 %v2072, 0.2
        %v2089 = vmul.f32 %v2073, 0.2
        %v2090 = vmul.f32 %v2074, 0.2
        %v2091 = vsel %vm2075, %v2067, %v2083
        %v2092 = vsel %vm2076, %v2068, %v2084
        %v2093 = vsel %vm2077, %v2069, %v2085
        %v2094 = vsel %vm2078, %v2070, %v2086
        %v2095 = vsel %vm2079, %v2071, %v2087
        %v2096 = vsel %vm2080, %v2072, %v2088
        %v2097 = vsel %vm2081, %v2073, %v2089
        %v2098 = vsel %vm2082, %v2074, %v2090
        %vm2099 = vcmp.eq.f32.partialorder %v1955, 2.0
        %vm2100 = vcmp.eq.f32.partialorder %v1956, 2.0
        %vm2101 = vcmp.eq.f32.partialorder %v1957, 2.0
        %vm2102 = vcmp.eq.f32.partialorder %v1958, 2.0
        %vm2103 = vcmp.eq.f32.partialorder %v1959, 2.0
        %vm2104 = vcmp.eq.f32.partialorder %v1960, 2.0
        %vm2105 = vcmp.eq.f32.partialorder %v1961, 2.0
        %vm2106 = vcmp.eq.f32.partialorder %v1962, 2.0
        %v2107 = vsel %vm2099, %v2091, 0.0
        %v2108 = vsel %vm2100, %v2092, 0.0
        %v2109 = vsel %vm2101, %v2093, 0.0
        %v2110 = vsel %vm2102, %v2094, 0.0
        %v2111 = vsel %vm2103, %v2095, 0.0
        %v2112 = vsel %vm2104, %v2096, 0.0
        %v2113 = vsel %vm2105, %v2097, 0.0
        %v2114 = vsel %vm2106, %v2098, 0.0
        %v2115 = vadd.f32 %v2043, %v2107
        %v2116 = vadd.f32 %v2044, %v2108
        %v2117 = vadd.f32 %v2045, %v2109
        %v2118 = vadd.f32 %v2046, %v2110
        %v2119 = vadd.f32 %v2047, %v2111
        %v2120 = vadd.f32 %v2048, %v2112
        %v2121 = vadd.f32 %v2049, %v2113
        %v2122 = vadd.f32 %v2050, %v2114
        %vm2123 = vcmp.gt.f32.partialorder %v1955, 0.0
        %vm2124 = vcmp.gt.f32.partialorder %v1956, 0.0
        %vm2125 = vcmp.gt.f32.partialorder %v1957, 0.0
        %vm2126 = vcmp.gt.f32.partialorder %v1958, 0.0
        %vm2127 = vcmp.gt.f32.partialorder %v1959, 0.0
        %vm2128 = vcmp.gt.f32.partialorder %v1960, 0.0
        %vm2129 = vcmp.gt.f32.partialorder %v1961, 0.0
        %vm2130 = vcmp.gt.f32.partialorder %v1962, 0.0
        %v2131 = vsel %vm2123, %v2115, -1e+30
        %v2132 = vsel %vm2124, %v2116, -1e+30
        %v2133 = vsel %vm2125, %v2117, -1e+30
        %v2134 = vsel %vm2126, %v2118, -1e+30
        %v2135 = vsel %vm2127, %v2119, -1e+30
        %v2136 = vsel %vm2128, %v2120, -1e+30
        %v2137 = vsel %vm2129, %v2121, -1e+30
        %v2138 = vsel %vm2130, %v2122, -1e+30
        %vm2139 = vcmask 130048
        %v2140 = vsel %vm2139, %v2131, -inf
        %v2141 = vsel %vm2139, %v2132, -inf
        %v2142 = vmax.f32 %v2140, %v2141
        %v2143 = vrot.slane %v2142, 4
        %v2144 = vmax.f32 %v2142, %v2143
        %v2145 = vrot.slane %v2144, 2
        %v2146 = vmax.f32 %v2144, %v2145
        %v2147 = vrot.slane %v2146, 1
        %v2148 = vmax.f32 %v2146, %v2147
        %v2149 = vsel %vm2139, %v2133, -inf
        %v2150 = vsel %vm2139, %v2134, -inf
        %v2151 = vmax.f32 %v2149, %v2150
        %v2152 = vrot.slane %v2151, 4
        %v2153 = vmax.f32 %v2151, %v2152
        %v2154 = vrot.slane %v2153, 2
        %v2155 = vmax.f32 %v2153, %v2154
        %v2156 = vrot.slane %v2155, 1
        %v2157 = vmax.f32 %v2155, %v2156
        %v2158 = vsel %vm2139, %v2135, -inf
        %v2159 = vsel %vm2139, %v2136, -inf
        %v2160 = vmax.f32 %v2158, %v2159
        %v2161 = vrot.slane %v2160, 4
        %v2162 = vmax.f32 %v2160, %v2161
        %v2163 = vrot.slane %v2162, 2
        %v2164 = vmax.f32 %v2162, %v2163
        %v2165 = vrot.slane %v2164, 1
        %v2166 = vmax.f32 %v2164, %v2165
        %v2167 = vsel %vm2139, %v2137, -inf
        %v2168 = vsel %vm2139, %v2138, -inf
        %v2169 = vmax.f32 %v2167, %v2168
        %v2170 = vrot.slane %v2169, 4
        %v2171 = vmax.f32 %v2169, %v2170
        %v2172 = vrot.slane %v2171, 2
        %v2173 = vmax.f32 %v2171, %v2172
        %v2174 = vrot.slane %v2173, 1
        %v2175 = vmax.f32 %v2173, %v2174
        %v2176 = vsub.f32 %v2131, %v2148
        %v2177 = vsub.f32 %v2132, %v2148
        %v2178 = vsub.f32 %v2133, %v2157
        %v2179 = vsub.f32 %v2134, %v2157
        %v2180 = vsub.f32 %v2135, %v2166
        %v2181 = vsub.f32 %v2136, %v2166
        %v2182 = vsub.f32 %v2137, %v2175
        %v2183 = vsub.f32 %v2138, %v2175
        %v2184 = vmul.f32 %v2176, 1.442695
        %v2185 = vpow.pop %v2184
        %v2186 = vmul.f32 %v2177, 1.442695
        %v2187 = vpow.pop %v2186
        %v2188 = vmul.f32 %v2178, 1.442695
        %v2189 = vpow.pop %v2188
        %v2190 = vmul.f32 %v2179, 1.442695
        %v2191 = vpow.pop %v2190
        %v2192 = vmul.f32 %v2180, 1.442695
        %v2193 = vpow.pop %v2192
        %v2194 = vmul.f32 %v2181, 1.442695
        %v2195 = vpow.pop %v2194
        %v2196 = vmul.f32 %v2182, 1.442695
        %v2197 = vpow.pop %v2196
        %v2198 = vmul.f32 %v2183, 1.442695
        %v2199 = vpow.pop %v2198
        %v2200 = vsel %vm2139, %v2185, 0.0
        %v2201 = vsel %vm2139, %v2187, 0.0
        %v2202 = vadd.f32 %v2200, %v2201
        %v2203 = vrot.slane %v2202, 4
        %v2204 = vadd.f32 %v2202, %v2203
        %v2205 = vrot.slane %v2204, 2
        %v2206 = vadd.f32 %v2204, %v2205
        %v2207 = vrot.slane %v2206, 1
        %v2208 = vadd.f32 %v2206, %v2207
        %v2209 = vsel %vm2139, %v2189, 0.0
        %v2210 = vsel %vm2139, %v2191, 0.0
        %v2211 = vadd.f32 %v2209, %v2210
        %v2212 = vrot.slane %v2211, 4
        %v2213 = vadd.f32 %v2211, %v2212
        %v2214 = vrot.slane %v2213, 2
        %v2215 = vadd.f32 %v2213, %v2214
        %v2216 = vrot.slane %v2215, 1
        %v2217 = vadd.f32 %v2215, %v2216
        %v2218 = vsel %vm2139, %v2193, 0.0
        %v2219 = vsel %vm2139, %v2195, 0.0
        %v2220 = vadd.f32 %v2218, %v2219
        %v2221 = vrot.slane %v2220, 4
        %v2222 = vadd.f32 %v2220, %v2221
        %v2223 = vrot.slane %v2222, 2
        %v2224 = vadd.f32 %v2222, %v2223
        %v2225 = vrot.slane %v2224, 1
        %v2226 = vadd.f32 %v2224, %v2225
        %v2227 = vsel %vm2139, %v2197, 0.0
        %v2228 = vsel %vm2139, %v2199, 0.0
        %v2229 = vadd.f32 %v2227, %v2228
        %v2230 = vrot.slane %v2229, 4
        %v2231 = vadd.f32 %v2229, %v2230
        %v2232 = vrot.slane %v2231, 2
        %v2233 = vadd.f32 %v2231, %v2232
        %v2234 = vrot.slane %v2233, 1
        %v2235 = vadd.f32 %v2233, %v2234
        %v2236 = vrcp.pop %v2208
        %v2237 = vrcp.pop %v2217
        %v2238 = vrcp.pop %v2226
        %v2239 = vrcp.pop %v2235
        %v2240 = vmul.f32 %v2185, %v2236
        %v2241 = vmul.f32 %v2187, %v2236
        %v2242 = vmul.f32 %v2189, %v2237
        %v2243 = vmul.f32 %v2191, %v2237
        %v2244 = vmul.f32 %v2193, %v2238
        %v2245 = vmul.f32 %v2195, %v2238
        %v2246 = vmul.f32 %v2197, %v2239
        %v2247 = vmul.f32 %v2199, %v2239
        %2249 = vset.pattern.permute.xlu0 0
        %2250 = vperm.xlu0 %2249, %v1971
        %v2251 = vpop.permute.xlu0 %2250
        %2254 = vset.pattern.permute.xlu0 0
        %2255 = vperm.xlu0 %2254, %v1972
        %v2256 = vpop.permute.xlu0 %2255
        %2259 = vset.pattern.permute.xlu0 0
        %2260 = vperm.xlu0 %2259, %v1973
        %v2261 = vpop.permute.xlu0 %2260
        %2264 = vset.pattern.permute.xlu0 0
        %2265 = vperm.xlu0 %2264, %v1974
        %v2266 = vpop.permute.xlu0 %2265
        %2269 = vset.pattern.permute.xlu0 0
        %2270 = vperm.xlu0 %2269, %v1975
        %v2271 = vpop.permute.xlu0 %2270
        %2274 = vset.pattern.permute.xlu0 0
        %2275 = vperm.xlu0 %2274, %v1976
        %v2276 = vpop.permute.xlu0 %2275
        %2279 = vset.pattern.permute.xlu0 0
        %2280 = vperm.xlu0 %2279, %v1977
        %v2281 = vpop.permute.xlu0 %2280
        %2284 = vset.pattern.permute.xlu0 0
        %2285 = vperm.xlu0 %2284, %v1978
        %v2286 = vpop.permute.xlu0 %2285
        %v2288 = vmul.f32 %v1360, %v2251
        %v2289 = vmul.f32 %v1361, %v2256
        %v2290 = vmul.f32 %v1362, %v2261
        %v2291 = vmul.f32 %v1363, %v2266
        %v2292 = vmul.f32 %v1364, %v2271
        %v2293 = vmul.f32 %v1365, %v2276
        %v2294 = vmul.f32 %v1366, %v2281
        %v2295 = vmul.f32 %v1367, %v2286
        %2298 = vrot.lane.b32.xlu0 %v2288, 96
        %v2299 = vpop.permute.xlu0 %2298
        %2300 = vrot.lane.b32.xlu0 %v2289, 96
        %v2301 = vpop.permute.xlu0 %2300
        %v2305 = vsel %vm2139, %v2240, 0
        %v2308 = vsel %vm2139, %v2241, 0
        %2310 = vmatprep.subr.mxu0 0.0
        %2311 = vmatpush1.msra.mxu0 0.0
        %2312 = vmatprep.subr.mxu0 0.0
        %2313 = vmatpush1.msra.mxu0 0.0
        %2314 = vmatprep.subr.mxu0 0.0
        %2315 = vmatpush1.msra.mxu0 0.0
        %2316 = vmatprep.subr.mxu0 0.0
        %2317 = vmatpush1.msra.mxu0 0.0
        %2318 = vmatprep.subr.mxu0 0.0
        %2319 = vmatpush1.msra.mxu0 0.0
        %2320 = vmatprep.subr.mxu0 0.0
        %2321 = vmatpush1.msra.mxu0 0.0
        %2322 = vmatprep.subr.mxu0 0.0
        %2323 = vmatpush1.msra.mxu0 0.0
        %2324 = vmatprep.subr.mxu0 0.0
        %2325 = vmatpush1.msra.mxu0 0.0
        %2326 = vmatprep.subr.mxu0 0.0
        %2327 = vmatpush1.msra.mxu0 0.0
        %2328 = vmatprep.subr.mxu0 0.0
        %2329 = vmatpush1.msra.mxu0 0.0
        %2330 = vmatprep.subr.mxu0 0.0
        %2331 = vmatpush1.msra.mxu0 0.0
        %2332 = vmatprep.subr.mxu0 0.0
        %2333 = vmatpush1.msra.mxu0 0.0
        %2334 = vmatprep.subr.mxu0 0.0
        %2335 = vmatpush1.msra.mxu0 0.0
        %2336 = vmatprep.subr.mxu0 0.0
        %2337 = vmatpush1.msra.mxu0 0.0
        %2338 = vmatprep.subr.mxu0 0.0
        %2339 = vmatpush1.msra.mxu0 %v2301
        %2340 = vmatprep.subr.mxu0 0.0
        %2341 = vmatpush1.msra.mxu0 %v2299
        %2342 = vmatprep.subr.mxu0 0.0
        %2343 = vmatpush2.msra.mxu0 0.0
        %2344 = vmatprep.subr.mxu0 0.0
        %2345 = vmatpush2.msra.mxu0 0.0
        %2346 = vmatprep.subr.mxu0 0.0
        %2347 = vmatpush2.msra.mxu0 0.0
        %2348 = vmatprep.subr.mxu0 0.0
        %2349 = vmatpush2.msra.mxu0 0.0
        %2350 = vmatprep.subr.mxu0 0.0
        %2351 = vmatpush2.msra.mxu0 0.0
        %2352 = vmatprep.subr.mxu0 0.0
        %2353 = vmatpush2.msra.mxu0 0.0
        %2354 = vmatprep.subr.mxu0 0.0
        %2355 = vmatpush2.msra.mxu0 0.0
        %2356 = vmatprep.subr.mxu0 0.0
        %2357 = vmatpush2.msra.mxu0 0.0
        %2358 = vmatprep.subr.mxu0 0.0
        %2359 = vmatpush2.msra.mxu0 0.0
        %2360 = vmatprep.subr.mxu0 0.0
        %2361 = vmatpush2.msra.mxu0 0.0
        %2362 = vmatprep.subr.mxu0 0.0
        %2363 = vmatpush2.msra.mxu0 0.0
        %2364 = vmatprep.subr.mxu0 0.0
        %2365 = vmatpush2.msra.mxu0 0.0
        %2366 = vmatprep.subr.mxu0 0.0
        %2367 = vmatpush2.msra.mxu0 0.0
        %2368 = vmatprep.subr.mxu0 0.0
        %2369 = vmatpush2.msra.mxu0 0.0
        %2370 = vmatprep.subr.mxu0 0.0
        %2371 = vmatpush2.msra.mxu0 0.0
        %2372 = vmatprep.subr.mxu0 0.0
        %2373 = vmatpush2.msra.mxu0 0.0
        %2374 = vmatprep.mubr.f32.mxu0 0.0
        %2375 = vmatmul.mubr.f32.gmra.mxu0 %v2305
        %v2376 = vpop.f32.mrf.mxu0
        %v2377 = vadd.f32 0.0, %v2376
        %v2378 = vpop.f32.mrf.mxu0
        %2379 = vmatprep.mubr.f32.mxu0 0.0
        %2380 = vmatmul.mubr.f32.gmra.mxu0 %v2308
        %v2381 = vpop.f32.mrf.mxu0
        %v2382 = vadd.f32 0.0, %v2381
        %v2383 = vpop.f32.mrf.mxu0
        %2384 = vdwg.mxu0
        %2387 = vrot.lane.b32.xlu0 %v2290, 96
        %v2388 = vpop.permute.xlu0 %2387
        %2389 = vrot.lane.b32.xlu0 %v2291, 96
        %v2390 = vpop.permute.xlu0 %2389
        %v2394 = vsel %vm2139, %v2242, 0
        %v2397 = vsel %vm2139, %v2243, 0
        %2399 = vmatprep.subr.mxu0 0.0
        %2400 = vmatpush1.msra.mxu0 0.0
        %2401 = vmatprep.subr.mxu0 0.0
        %2402 = vmatpush1.msra.mxu0 0.0
        %2403 = vmatprep.subr.mxu0 0.0
        %2404 = vmatpush1.msra.mxu0 0.0
        %2405 = vmatprep.subr.mxu0 0.0
        %2406 = vmatpush1.msra.mxu0 0.0
        %2407 = vmatprep.subr.mxu0 0.0
        %2408 = vmatpush1.msra.mxu0 0.0
        %2409 = vmatprep.subr.mxu0 0.0
        %2410 = vmatpush1.msra.mxu0 0.0
        %2411 = vmatprep.subr.mxu0 0.0
        %2412 = vmatpush1.msra.mxu0 0.0
        %2413 = vmatprep.subr.mxu0 0.0
        %2414 = vmatpush1.msra.mxu0 0.0
        %2415 = vmatprep.subr.mxu0 0.0
        %2416 = vmatpush1.msra.mxu0 0.0
        %2417 = vmatprep.subr.mxu0 0.0
        %2418 = vmatpush1.msra.mxu0 0.0
        %2419 = vmatprep.subr.mxu0 0.0
        %2420 = vmatpush1.msra.mxu0 0.0
        %2421 = vmatprep.subr.mxu0 0.0
        %2422 = vmatpush1.msra.mxu0 0.0
        %2423 = vmatprep.subr.mxu0 0.0
        %2424 = vmatpush1.msra.mxu0 0.0
        %2425 = vmatprep.subr.mxu0 0.0
        %2426 = vmatpush1.msra.mxu0 0.0
        %2427 = vmatprep.subr.mxu0 0.0
        %2428 = vmatpush1.msra.mxu0 %v2390
        %2429 = vmatprep.subr.mxu0 0.0
        %2430 = vmatpush1.msra.mxu0 %v2388
        %2431 = vmatprep.subr.mxu0 0.0
        %2432 = vmatpush2.msra.mxu0 0.0
        %2433 = vmatprep.subr.mxu0 0.0
        %2434 = vmatpush2.msra.mxu0 0.0
        %2435 = vmatprep.subr.mxu0 0.0
        %2436 = vmatpush2.msra.mxu0 0.0
        %2437 = vmatprep.subr.mxu0 0.0
        %2438 = vmatpush2.msra.mxu0 0.0
        %2439 = vmatprep.subr.mxu0 0.0
        %2440 = vmatpush2.msra.mxu0 0.0
        %2441 = vmatprep.subr.mxu0 0.0
        %2442 = vmatpush2.msra.mxu0 0.0
        %2443 = vmatprep.subr.mxu0 0.0
        %2444 = vmatpush2.msra.mxu0 0.0
        %2445 = vmatprep.subr.mxu0 0.0
        %2446 = vmatpush2.msra.mxu0 0.0
        %2447 = vmatprep.subr.mxu0 0.0
        %2448 = vmatpush2.msra.mxu0 0.0
        %2449 = vmatprep.subr.mxu0 0.0
        %2450 = vmatpush2.msra.mxu0 0.0
        %2451 = vmatprep.subr.mxu0 0.0
        %2452 = vmatpush2.msra.mxu0 0.0
        %2453 = vmatprep.subr.mxu0 0.0
        %2454 = vmatpush2.msra.mxu0 0.0
        %2455 = vmatprep.subr.mxu0 0.0
        %2456 = vmatpush2.msra.mxu0 0.0
        %2457 = vmatprep.subr.mxu0 0.0
        %2458 = vmatpush2.msra.mxu0 0.0
        %2459 = vmatprep.subr.mxu0 0.0
        %2460 = vmatpush2.msra.mxu0 0.0
        %2461 = vmatprep.subr.mxu0 0.0
        %2462 = vmatpush2.msra.mxu0 0.0
        %2463 = vmatprep.mubr.f32.mxu0 0.0
        %2464 = vmatmul.mubr.f32.gmra.mxu0 %v2394
        %v2465 = vpop.f32.mrf.mxu0
        %v2466 = vadd.f32 0.0, %v2465
        %v2467 = vpop.f32.mrf.mxu0
        %2468 = vmatprep.mubr.f32.mxu0 0.0
        %2469 = vmatmul.mubr.f32.gmra.mxu0 %v2397
        %v2470 = vpop.f32.mrf.mxu0
        %v2471 = vadd.f32 0.0, %v2470
        %v2472 = vpop.f32.mrf.mxu0
        %2473 = vdwg.mxu0
        %2476 = vrot.lane.b32.xlu0 %v2292, 96
        %v2477 = vpop.permute.xlu0 %2476
        %2478 = vrot.lane.b32.xlu0 %v2293, 96
        %v2479 = vpop.permute.xlu0 %2478
        %v2483 = vsel %vm2139, %v2244, 0
        %v2486 = vsel %vm2139, %v2245, 0
        %2488 = vmatprep.subr.mxu0 0.0
        %2489 = vmatpush1.msra.mxu0 0.0
        %2490 = vmatprep.subr.mxu0 0.0
        %2491 = vmatpush1.msra.mxu0 0.0
        %2492 = vmatprep.subr.mxu0 0.0
        %2493 = vmatpush1.msra.mxu0 0.0
        %2494 = vmatprep.subr.mxu0 0.0
        %2495 = vmatpush1.msra.mxu0 0.0
        %2496 = vmatprep.subr.mxu0 0.0
        %2497 = vmatpush1.msra.mxu0 0.0
        %2498 = vmatprep.subr.mxu0 0.0
        %2499 = vmatpush1.msra.mxu0 0.0
        %2500 = vmatprep.subr.mxu0 0.0
        %2501 = vmatpush1.msra.mxu0 0.0
        %2502 = vmatprep.subr.mxu0 0.0
        %2503 = vmatpush1.msra.mxu0 0.0
        %2504 = vmatprep.subr.mxu0 0.0
        %2505 = vmatpush1.msra.mxu0 0.0
        %2506 = vmatprep.subr.mxu0 0.0
        %2507 = vmatpush1.msra.mxu0 0.0
        %2508 = vmatprep.subr.mxu0 0.0
        %2509 = vmatpush1.msra.mxu0 0.0
        %2510 = vmatprep.subr.mxu0 0.0
        %2511 = vmatpush1.msra.mxu0 0.0
        %2512 = vmatprep.subr.mxu0 0.0
        %2513 = vmatpush1.msra.mxu0 0.0
        %2514 = vmatprep.subr.mxu0 0.0
        %2515 = vmatpush1.msra.mxu0 0.0
        %2516 = vmatprep.subr.mxu0 0.0
        %2517 = vmatpush1.msra.mxu0 %v2479
        %2518 = vmatprep.subr.mxu0 0.0
        %2519 = vmatpush1.msra.mxu0 %v2477
        %2520 = vmatprep.subr.mxu0 0.0
        %2521 = vmatpush2.msra.mxu0 0.0
        %2522 = vmatprep.subr.mxu0 0.0
        %2523 = vmatpush2.msra.mxu0 0.0
        %2524 = vmatprep.subr.mxu0 0.0
        %2525 = vmatpush2.msra.mxu0 0.0
        %2526 = vmatprep.subr.mxu0 0.0
        %2527 = vmatpush2.msra.mxu0 0.0
        %2528 = vmatprep.subr.mxu0 0.0
        %2529 = vmatpush2.msra.mxu0 0.0
        %2530 = vmatprep.subr.mxu0 0.0
        %2531 = vmatpush2.msra.mxu0 0.0
        %2532 = vmatprep.subr.mxu0 0.0
        %2533 = vmatpush2.msra.mxu0 0.0
        %2534 = vmatprep.subr.mxu0 0.0
        %2535 = vmatpush2.msra.mxu0 0.0
        %2536 = vmatprep.subr.mxu0 0.0
        %2537 = vmatpush2.msra.mxu0 0.0
        %2538 = vmatprep.subr.mxu0 0.0
        %2539 = vmatpush2.msra.mxu0 0.0
        %2540 = vmatprep.subr.mxu0 0.0
        %2541 = vmatpush2.msra.mxu0 0.0
        %2542 = vmatprep.subr.mxu0 0.0
        %2543 = vmatpush2.msra.mxu0 0.0
        %2544 = vmatprep.subr.mxu0 0.0
        %2545 = vmatpush2.msra.mxu0 0.0
        %2546 = vmatprep.subr.mxu0 0.0
        %2547 = vmatpush2.msra.mxu0 0.0
        %2548 = vmatprep.subr.mxu0 0.0
        %2549 = vmatpush2.msra.mxu0 0.0
        %2550 = vmatprep.subr.mxu0 0.0
        %2551 = vmatpush2.msra.mxu0 0.0
        %2552 = vmatprep.mubr.f32.mxu0 0.0
        %2553 = vmatmul.mubr.f32.gmra.mxu0 %v2483
        %v2554 = vpop.f32.mrf.mxu0
        %v2555 = vadd.f32 0.0, %v2554
        %v2556 = vpop.f32.mrf.mxu0
        %2557 = vmatprep.mubr.f32.mxu0 0.0
        %2558 = vmatmul.mubr.f32.gmra.mxu0 %v2486
        %v2559 = vpop.f32.mrf.mxu0
        %v2560 = vadd.f32 0.0, %v2559
        %v2561 = vpop.f32.mrf.mxu0
        %2562 = vdwg.mxu0
        %2565 = vrot.lane.b32.xlu0 %v2294, 96
        %v2566 = vpop.permute.xlu0 %2565
        %2567 = vrot.lane.b32.xlu0 %v2295, 96
        %v2568 = vpop.permute.xlu0 %2567
        %v2572 = vsel %vm2139, %v2246, 0
        %v2575 = vsel %vm2139, %v2247, 0
        %2577 = vmatprep.subr.mxu0 0.0
        %2578 = vmatpush1.msra.mxu0 0.0
        %2579 = vmatprep.subr.mxu0 0.0
        %2580 = vmatpush1.msra.mxu0 0.0
        %2581 = vmatprep.subr.mxu0 0.0
        %2582 = vmatpush1.msra.mxu0 0.0
        %2583 = vmatprep.subr.mxu0 0.0
        %2584 = vmatpush1.msra.mxu0 0.0
        %2585 = vmatprep.subr.mxu0 0.0
        %2586 = vmatpush1.msra.mxu0 0.0
        %2587 = vmatprep.subr.mxu0 0.0
        %2588 = vmatpush1.msra.mxu0 0.0
        %2589 = vmatprep.subr.mxu0 0.0
        %2590 = vmatpush1.msra.mxu0 0.0
        %2591 = vmatprep.subr.mxu0 0.0
        %2592 = vmatpush1.msra.mxu0 0.0
        %2593 = vmatprep.subr.mxu0 0.0
        %2594 = vmatpush1.msra.mxu0 0.0
        %2595 = vmatprep.subr.mxu0 0.0
        %2596 = vmatpush1.msra.mxu0 0.0
        %2597 = vmatprep.subr.mxu0 0.0
        %2598 = vmatpush1.msra.mxu0 0.0
        %2599 = vmatprep.subr.mxu0 0.0
        %2600 = vmatpush1.msra.mxu0 0.0
        %2601 = vmatprep.subr.mxu0 0.0
        %2602 = vmatpush1.msra.mxu0 0.0
        %2603 = vmatprep.subr.mxu0 0.0
        %2604 = vmatpush1.msra.mxu0 0.0
        %2605 = vmatprep.subr.mxu0 0.0
        %2606 = vmatpush1.msra.mxu0 %v2568
        %2607 = vmatprep.subr.mxu0 0.0
        %2608 = vmatpush1.msra.mxu0 %v2566
        %2609 = vmatprep.subr.mxu0 0.0
        %2610 = vmatpush2.msra.mxu0 0.0
        %2611 = vmatprep.subr.mxu0 0.0
        %2612 = vmatpush2.msra.mxu0 0.0
        %2613 = vmatprep.subr.mxu0 0.0
        %2614 = vmatpush2.msra.mxu0 0.0
        %2615 = vmatprep.subr.mxu0 0.0
        %2616 = vmatpush2.msra.mxu0 0.0
        %2617 = vmatprep.subr.mxu0 0.0
        %2618 = vmatpush2.msra.mxu0 0.0
        %2619 = vmatprep.subr.mxu0 0.0
        %2620 = vmatpush2.msra.mxu0 0.0
        %2621 = vmatprep.subr.mxu0 0.0
        %2622 = vmatpush2.msra.mxu0 0.0
        %2623 = vmatprep.subr.mxu0 0.0
        %2624 = vmatpush2.msra.mxu0 0.0
        %2625 = vmatprep.subr.mxu0 0.0
        %2626 = vmatpush2.msra.mxu0 0.0
        %2627 = vmatprep.subr.mxu0 0.0
        %2628 = vmatpush2.msra.mxu0 0.0
        %2629 = vmatprep.subr.mxu0 0.0
        %2630 = vmatpush2.msra.mxu0 0.0
        %2631 = vmatprep.subr.mxu0 0.0
        %2632 = vmatpush2.msra.mxu0 0.0
        %2633 = vmatprep.subr.mxu0 0.0
        %2634 = vmatpush2.msra.mxu0 0.0
        %2635 = vmatprep.subr.mxu0 0.0
        %2636 = vmatpush2.msra.mxu0 0.0
        %2637 = vmatprep.subr.mxu0 0.0
        %2638 = vmatpush2.msra.mxu0 0.0
        %2639 = vmatprep.subr.mxu0 0.0
        %2640 = vmatpush2.msra.mxu0 0.0
        %2641 = vmatprep.mubr.f32.mxu0 0.0
        %2642 = vmatmul.mubr.f32.gmra.mxu0 %v2572
        %v2643 = vpop.f32.mrf.mxu0
        %v2644 = vadd.f32 0.0, %v2643
        %v2645 = vpop.f32.mrf.mxu0
        %2646 = vmatprep.mubr.f32.mxu0 0.0
        %2647 = vmatmul.mubr.f32.gmra.mxu0 %v2575
        %v2648 = vpop.f32.mrf.mxu0
        %v2649 = vadd.f32 0.0, %v2648
        %v2650 = vpop.f32.mrf.mxu0
        %2651 = vdwg.mxu0
        %v2652 = vlaneseq
        %v2653 = vshrl.u32 %v2652, 7
        %v2654 = vsub.s32 2, %v2653
        %v2655 = vrot.slane %v1835, %v2654
        %v2656 = vlaneseq
        %v2657 = vshrl.u32 %v2656, 7
        %v2658 = vsub.s32 2, %v2657
        %v2659 = vrot.slane %v1867, %v2658
        %v2660 = vlaneseq
        %v2661 = vshrl.u32 %v2660, 7
        %v2662 = vsub.s32 2, %v2661
        %v2663 = vrot.slane %v1899, %v2662
        %v2664 = vlaneseq
        %v2665 = vshrl.u32 %v2664, 7
        %v2666 = vsub.s32 2, %v2665
        %v2667 = vrot.slane %v1931, %v2666
        %v2668 = vadd.f32 %v1722, %v2655
        %v2669 = vadd.f32 %v1725, %v2655
        %v2670 = vadd.f32 %v1728, %v2659
        %v2671 = vadd.f32 %v1731, %v2659
        %v2672 = vadd.f32 %v1734, %v2663
        %v2673 = vadd.f32 %v1737, %v2663
        %v2674 = vadd.f32 %v1740, %v2667
        %v2675 = vadd.f32 %v1743, %v2667
        %vm2676 = vcmp.gt.f32.partialorder %v2668, 0.0
        %vm2677 = vcmp.gt.f32.partialorder %v2669, 0.0
        %vm2678 = vcmp.gt.f32.partialorder %v2670, 0.0
        %vm2679 = vcmp.gt.f32.partialorder %v2671, 0.0
        %vm2680 = vcmp.gt.f32.partialorder %v2672, 0.0
        %vm2681 = vcmp.gt.f32.partialorder %v2673, 0.0
        %vm2682 = vcmp.gt.f32.partialorder %v2674, 0.0
        %vm2683 = vcmp.gt.f32.partialorder %v2675, 0.0
        %v2684 = vmul.f32 %v2668, 0.2
        %v2685 = vmul.f32 %v2669, 0.2
        %v2686 = vmul.f32 %v2670, 0.2
        %v2687 = vmul.f32 %v2671, 0.2
        %v2688 = vmul.f32 %v2672, 0.2
        %v2689 = vmul.f32 %v2673, 0.2
        %v2690 = vmul.f32 %v2674, 0.2
        %v2691 = vmul.f32 %v2675, 0.2
        %v2692 = vsel %vm2676, %v2668, %v2684
        %v2693 = vsel %vm2677, %v2669, %v2685
        %v2694 = vsel %vm2678, %v2670, %v2686
        %v2695 = vsel %vm2679, %v2671, %v2687
        %v2696 = vsel %vm2680, %v2672, %v2688
        %v2697 = vsel %vm2681, %v2673, %v2689
        %v2698 = vsel %vm2682, %v2674, %v2690
        %v2699 = vsel %vm2683, %v2675, %v2691
        %v2700 = vsel %vm2027, %v2692, 0.0
        %v2701 = vsel %vm2028, %v2693, 0.0
        %v2702 = vsel %vm2029, %v2694, 0.0
        %v2703 = vsel %vm2030, %v2695, 0.0
        %v2704 = vsel %vm2031, %v2696, 0.0
        %v2705 = vsel %vm2032, %v2697, 0.0
        %v2706 = vsel %vm2033, %v2698, 0.0
        %v2707 = vsel %vm2034, %v2699, 0.0
        %v2708 = vadd.f32 %v2700, 0.0
        %v2709 = vadd.f32 %v2701, 0.0
        %v2710 = vadd.f32 %v2702, 0.0
        %v2711 = vadd.f32 %v2703, 0.0
        %v2712 = vadd.f32 %v2704, 0.0
        %v2713 = vadd.f32 %v2705, 0.0
        %v2714 = vadd.f32 %v2706, 0.0
        %v2715 = vadd.f32 %v2707, 0.0
        %v2716 = vlaneseq
        %v2717 = vshrl.u32 %v2716, 7
        %v2718 = vsub.s32 3, %v2717
        %v2719 = vrot.slane %v1835, %v2718
        %v2720 = vlaneseq
        %v2721 = vshrl.u32 %v2720, 7
        %v2722 = vsub.s32 3, %v2721
        %v2723 = vrot.slane %v1867, %v2722
        %v2724 = vlaneseq
        %v2725 = vshrl.u32 %v2724, 7
        %v2726 = vsub.s32 3, %v2725
        %v2727 = vrot.slane %v1899, %v2726
        %v2728 = vlaneseq
        %v2729 = vshrl.u32 %v2728, 7
        %v2730 = vsub.s32 3, %v2729
        %v2731 = vrot.slane %v1931, %v2730
        %v2732 = vadd.f32 %v1770, %v2719
        %v2733 = vadd.f32 %v1773, %v2719
        %v2734 = vadd.f32 %v1776, %v2723
        %v2735 = vadd.f32 %v1779, %v2723
        %v2736 = vadd.f32 %v1782, %v2727
        %v2737 = vadd.f32 %v1785, %v2727
        %v2738 = vadd.f32 %v1788, %v2731
        %v2739 = vadd.f32 %v1791, %v2731
        %vm2740 = vcmp.gt.f32.partialorder %v2732, 0.0
        %vm2741 = vcmp.gt.f32.partialorder %v2733, 0.0
        %vm2742 = vcmp.gt.f32.partialorder %v2734, 0.0
        %vm2743 = vcmp.gt.f32.partialorder %v2735, 0.0
        %vm2744 = vcmp.gt.f32.partialorder %v2736, 0.0
        %vm2745 = vcmp.gt.f32.partialorder %v2737, 0.0
        %vm2746 = vcmp.gt.f32.partialorder %v2738, 0.0
        %vm2747 = vcmp.gt.f32.partialorder %v2739, 0.0
        %v2748 = vmul.f32 %v2732, 0.2
        %v2749 = vmul.f32 %v2733, 0.2
        %v2750 = vmul.f32 %v2734, 0.2
        %v2751 = vmul.f32 %v2735, 0.2
        %v2752 = vmul.f32 %v2736, 0.2
        %v2753 = vmul.f32 %v2737, 0.2
        %v2754 = vmul.f32 %v2738, 0.2
        %v2755 = vmul.f32 %v2739, 0.2
        %v2756 = vsel %vm2740, %v2732, %v2748
        %v2757 = vsel %vm2741, %v2733, %v2749
        %v2758 = vsel %vm2742, %v2734, %v2750
        %v2759 = vsel %vm2743, %v2735, %v2751
        %v2760 = vsel %vm2744, %v2736, %v2752
        %v2761 = vsel %vm2745, %v2737, %v2753
        %v2762 = vsel %vm2746, %v2738, %v2754
        %v2763 = vsel %vm2747, %v2739, %v2755
        %v2764 = vsel %vm2099, %v2756, 0.0
        %v2765 = vsel %vm2100, %v2757, 0.0
        %v2766 = vsel %vm2101, %v2758, 0.0
        %v2767 = vsel %vm2102, %v2759, 0.0
        %v2768 = vsel %vm2103, %v2760, 0.0
        %v2769 = vsel %vm2104, %v2761, 0.0
        %v2770 = vsel %vm2105, %v2762, 0.0
        %v2771 = vsel %vm2106, %v2763, 0.0
        %v2772 = vadd.f32 %v2708, %v2764
        %v2773 = vadd.f32 %v2709, %v2765
        %v2774 = vadd.f32 %v2710, %v2766
        %v2775 = vadd.f32 %v2711, %v2767
        %v2776 = vadd.f32 %v2712, %v2768
        %v2777 = vadd.f32 %v2713, %v2769
        %v2778 = vadd.f32 %v2714, %v2770
        %v2779 = vadd.f32 %v2715, %v2771
        %v2780 = vsel %vm2123, %v2772, -1e+30
        %v2781 = vsel %vm2124, %v2773, -1e+30
        %v2782 = vsel %vm2125, %v2774, -1e+30
        %v2783 = vsel %vm2126, %v2775, -1e+30
        %v2784 = vsel %vm2127, %v2776, -1e+30
        %v2785 = vsel %vm2128, %v2777, -1e+30
        %v2786 = vsel %vm2129, %v2778, -1e+30
        %v2787 = vsel %vm2130, %v2779, -1e+30
        %v2788 = vsel %vm2139, %v2780, -inf
        %v2789 = vsel %vm2139, %v2781, -inf
        %v2790 = vmax.f32 %v2788, %v2789
        %v2791 = vrot.slane %v2790, 4
        %v2792 = vmax.f32 %v2790, %v2791
        %v2793 = vrot.slane %v2792, 2
        %v2794 = vmax.f32 %v2792, %v2793
        %v2795 = vrot.slane %v2794, 1
        %v2796 = vmax.f32 %v2794, %v2795
        %v2797 = vsel %vm2139, %v2782, -inf
        %v2798 = vsel %vm2139, %v2783, -inf
        %v2799 = vmax.f32 %v2797, %v2798
        %v2800 = vrot.slane %v2799, 4
        %v2801 = vmax.f32 %v2799, %v2800
        %v2802 = vrot.slane %v2801, 2
        %v2803 = vmax.f32 %v2801, %v2802
        %v2804 = vrot.slane %v2803, 1
        %v2805 = vmax.f32 %v2803, %v2804
        %v2806 = vsel %vm2139, %v2784, -inf
        %v2807 = vsel %vm2139, %v2785, -inf
        %v2808 = vmax.f32 %v2806, %v2807
        %v2809 = vrot.slane %v2808, 4
        %v2810 = vmax.f32 %v2808, %v2809
        %v2811 = vrot.slane %v2810, 2
        %v2812 = vmax.f32 %v2810, %v2811
        %v2813 = vrot.slane %v2812, 1
        %v2814 = vmax.f32 %v2812, %v2813
        %v2815 = vsel %vm2139, %v2786, -inf
        %v2816 = vsel %vm2139, %v2787, -inf
        %v2817 = vmax.f32 %v2815, %v2816
        %v2818 = vrot.slane %v2817, 4
        %v2819 = vmax.f32 %v2817, %v2818
        %v2820 = vrot.slane %v2819, 2
        %v2821 = vmax.f32 %v2819, %v2820
        %v2822 = vrot.slane %v2821, 1
        %v2823 = vmax.f32 %v2821, %v2822
        %v2824 = vsub.f32 %v2780, %v2796
        %v2825 = vsub.f32 %v2781, %v2796
        %v2826 = vsub.f32 %v2782, %v2805
        %v2827 = vsub.f32 %v2783, %v2805
        %v2828 = vsub.f32 %v2784, %v2814
        %v2829 = vsub.f32 %v2785, %v2814
        %v2830 = vsub.f32 %v2786, %v2823
        %v2831 = vsub.f32 %v2787, %v2823
        %v2832 = vmul.f32 %v2824, 1.442695
        %v2833 = vpow.pop %v2832
        %v2834 = vmul.f32 %v2825, 1.442695
        %v2835 = vpow.pop %v2834
        %v2836 = vmul.f32 %v2826, 1.442695
        %v2837 = vpow.pop %v2836
        %v2838 = vmul.f32 %v2827, 1.442695
        %v2839 = vpow.pop %v2838
        %v2840 = vmul.f32 %v2828, 1.442695
        %v2841 = vpow.pop %v2840
        %v2842 = vmul.f32 %v2829, 1.442695
        %v2843 = vpow.pop %v2842
        %v2844 = vmul.f32 %v2830, 1.442695
        %v2845 = vpow.pop %v2844
        %v2846 = vmul.f32 %v2831, 1.442695
        %v2847 = vpow.pop %v2846
        %v2848 = vsel %vm2139, %v2833, 0.0
        %v2849 = vsel %vm2139, %v2835, 0.0
        %v2850 = vadd.f32 %v2848, %v2849
        %v2851 = vrot.slane %v2850, 4
        %v2852 = vadd.f32 %v2850, %v2851
        %v2853 = vrot.slane %v2852, 2
        %v2854 = vadd.f32 %v2852, %v2853
        %v2855 = vrot.slane %v2854, 1
        %v2856 = vadd.f32 %v2854, %v2855
        %v2857 = vsel %vm2139, %v2837, 0.0
        %v2858 = vsel %vm2139, %v2839, 0.0
        %v2859 = vadd.f32 %v2857, %v2858
        %v2860 = vrot.slane %v2859, 4
        %v2861 = vadd.f32 %v2859, %v2860
        %v2862 = vrot.slane %v2861, 2
        %v2863 = vadd.f32 %v2861, %v2862
        %v2864 = vrot.slane %v2863, 1
        %v2865 = vadd.f32 %v2863, %v2864
        %v2866 = vsel %vm2139, %v2841, 0.0
        %v2867 = vsel %vm2139, %v2843, 0.0
        %v2868 = vadd.f32 %v2866, %v2867
        %v2869 = vrot.slane %v2868, 4
        %v2870 = vadd.f32 %v2868, %v2869
        %v2871 = vrot.slane %v2870, 2
        %v2872 = vadd.f32 %v2870, %v2871
        %v2873 = vrot.slane %v2872, 1
        %v2874 = vadd.f32 %v2872, %v2873
        %v2875 = vsel %vm2139, %v2845, 0.0
        %v2876 = vsel %vm2139, %v2847, 0.0
        %v2877 = vadd.f32 %v2875, %v2876
        %v2878 = vrot.slane %v2877, 4
        %v2879 = vadd.f32 %v2877, %v2878
        %v2880 = vrot.slane %v2879, 2
        %v2881 = vadd.f32 %v2879, %v2880
        %v2882 = vrot.slane %v2881, 1
        %v2883 = vadd.f32 %v2881, %v2882
        %v2884 = vrcp.pop %v2856
        %v2885 = vrcp.pop %v2865
        %v2886 = vrcp.pop %v2874
        %v2887 = vrcp.pop %v2883
        %v2888 = vmul.f32 %v2833, %v2884
        %v2889 = vmul.f32 %v2835, %v2884
        %v2890 = vmul.f32 %v2837, %v2885
        %v2891 = vmul.f32 %v2839, %v2885
        %v2892 = vmul.f32 %v2841, %v2886
        %v2893 = vmul.f32 %v2843, %v2886
        %v2894 = vmul.f32 %v2845, %v2887
        %v2895 = vmul.f32 %v2847, %v2887
        %2896 = vrot.lane.b32.xlu0 %v2288, 32
        %v2897 = vpop.permute.xlu0 %2896
        %2898 = vrot.lane.b32.xlu0 %v2289, 32
        %v2899 = vpop.permute.xlu0 %2898
        %v2903 = vsel %vm2139, %v2888, 0
        %v2906 = vsel %vm2139, %v2889, 0
        %2908 = vmatprep.subr.mxu0 0.0
        %2909 = vmatpush1.msra.mxu0 0.0
        %2910 = vmatprep.subr.mxu0 0.0
        %2911 = vmatpush1.msra.mxu0 0.0
        %2912 = vmatprep.subr.mxu0 0.0
        %2913 = vmatpush1.msra.mxu0 0.0
        %2914 = vmatprep.subr.mxu0 0.0
        %2915 = vmatpush1.msra.mxu0 0.0
        %2916 = vmatprep.subr.mxu0 0.0
        %2917 = vmatpush1.msra.mxu0 0.0
        %2918 = vmatprep.subr.mxu0 0.0
        %2919 = vmatpush1.msra.mxu0 0.0
        %2920 = vmatprep.subr.mxu0 0.0
        %2921 = vmatpush1.msra.mxu0 0.0
        %2922 = vmatprep.subr.mxu0 0.0
        %2923 = vmatpush1.msra.mxu0 0.0
        %2924 = vmatprep.subr.mxu0 0.0
        %2925 = vmatpush1.msra.mxu0 0.0
        %2926 = vmatprep.subr.mxu0 0.0
        %2927 = vmatpush1.msra.mxu0 0.0
        %2928 = vmatprep.subr.mxu0 0.0
        %2929 = vmatpush1.msra.mxu0 0.0
        %2930 = vmatprep.subr.mxu0 0.0
        %2931 = vmatpush1.msra.mxu0 0.0
        %2932 = vmatprep.subr.mxu0 0.0
        %2933 = vmatpush1.msra.mxu0 0.0
        %2934 = vmatprep.subr.mxu0 0.0
        %2935 = vmatpush1.msra.mxu0 0.0
        %2936 = vmatprep.subr.mxu0 0.0
        %2937 = vmatpush1.msra.mxu0 %v2899
        %2938 = vmatprep.subr.mxu0 0.0
        %2939 = vmatpush1.msra.mxu0 %v2897
        %2940 = vmatprep.subr.mxu0 0.0
        %2941 = vmatpush2.msra.mxu0 0.0
        %2942 = vmatprep.subr.mxu0 0.0
        %2943 = vmatpush2.msra.mxu0 0.0
        %2944 = vmatprep.subr.mxu0 0.0
        %2945 = vmatpush2.msra.mxu0 0.0
        %2946 = vmatprep.subr.mxu0 0.0
        %2947 = vmatpush2.msra.mxu0 0.0
        %2948 = vmatprep.subr.mxu0 0.0
        %2949 = vmatpush2.msra.mxu0 0.0
        %2950 = vmatprep.subr.mxu0 0.0
        %2951 = vmatpush2.msra.mxu0 0.0
        %2952 = vmatprep.subr.mxu0 0.0
        %2953 = vmatpush2.msra.mxu0 0.0
        %2954 = vmatprep.subr.mxu0 0.0
        %2955 = vmatpush2.msra.mxu0 0.0
        %2956 = vmatprep.subr.mxu0 0.0
        %2957 = vmatpush2.msra.mxu0 0.0
        %2958 = vmatprep.subr.mxu0 0.0
        %2959 = vmatpush2.msra.mxu0 0.0
        %2960 = vmatprep.subr.mxu0 0.0
        %2961 = vmatpush2.msra.mxu0 0.0
        %2962 = vmatprep.subr.mxu0 0.0
        %2963 = vmatpush2.msra.mxu0 0.0
        %2964 = vmatprep.subr.mxu0 0.0
        %2965 = vmatpush2.msra.mxu0 0.0
        %2966 = vmatprep.subr.mxu0 0.0
        %2967 = vmatpush2.msra.mxu0 0.0
        %2968 = vmatprep.subr.mxu0 0.0
        %2969 = vmatpush2.msra.mxu0 0.0
        %2970 = vmatprep.subr.mxu0 0.0
        %2971 = vmatpush2.msra.mxu0 0.0
        %2972 = vmatprep.mubr.f32.mxu0 0.0
        %2973 = vmatmul.mubr.f32.gmra.mxu0 %v2903
        %v2974 = vpop.f32.mrf.mxu0
        %v2975 = vadd.f32 0.0, %v2974
        %v2976 = vpop.f32.mrf.mxu0
        %2977 = vmatprep.mubr.f32.mxu0 0.0
        %2978 = vmatmul.mubr.f32.gmra.mxu0 %v2906
        %v2979 = vpop.f32.mrf.mxu0
        %v2980 = vadd.f32 0.0, %v2979
        %v2981 = vpop.f32.mrf.mxu0
        %2982 = vdwg.mxu0
        %2983 = vrot.lane.b32.xlu0 %v2290, 32
        %v2984 = vpop.permute.xlu0 %2983
        %2985 = vrot.lane.b32.xlu0 %v2291, 32
        %v2986 = vpop.permute.xlu0 %2985
        %v2990 = vsel %vm2139, %v2890, 0
        %v2993 = vsel %vm2139, %v2891, 0
        %2995 = vmatprep.subr.mxu0 0.0
        %2996 = vmatpush1.msra.mxu0 0.0
        %2997 = vmatprep.subr.mxu0 0.0
        %2998 = vmatpush1.msra.mxu0 0.0
        %2999 = vmatprep.subr.mxu0 0.0
        %3000 = vmatpush1.msra.mxu0 0.0
        %3001 = vmatprep.subr.mxu0 0.0
        %3002 = vmatpush1.msra.mxu0 0.0
        %3003 = vmatprep.subr.mxu0 0.0
        %3004 = vmatpush1.msra.mxu0 0.0
        %3005 = vmatprep.subr.mxu0 0.0
        %3006 = vmatpush1.msra.mxu0 0.0
        %3007 = vmatprep.subr.mxu0 0.0
        %3008 = vmatpush1.msra.mxu0 0.0
        %3009 = vmatprep.subr.mxu0 0.0
        %3010 = vmatpush1.msra.mxu0 0.0
        %3011 = vmatprep.subr.mxu0 0.0
        %3012 = vmatpush1.msra.mxu0 0.0
        %3013 = vmatprep.subr.mxu0 0.0
        %3014 = vmatpush1.msra.mxu0 0.0
        %3015 = vmatprep.subr.mxu0 0.0
        %3016 = vmatpush1.msra.mxu0 0.0
        %3017 = vmatprep.subr.mxu0 0.0
        %3018 = vmatpush1.msra.mxu0 0.0
        %3019 = vmatprep.subr.mxu0 0.0
        %3020 = vmatpush1.msra.mxu0 0.0
        %3021 = vmatprep.subr.mxu0 0.0
        %3022 = vmatpush1.msra.mxu0 0.0
        %3023 = vmatprep.subr.mxu0 0.0
        %3024 = vmatpush1.msra.mxu0 %v2986
        %3025 = vmatprep.subr.mxu0 0.0
        %3026 = vmatpush1.msra.mxu0 %v2984
        %3027 = vmatprep.subr.mxu0 0.0
        %3028 = vmatpush2.msra.mxu0 0.0
        %3029 = vmatprep.subr.mxu0 0.0
        %3030 = vmatpush2.msra.mxu0 0.0
        %3031 = vmatprep.subr.mxu0 0.0
        %3032 = vmatpush2.msra.mxu0 0.0
        %3033 = vmatprep.subr.mxu0 0.0
        %3034 = vmatpush2.msra.mxu0 0.0
        %3035 = vmatprep.subr.mxu0 0.0
        %3036 = vmatpush2.msra.mxu0 0.0
        %3037 = vmatprep.subr.mxu0 0.0
        %3038 = vmatpush2.msra.mxu0 0.0
        %3039 = vmatprep.subr.mxu0 0.0
        %3040 = vmatpush2.msra.mxu0 0.0
        %3041 = vmatprep.subr.mxu0 0.0
        %3042 = vmatpush2.msra.mxu0 0.0
        %3043 = vmatprep.subr.mxu0 0.0
        %3044 = vmatpush2.msra.mxu0 0.0
        %3045 = vmatprep.subr.mxu0 0.0
        %3046 = vmatpush2.msra.mxu0 0.0
        %3047 = vmatprep.subr.mxu0 0.0
        %3048 = vmatpush2.msra.mxu0 0.0
        %3049 = vmatprep.subr.mxu0 0.0
        %3050 = vmatpush2.msra.mxu0 0.0
        %3051 = vmatprep.subr.mxu0 0.0
        %3052 = vmatpush2.msra.mxu0 0.0
        %3053 = vmatprep.subr.mxu0 0.0
        %3054 = vmatpush2.msra.mxu0 0.0
        %3055 = vmatprep.subr.mxu0 0.0
        %3056 = vmatpush2.msra.mxu0 0.0
        %3057 = vmatprep.subr.mxu0 0.0
        %3058 = vmatpush2.msra.mxu0 0.0
        %3059 = vmatprep.mubr.f32.mxu0 0.0
        %3060 = vmatmul.mubr.f32.gmra.mxu0 %v2990
        %v3061 = vpop.f32.mrf.mxu0
        %v3062 = vadd.f32 0.0, %v3061
        %v3063 = vpop.f32.mrf.mxu0
        %3064 = vmatprep.mubr.f32.mxu0 0.0
        %3065 = vmatmul.mubr.f32.gmra.mxu0 %v2993
        %v3066 = vpop.f32.mrf.mxu0
        %v3067 = vadd.f32 0.0, %v3066
        %v3068 = vpop.f32.mrf.mxu0
        %3069 = vdwg.mxu0
        %3070 = vrot.lane.b32.xlu0 %v2292, 32
        %v3071 = vpop.permute.xlu0 %3070
        %3072 = vrot.lane.b32.xlu0 %v2293, 32
        %v3073 = vpop.permute.xlu0 %3072
        %v3077 = vsel %vm2139, %v2892, 0
        %v3080 = vsel %vm2139, %v2893, 0
        %3082 = vmatprep.subr.mxu0 0.0
        %3083 = vmatpush1.msra.mxu0 0.0
        %3084 = vmatprep.subr.mxu0 0.0
        %3085 = vmatpush1.msra.mxu0 0.0
        %3086 = vmatprep.subr.mxu0 0.0
        %3087 = vmatpush1.msra.mxu0 0.0
        %3088 = vmatprep.subr.mxu0 0.0
        %3089 = vmatpush1.msra.mxu0 0.0
        %3090 = vmatprep.subr.mxu0 0.0
        %3091 = vmatpush1.msra.mxu0 0.0
        %3092 = vmatprep.subr.mxu0 0.0
        %3093 = vmatpush1.msra.mxu0 0.0
        %3094 = vmatprep.subr.mxu0 0.0
        %3095 = vmatpush1.msra.mxu0 0.0
        %3096 = vmatprep.subr.mxu0 0.0
        %3097 = vmatpush1.msra.mxu0 0.0
        %3098 = vmatprep.subr.mxu0 0.0
        %3099 = vmatpush1.msra.mxu0 0.0
        %3100 = vmatprep.subr.mxu0 0.0
        %3101 = vmatpush1.msra.mxu0 0.0
        %3102 = vmatprep.subr.mxu0 0.0
        %3103 = vmatpush1.msra.mxu0 0.0
        %3104 = vmatprep.subr.mxu0 0.0
        %3105 = vmatpush1.msra.mxu0 0.0
        %3106 = vmatprep.subr.mxu0 0.0
        %3107 = vmatpush1.msra.mxu0 0.0
        %3108 = vmatprep.subr.mxu0 0.0
        %3109 = vmatpush1.msra.mxu0 0.0
        %3110 = vmatprep.subr.mxu0 0.0
        %3111 = vmatpush1.msra.mxu0 %v3073
        %3112 = vmatprep.subr.mxu0 0.0
        %3113 = vmatpush1.msra.mxu0 %v3071
        %3114 = vmatprep.subr.mxu0 0.0
        %3115 = vmatpush2.msra.mxu0 0.0
        %3116 = vmatprep.subr.mxu0 0.0
        %3117 = vmatpush2.msra.mxu0 0.0
        %3118 = vmatprep.subr.mxu0 0.0
        %3119 = vmatpush2.msra.mxu0 0.0
        %3120 = vmatprep.subr.mxu0 0.0
        %3121 = vmatpush2.msra.mxu0 0.0
        %3122 = vmatprep.subr.mxu0 0.0
        %3123 = vmatpush2.msra.mxu0 0.0
        %3124 = vmatprep.subr.mxu0 0.0
        %3125 = vmatpush2.msra.mxu0 0.0
        %3126 = vmatprep.subr.mxu0 0.0
        %3127 = vmatpush2.msra.mxu0 0.0
        %3128 = vmatprep.subr.mxu0 0.0
        %3129 = vmatpush2.msra.mxu0 0.0
        %3130 = vmatprep.subr.mxu0 0.0
        %3131 = vmatpush2.msra.mxu0 0.0
        %3132 = vmatprep.subr.mxu0 0.0
        %3133 = vmatpush2.msra.mxu0 0.0
        %3134 = vmatprep.subr.mxu0 0.0
        %3135 = vmatpush2.msra.mxu0 0.0
        %3136 = vmatprep.subr.mxu0 0.0
        %3137 = vmatpush2.msra.mxu0 0.0
        %3138 = vmatprep.subr.mxu0 0.0
        %3139 = vmatpush2.msra.mxu0 0.0
        %3140 = vmatprep.subr.mxu0 0.0
        %3141 = vmatpush2.msra.mxu0 0.0
        %3142 = vmatprep.subr.mxu0 0.0
        %3143 = vmatpush2.msra.mxu0 0.0
        %3144 = vmatprep.subr.mxu0 0.0
        %3145 = vmatpush2.msra.mxu0 0.0
        %3146 = vmatprep.mubr.f32.mxu0 0.0
        %3147 = vmatmul.mubr.f32.gmra.mxu0 %v3077
        %v3148 = vpop.f32.mrf.mxu0
        %v3149 = vadd.f32 0.0, %v3148
        %v3150 = vpop.f32.mrf.mxu0
        %3151 = vmatprep.mubr.f32.mxu0 0.0
        %3152 = vmatmul.mubr.f32.gmra.mxu0 %v3080
        %v3153 = vpop.f32.mrf.mxu0
        %v3154 = vadd.f32 0.0, %v3153
        %v3155 = vpop.f32.mrf.mxu0
        %3156 = vdwg.mxu0
        %3157 = vrot.lane.b32.xlu0 %v2294, 32
        %v3158 = vpop.permute.xlu0 %3157
        %3159 = vrot.lane.b32.xlu0 %v2295, 32
        %v3160 = vpop.permute.xlu0 %3159
        %v3164 = vsel %vm2139, %v2894, 0
        %v3167 = vsel %vm2139, %v2895, 0
        %3169 = vmatprep.subr.mxu0 0.0
        %3170 = vmatpush1.msra.mxu0 0.0
        %3171 = vmatprep.subr.mxu0 0.0
        %3172 = vmatpush1.msra.mxu0 0.0
        %3173 = vmatprep.subr.mxu0 0.0
        %3174 = vmatpush1.msra.mxu0 0.0
        %3175 = vmatprep.subr.mxu0 0.0
        %3176 = vmatpush1.msra.mxu0 0.0
        %3177 = vmatprep.subr.mxu0 0.0
        %3178 = vmatpush1.msra.mxu0 0.0
        %3179 = vmatprep.subr.mxu0 0.0
        %3180 = vmatpush1.msra.mxu0 0.0
        %3181 = vmatprep.subr.mxu0 0.0
        %3182 = vmatpush1.msra.mxu0 0.0
        %3183 = vmatprep.subr.mxu0 0.0
        %3184 = vmatpush1.msra.mxu0 0.0
        %3185 = vmatprep.subr.mxu0 0.0
        %3186 = vmatpush1.msra.mxu0 0.0
        %3187 = vmatprep.subr.mxu0 0.0
        %3188 = vmatpush1.msra.mxu0 0.0
        %3189 = vmatprep.subr.mxu0 0.0
        %3190 = vmatpush1.msra.mxu0 0.0
        %3191 = vmatprep.subr.mxu0 0.0
        %3192 = vmatpush1.msra.mxu0 0.0
        %3193 = vmatprep.subr.mxu0 0.0
        %3194 = vmatpush1.msra.mxu0 0.0
        %3195 = vmatprep.subr.mxu0 0.0
        %3196 = vmatpush1.msra.mxu0 0.0
        %3197 = vmatprep.subr.mxu0 0.0
        %3198 = vmatpush1.msra.mxu0 %v3160
        %3199 = vmatprep.subr.mxu0 0.0
        %3200 = vmatpush1.msra.mxu0 %v3158
        %3201 = vmatprep.subr.mxu0 0.0
        %3202 = vmatpush2.msra.mxu0 0.0
        %3203 = vmatprep.subr.mxu0 0.0
        %3204 = vmatpush2.msra.mxu0 0.0
        %3205 = vmatprep.subr.mxu0 0.0
        %3206 = vmatpush2.msra.mxu0 0.0
        %3207 = vmatprep.subr.mxu0 0.0
        %3208 = vmatpush2.msra.mxu0 0.0
        %3209 = vmatprep.subr.mxu0 0.0
        %3210 = vmatpush2.msra.mxu0 0.0
        %3211 = vmatprep.subr.mxu0 0.0
        %3212 = vmatpush2.msra.mxu0 0.0
        %3213 = vmatprep.subr.mxu0 0.0
        %3214 = vmatpush2.msra.mxu0 0.0
        %3215 = vmatprep.subr.mxu0 0.0
        %3216 = vmatpush2.msra.mxu0 0.0
        %3217 = vmatprep.subr.mxu0 0.0
        %3218 = vmatpush2.msra.mxu0 0.0
        %3219 = vmatprep.subr.mxu0 0.0
        %3220 = vmatpush2.msra.mxu0 0.0
        %3221 = vmatprep.subr.mxu0 0.0
        %3222 = vmatpush2.msra.mxu0 0.0
        %3223 = vmatprep.subr.mxu0 0.0
        %3224 = vmatpush2.msra.mxu0 0.0
        %3225 = vmatprep.subr.mxu0 0.0
        %3226 = vmatpush2.msra.mxu0 0.0
        %3227 = vmatprep.subr.mxu0 0.0
        %3228 = vmatpush2.msra.mxu0 0.0
        %3229 = vmatprep.subr.mxu0 0.0
        %3230 = vmatpush2.msra.mxu0 0.0
        %3231 = vmatprep.subr.mxu0 0.0
        %3232 = vmatpush2.msra.mxu0 0.0
        %3233 = vmatprep.mubr.f32.mxu0 0.0
        %3234 = vmatmul.mubr.f32.gmra.mxu0 %v3164
        %v3235 = vpop.f32.mrf.mxu0
        %v3236 = vadd.f32 0.0, %v3235
        %v3237 = vpop.f32.mrf.mxu0
        %3238 = vmatprep.mubr.f32.mxu0 0.0
        %3239 = vmatmul.mubr.f32.gmra.mxu0 %v3167
        %v3240 = vpop.f32.mrf.mxu0
        %v3241 = vadd.f32 0.0, %v3240
        %v3242 = vpop.f32.mrf.mxu0
        %3243 = vdwg.mxu0
        %3252 = vrot.lane.b32.xlu0 %v2975, 32
        %v3253 = vpop.permute.xlu0 %3252
        %3254 = vrot.lane.b32.xlu0 %v2980, 32
        %v3255 = vpop.permute.xlu0 %3254
        %3256 = vrot.lane.b32.xlu0 %v3062, 32
        %v3257 = vpop.permute.xlu0 %3256
        %3258 = vrot.lane.b32.xlu0 %v3067, 32
        %v3259 = vpop.permute.xlu0 %3258
        %3260 = vrot.lane.b32.xlu0 %v3149, 32
        %v3261 = vpop.permute.xlu0 %3260
        %3262 = vrot.lane.b32.xlu0 %v3154, 32
        %v3263 = vpop.permute.xlu0 %3262
        %3264 = vrot.lane.b32.xlu0 %v3236, 32
        %v3265 = vpop.permute.xlu0 %3264
        %3266 = vrot.lane.b32.xlu0 %v3241, 32
        %v3267 = vpop.permute.xlu0 %3266
        %v3276 = vsel %vm655, %v2377, %v3253
        %v3277 = vsel %vm655, %v2382, %v3255
        %v3278 = vsel %vm655, %v2466, %v3257
        %v3279 = vsel %vm655, %v2471, %v3259
        %v3280 = vsel %vm655, %v2555, %v3261
        %v3281 = vsel %vm655, %v2560, %v3263
        %v3282 = vsel %vm655, %v2644, %v3265
        %v3283 = vsel %vm655, %v2649, %v3267
        %v3284 = vmax.f32 %v3276, 0.0
        %v3285 = vmax.f32 %v3277, 0.0
        %v3286 = vmax.f32 %v3278, 0.0
        %v3287 = vmax.f32 %v3279, 0.0
        %v3288 = vmax.f32 %v3280, 0.0
        %v3289 = vmax.f32 %v3281, 0.0
        %v3290 = vmax.f32 %v3282, 0.0
        %v3291 = vmax.f32 %v3283, 0.0
        %3292 = vst.msk [vmem:[%s598] sm:$0xff] %vm1254, %v3284
        %3293 = vst.msk [vmem:[%s598 + $0x8] sm:$0xff] %vm1254, %v3285
        %3294 = vst.msk [vmem:[%s598 + $0x10] sm:$0xff] %vm1254, %v3286
        %3295 = vst.msk [vmem:[%s598 + $0x18] sm:$0xff] %vm1254, %v3287
        %3296 = vst.msk [vmem:[%s598 + $0x20] sm:$0xff] %vm1254, %v3288
        %3297 = vst.msk [vmem:[%s598 + $0x28] sm:$0xff] %vm1254, %v3289
        %3298 = vst.msk [vmem:[%s598 + $0x30] sm:$0xff] %vm1254, %v3290
        %3299 = vst.msk [vmem:[%s598 + $0x38] sm:$0xff] %vm1254, %v3291
        %s3300 = smul.u32 8, %s31
        %p3301 = scmp.lt.s32.totalorder %s3300, 15
        %s3302 = scalar_select %p3301, %s3300, 15
        %s3303 = smul.addr %s3302, 8
        %s3304 = scalar_lea.vmem %s10, %s3303
        // Predicated region
        $region85: #{tpu_custom_call.1} parent=59 // pred_check
          %p3305 = pneg %p294
        $region86: #{tpu_custom_call.1} parent=59 // pred_check_branch
          %3307 = sbr.rel (%p3305) target = $region88
        $region87: #{tpu_custom_call.1} parent=59 // pred_region
          %s3308 = smul.u32 8, %s31
        $region88: #{tpu_custom_call.1} parent=59 // pred_fallthru
          _
      $region60: #{tpu_custom_call.1} parent=5 // pred_fallthru
        _
      %p3309 = scmp.le.s32.totalorder 2, %s26
      // Predicated region
      $region89: #{tpu_custom_call.1} parent=5 // pred_check
        %p3310 = pneg %p3309
      $region90: #{tpu_custom_call.1} parent=5 // pred_check_branch
        %3312 = sbr.rel (%p3310) target = $region92
      $region91: #{tpu_custom_call.1} parent=5 // pred_region
        %s3313 = ssub.s32 %s26, 2
        // Predicated region
        $region93: #{tpu_custom_call.1} parent=91 // pred_check
          %p3314 = pneg %p300
        $region94: #{tpu_custom_call.1} parent=91 // pred_check_branch
          %3316 = sbr.rel (%p3314) target = $region96
        $region95: #{tpu_custom_call.1} parent=91 // pred_region
          %s3317 = smul.u32 8, %s32
          %p3318 = scmp.lt.s32.totalorder %s3317, 15
          %s3319 = scalar_select %p3318, %s3317, 15
          %s3320 = smul.addr %s3319, 8
          %s3321 = scalar_lea.vmem %s10, %s3320
        $region96: #{tpu_custom_call.1} parent=91 // pred_fallthru
          _
      $region92: #{tpu_custom_call.1} parent=5 // pred_fallthru
        _
    $region6: #{tpu_custom_call.1} parent=1 // loop_footer
      %s30 = sadd.s32 1, %s26
    $region7: #{tpu_custom_call.1} parent=1 // loop_footer_branch
      %25 = sbr.rel target = $region3
    $region8: #{tpu_custom_call.1} parent=1 // loop_exit
      _
    %3322 = vsyncpa [#allocation3], 1
    %s3323 = scalar_lea.sflag [#allocation3], 1
    %3324 = vsyncpa %s3323, 1
    %3325 = vsyncpa [#allocation5], 1
    %s3326 = scalar_lea.sflag [#allocation5], 1
    %3327 = vsyncpa %s3326, 1
    %3328 = vsyncpa [#allocation8], 1
    %s3329 = scalar_lea.sflag [#allocation8], 1
    %3330 = vsyncpa %s3329, 1
    %3331 = vsyncpa [#allocation11], 1

</llo_original>
